<compile_context>
chip_gen: v6e
topology: v6e:2x2x1
jax: 0.10.0
libtpu: 0.0.40
codegen_flags: <defaults>
</compile_context>

<pallas_src>
import numpy as np
import jax
import jax.numpy as jnp
from jax import lax
from jax.experimental import pallas as pl
from jax.experimental.pallas import tpu as pltpu

KSIZE = 5
PAD = KSIZE // 2
LN_EPS = 1e-5
CP = 128          # lane-padded width of the final logits output


def _conv_out(size, stride):
    return (size + 2 * PAD - KSIZE) // stride + 1


# ---------------------------------------------------------------------------
# Fused kernel
# ---------------------------------------------------------------------------
def _ln_sigmoid(z, gamma, beta):
    """Per-row LayerNorm over all (C,H,W) features of a sample, then sigmoid.

    z: (N, F) f32; gamma/beta: (1, F) f32 (channel-major flatten).
    Two-pass variance; exact sigmoid via 0.5*tanh(0.5*y)+0.5 (single EUP op).
    """
    f = z.shape[1]
    mean = jnp.sum(z, axis=1, keepdims=True) * (1.0 / f)
    d = z - mean
    var = jnp.sum(d * d, axis=1, keepdims=True) * (1.0 / f)
    y = d * lax.rsqrt(var + LN_EPS) * gamma + beta
    return 0.5 * jnp.tanh(0.5 * y) + 0.5


def _lenet_fused_kernel(x_ref,
                        m1_ref, b1_ref, g1_ref, be1_ref,
                        m2_ref, b2_ref, g2_ref, be2_ref,
                        m3_ref, b3_ref, g3_ref, be3_ref,
                        wfc_ref, bfc_ref, out_ref):
    # Layer 1 conv: one batch-folded large-K matmul (K = C_in*H*W).
    x = x_ref[...].astype(jnp.bfloat16)
    z1 = jnp.dot(x, m1_ref[...], preferred_element_type=jnp.float32) + b1_ref[...]
    a1 = _ln_sigmoid(z1, g1_ref[...], be1_ref[...]).astype(jnp.bfloat16)

    # Layer 2 conv (stride 2): one matmul, K = 12*HW1.
    z2 = jnp.dot(a1, m2_ref[...], preferred_element_type=jnp.float32) + b2_ref[...]
    a2 = _ln_sigmoid(z2, g2_ref[...], be2_ref[...]).astype(jnp.bfloat16)

    # Layer 3 conv (stride 1): one matmul, K = 12*HW2.
    z3 = jnp.dot(a2, m3_ref[...], preferred_element_type=jnp.float32) + b3_ref[...]
    a3 = _ln_sigmoid(z3, g3_ref[...], be3_ref[...]).astype(jnp.bfloat16)

    # FC: a3 is already the PyTorch NCHW flatten (c*HW3 + pos); one matmul,
    # classes padded to 128 lanes -> single dense (N, 128) store.
    out_ref[...] = (jnp.dot(a3, wfc_ref[...], preferred_element_type=jnp.float32)
                    + bfc_ref[...])


# ---------------------------------------------------------------------------
# Wrapper (jitted): a free flatten + one fused pallas_call, nothing else
# ---------------------------------------------------------------------------
def lenet_urban_forward(x, packed, num_classes=10):
    n = x.shape[0]
    x_flat = x.reshape(n, -1)                       # PyTorch NCHW flatten order
    vmem = pl.BlockSpec(memory_space=pltpu.MemorySpace.VMEM)
    logits = pl.pallas_call(
        _lenet_fused_kernel,
        out_shape=jax.ShapeDtypeStruct((n, CP), jnp.float32),
        in_specs=[vmem] * 15,
        out_specs=vmem,
    )(x_flat,
      packed["m1"], packed["b1"], packed["g1"], packed["be1"],
      packed["m2"], packed["b2"], packed["g2"], packed["be2"],
      packed["m3"], packed["b3"], packed["g3"], packed["be3"],
      packed["wfc"], packed["bfc"])
    return logits[:, :num_classes]


# ---------------------------------------------------------------------------
# One-time host-side parameter packing (outside jit)
# ---------------------------------------------------------------------------
def _conv_as_matmul(w, h_in, w_in, stride):
    """Unroll a 5x5 conv (zero padding, given stride) into a dense matrix.

    w: (C_out, C_in, 5, 5).  Returns M of shape
    (C_in*H_in*W_in, C_out*H_out*W_out) such that, for activations flattened
    channel-major (PyTorch NCHW flatten), conv(x) == x_flat @ M.
    Zero padding is encoded simply as absent (zero) rows.
    """
    w = np.asarray(w, np.float32)
    c_out, c_in = w.shape[0], w.shape[1]
    h_out, w_out = _conv_out(h_in, stride), _conv_out(w_in, stride)
    m = np.zeros((c_in, h_in, w_in, c_out, h_out, w_out), np.float32)
    for kh in range(KSIZE):
        for kw in range(KSIZE):
            for ho in range(h_out):
                hi = stride * ho + kh - PAD
                if hi < 0 or hi >= h_in:
                    continue
                for wo in range(w_out):
                    wi = stride * wo + kw - PAD
                    if wi < 0 or wi >= w_in:
                        continue
                    m[:, hi, wi, :, ho, wo] += w[:, :, kh, kw].T
    return m.reshape(c_in * h_in * w_in, c_out * h_out * w_out)


def pack_params(params, h_in, w_in):
    """Pack PyTorch-layout parameters into the layouts the fused kernel uses."""
    _, h1, w1 = params["g1"].shape
    _, h2, w2 = params["g2"].shape
    _, h3, w3 = params["g3"].shape
    num_classes = params["fc_w"].shape[0]

    def ln_flat(p):                       # (12, H, W) -> (1, 12*H*W), f32
        return jnp.asarray(np.asarray(p, np.float32).reshape(1, -1))

    def bias_flat(b, hw):                 # (12,) -> (1, 12*HW), per-channel bcast
        return jnp.asarray(np.repeat(np.asarray(b, np.float32), hw)[None, :])

    m1 = _conv_as_matmul(params["w1"], h_in, w_in, stride=2)
    m2 = _conv_as_matmul(params["w2"], h1, w1, stride=2)
    m3 = _conv_as_matmul(params["w3"], h2, w2, stride=1)

    wfc = np.asarray(params["fc_w"], np.float32).T           # (hidden, classes)
    wfc = np.pad(wfc, ((0, 0), (0, CP - num_classes)))
    bfc = np.pad(np.asarray(params["fc_b"], np.float32)[None, :],
                 ((0, 0), (0, CP - num_classes)))

    return {
        "m1": jnp.asarray(m1, jnp.bfloat16),
        "b1": bias_flat(params["b1"], h1 * w1),
        "g1": ln_flat(params["g1"]),
        "be1": ln_flat(params["be1"]),
        "m2": jnp.asarray(m2, jnp.bfloat16),
        "b2": bias_flat(params["b2"], h2 * w2),
        "g2": ln_flat(params["g2"]),
        "be2": ln_flat(params["be2"]),
        "m3": jnp.asarray(m3, jnp.bfloat16),
        "b3": bias_flat(params["b3"], h3 * w3),
        "g3": ln_flat(params["g3"]),
        "be3": ln_flat(params["be3"]),
        "wfc": jnp.asarray(wfc, jnp.bfloat16),
        "bfc": jnp.asarray(bfc, jnp.float32),
    }


def init_params(key, channel, h_in, w_in, num_classes):
    h1, w1 = _conv_out(h_in, 2), _conv_out(w_in, 2)
    h2, w2 = _conv_out(h1, 2), _conv_out(w1, 2)
    h3, w3 = _conv_out(h2, 1), _conv_out(w2, 1)
    hidden = 12 * h3 * w3
    ks = jax.random.split(key, 8)
    return {
        "w1": 0.1 * jax.random.normal(ks[0], (12, channel, 5, 5), jnp.float32),
        "b1": 0.1 * jax.random.normal(ks[1], (12,), jnp.float32),
        "g1": jnp.ones((12, h1, w1), jnp.float32),
        "be1": jnp.zeros((12, h1, w1), jnp.float32),
        "w2": 0.1 * jax.random.normal(ks[2], (12, 12, 5, 5), jnp.float32),
        "b2": 0.1 * jax.random.normal(ks[3], (12,), jnp.float32),
        "g2": jnp.ones((12, h2, w2), jnp.float32),
        "be2": jnp.zeros((12, h2, w2), jnp.float32),
        "w3": 0.1 * jax.random.normal(ks[4], (12, 12, 5, 5), jnp.float32),
        "b3": 0.1 * jax.random.normal(ks[5], (12,), jnp.float32),
        "g3": jnp.ones((12, h3, w3), jnp.float32),
        "be3": jnp.zeros((12, h3, w3), jnp.float32),
        "fc_w": 0.1 * jax.random.normal(ks[6], (num_classes, hidden),
                                        jnp.float32),
        "fc_b": 0.1 * jax.random.normal(ks[7], (num_classes,), jnp.float32),
    }


if __name__ == "__main__":
    # Small shapes consistent with the module structure:
    # (N=2, C=3, 16x16) -> 8x8 -> 4x4 -> 4x4, hidden = 12*4*4 = 192 -> 10.
    key = jax.random.PRNGKey(0)
    k_x, k_p = jax.random.split(key)
    N, CHAN, H, W, NUM_CLASSES = 2, 3, 16, 16, 10
    x = jax.random.normal(k_x, (N, CHAN, H, W), jnp.float32)
    params = init_params(k_p, CHAN, H, W, NUM_CLASSES)
    packed = pack_params(params, H, W)      # host-side, once, outside jit

    fwd = jax.jit(lenet_urban_forward, static_argnames=("num_classes",))
    out = fwd(x, packed, num_classes=NUM_CLASSES)
    jax.block_until_ready(out)
    assert out.shape == (N, NUM_CLASSES)
    print("KERNEL_OK")
</pallas_src>

<mosaic_0001>
module attributes {stable_mosaic.version = 11 : i64} {
  func.func @_lenet_fused_kernel(%arg0: memref<2x768xf32, #tpu.memory_space<vmem>>, %arg1: memref<768x768xbf16, #tpu.memory_space<vmem>>, %arg2: memref<1x768xf32, #tpu.memory_space<vmem>>, %arg3: memref<1x768xf32, #tpu.memory_space<vmem>>, %arg4: memref<1x768xf32, #tpu.memory_space<vmem>>, %arg5: memref<768x192xbf16, #tpu.memory_space<vmem>>, %arg6: memref<1x192xf32, #tpu.memory_space<vmem>>, %arg7: memref<1x192xf32, #tpu.memory_space<vmem>>, %arg8: memref<1x192xf32, #tpu.memory_space<vmem>>, %arg9: memref<192x192xbf16, #tpu.memory_space<vmem>>, %arg10: memref<1x192xf32, #tpu.memory_space<vmem>>, %arg11: memref<1x192xf32, #tpu.memory_space<vmem>>, %arg12: memref<1x192xf32, #tpu.memory_space<vmem>>, %arg13: memref<192x128xbf16, #tpu.memory_space<vmem>>, %arg14: memref<1x128xf32, #tpu.memory_space<vmem>>, %arg15: memref<2x128xf32, #tpu.memory_space<vmem>>) attributes {dimension_semantics = [], scalar_prefetch = 0 : i64, scratch_operands = 0 : i64, tpu.core_type = #tpu.core_type<tc>} {
    %c0 = arith.constant 0 : index
    %c0_0 = arith.constant 0 : index
    %0 = vector.load %arg0[%c0, %c0_0] : memref<2x768xf32, #tpu.memory_space<vmem>>, vector<2x768xf32>
    %1 = arith.truncf %0 : vector<2x768xf32> to vector<2x768xbf16>
    %c0_1 = arith.constant 0 : index
    %c0_2 = arith.constant 0 : index
    %2 = vector.load %arg1[%c0_1, %c0_2] : memref<768x768xbf16, #tpu.memory_space<vmem>>, vector<768x768xbf16>
    %cst = arith.constant dense<0.000000e+00> : vector<2x768xf32>
    %3 = tpu.matmul %1, %2, %cst {dimension_numbers = #tpu.dot_dimension_numbers<[1], [0], [0], [1], [0, 0, 1, 1], [], []>} : vector<2x768xbf16>, vector<768x768xbf16>, vector<2x768xf32> -> vector<2x768xf32>
    %c0_3 = arith.constant 0 : index
    %c0_4 = arith.constant 0 : index
    %4 = vector.load %arg2[%c0_3, %c0_4] : memref<1x768xf32, #tpu.memory_space<vmem>>, vector<1x768xf32>
    %5 = vector.broadcast %4 : vector<1x768xf32> to vector<2x768xf32>
    %6 = arith.addf %3, %5 : vector<2x768xf32>
    %c0_5 = arith.constant 0 : index
    %c0_6 = arith.constant 0 : index
    %7 = vector.load %arg3[%c0_5, %c0_6] : memref<1x768xf32, #tpu.memory_space<vmem>>, vector<1x768xf32>
    %c0_7 = arith.constant 0 : index
    %c0_8 = arith.constant 0 : index
    %8 = vector.load %arg4[%c0_7, %c0_8] : memref<1x768xf32, #tpu.memory_space<vmem>>, vector<1x768xf32>
    %cst_9 = arith.constant dense<0.000000e+00> : vector<2xf32>
    %9 = vector.multi_reduction <add>, %6, %cst_9 [1] : vector<2x768xf32> to vector<2xf32>
    %10 = vector.shape_cast %9 : vector<2xf32> to vector<2x1xf32>
    %cst_10 = arith.constant 0.00130208337 : f32
    %11 = vector.broadcast %cst_10 : f32 to vector<2x1xf32>
    %12 = arith.mulf %10, %11 : vector<2x1xf32>
    %13 = vector.broadcast %12 : vector<2x1xf32> to vector<2x768xf32>
    %14 = arith.subf %6, %13 : vector<2x768xf32>
    %15 = arith.mulf %14, %14 : vector<2x768xf32>
    %cst_11 = arith.constant dense<0.000000e+00> : vector<2xf32>
    %16 = vector.multi_reduction <add>, %15, %cst_11 [1] : vector<2x768xf32> to vector<2xf32>
    %17 = vector.shape_cast %16 : vector<2xf32> to vector<2x1xf32>
    %cst_12 = arith.constant 0.00130208337 : f32
    %18 = vector.broadcast %cst_12 : f32 to vector<2x1xf32>
    %19 = arith.mulf %17, %18 : vector<2x1xf32>
    %cst_13 = arith.constant 9.99999974E-6 : f32
    %20 = vector.broadcast %cst_13 : f32 to vector<2x1xf32>
    %21 = arith.addf %19, %20 : vector<2x1xf32>
    %22 = math.rsqrt %21 : vector<2x1xf32>
    %23 = vector.broadcast %22 : vector<2x1xf32> to vector<2x768xf32>
    %24 = arith.mulf %14, %23 : vector<2x768xf32>
    %25 = vector.broadcast %7 : vector<1x768xf32> to vector<2x768xf32>
    %26 = arith.mulf %24, %25 : vector<2x768xf32>
    %27 = vector.broadcast %8 : vector<1x768xf32> to vector<2x768xf32>
    %28 = arith.addf %26, %27 : vector<2x768xf32>
    %cst_14 = arith.constant 5.000000e-01 : f32
    %29 = vector.broadcast %cst_14 : f32 to vector<2x768xf32>
    %30 = arith.mulf %29, %28 : vector<2x768xf32>
    %31 = math.tanh %30 : vector<2x768xf32>
    %cst_15 = arith.constant 5.000000e-01 : f32
    %32 = vector.broadcast %cst_15 : f32 to vector<2x768xf32>
    %33 = arith.mulf %32, %31 : vector<2x768xf32>
    %cst_16 = arith.constant 5.000000e-01 : f32
    %34 = vector.broadcast %cst_16 : f32 to vector<2x768xf32>
    %35 = arith.addf %33, %34 : vector<2x768xf32>
    %36 = arith.truncf %35 : vector<2x768xf32> to vector<2x768xbf16>
    %c0_17 = arith.constant 0 : index
    %c0_18 = arith.constant 0 : index
    %37 = vector.load %arg5[%c0_17, %c0_18] : memref<768x192xbf16, #tpu.memory_space<vmem>>, vector<768x192xbf16>
    %cst_19 = arith.constant dense<0.000000e+00> : vector<2x192xf32>
    %38 = tpu.matmul %36, %37, %cst_19 {dimension_numbers = #tpu.dot_dimension_numbers<[1], [0], [0], [1], [0, 0, 1, 1], [], []>} : vector<2x768xbf16>, vector<768x192xbf16>, vector<2x192xf32> -> vector<2x192xf32>
    %c0_20 = arith.constant 0 : index
    %c0_21 = arith.constant 0 : index
    %39 = vector.load %arg6[%c0_20, %c0_21] : memref<1x192xf32, #tpu.memory_space<vmem>>, vector<1x192xf32>
    %40 = vector.broadcast %39 : vector<1x192xf32> to vector<2x192xf32>
    %41 = arith.addf %38, %40 : vector<2x192xf32>
    %c0_22 = arith.constant 0 : index
    %c0_23 = arith.constant 0 : index
    %42 = vector.load %arg7[%c0_22, %c0_23] : memref<1x192xf32, #tpu.memory_space<vmem>>, vector<1x192xf32>
    %c0_24 = arith.constant 0 : index
    %c0_25 = arith.constant 0 : index
    %43 = vector.load %arg8[%c0_24, %c0_25] : memref<1x192xf32, #tpu.memory_space<vmem>>, vector<1x192xf32>
    %cst_26 = arith.constant dense<0.000000e+00> : vector<2xf32>
    %44 = vector.multi_reduction <add>, %41, %cst_26 [1] : vector<2x192xf32> to vector<2xf32>
    %45 = vector.shape_cast %44 : vector<2xf32> to vector<2x1xf32>
    %cst_27 = arith.constant 0.00520833349 : f32
    %46 = vector.broadcast %cst_27 : f32 to vector<2x1xf32>
    %47 = arith.mulf %45, %46 : vector<2x1xf32>
    %48 = vector.broadcast %47 : vector<2x1xf32> to vector<2x192xf32>
    %49 = arith.subf %41, %48 : vector<2x192xf32>
    %50 = arith.mulf %49, %49 : vector<2x192xf32>
    %cst_28 = arith.constant dense<0.000000e+00> : vector<2xf32>
    %51 = vector.multi_reduction <add>, %50, %cst_28 [1] : vector<2x192xf32> to vector<2xf32>
    %52 = vector.shape_cast %51 : vector<2xf32> to vector<2x1xf32>
    %cst_29 = arith.constant 0.00520833349 : f32
    %53 = vector.broadcast %cst_29 : f32 to vector<2x1xf32>
    %54 = arith.mulf %52, %53 : vector<2x1xf32>
    %cst_30 = arith.constant 9.99999974E-6 : f32
    %55 = vector.broadcast %cst_30 : f32 to vector<2x1xf32>
    %56 = arith.addf %54, %55 : vector<2x1xf32>
    %57 = math.rsqrt %56 : vector<2x1xf32>
    %58 = vector.broadcast %57 : vector<2x1xf32> to vector<2x192xf32>
    %59 = arith.mulf %49, %58 : vector<2x192xf32>
    %60 = vector.broadcast %42 : vector<1x192xf32> to vector<2x192xf32>
    %61 = arith.mulf %59, %60 : vector<2x192xf32>
    %62 = vector.broadcast %43 : vector<1x192xf32> to vector<2x192xf32>
    %63 = arith.addf %61, %62 : vector<2x192xf32>
    %cst_31 = arith.constant 5.000000e-01 : f32
    %64 = vector.broadcast %cst_31 : f32 to vector<2x192xf32>
    %65 = arith.mulf %64, %63 : vector<2x192xf32>
    %66 = math.tanh %65 : vector<2x192xf32>
    %cst_32 = arith.constant 5.000000e-01 : f32
    %67 = vector.broadcast %cst_32 : f32 to vector<2x192xf32>
    %68 = arith.mulf %67, %66 : vector<2x192xf32>
    %cst_33 = arith.constant 5.000000e-01 : f32
    %69 = vector.broadcast %cst_33 : f32 to vector<2x192xf32>
    %70 = arith.addf %68, %69 : vector<2x192xf32>
    %71 = arith.truncf %70 : vector<2x192xf32> to vector<2x192xbf16>
    %c0_34 = arith.constant 0 : index
    %c0_35 = arith.constant 0 : index
    %72 = vector.load %arg9[%c0_34, %c0_35] : memref<192x192xbf16, #tpu.memory_space<vmem>>, vector<192x192xbf16>
    %cst_36 = arith.constant dense<0.000000e+00> : vector<2x192xf32>
    %73 = tpu.matmul %71, %72, %cst_36 {dimension_numbers = #tpu.dot_dimension_numbers<[1], [0], [0], [1], [0, 0, 1, 1], [], []>} : vector<2x192xbf16>, vector<192x192xbf16>, vector<2x192xf32> -> vector<2x192xf32>
    %c0_37 = arith.constant 0 : index
    %c0_38 = arith.constant 0 : index
    %74 = vector.load %arg10[%c0_37, %c0_38] : memref<1x192xf32, #tpu.memory_space<vmem>>, vector<1x192xf32>
    %75 = vector.broadcast %74 : vector<1x192xf32> to vector<2x192xf32>
    %76 = arith.addf %73, %75 : vector<2x192xf32>
    %c0_39 = arith.constant 0 : index
    %c0_40 = arith.constant 0 : index
    %77 = vector.load %arg11[%c0_39, %c0_40] : memref<1x192xf32, #tpu.memory_space<vmem>>, vector<1x192xf32>
    %c0_41 = arith.constant 0 : index
    %c0_42 = arith.constant 0 : index
    %78 = vector.load %arg12[%c0_41, %c0_42] : memref<1x192xf32, #tpu.memory_space<vmem>>, vector<1x192xf32>
    %cst_43 = arith.constant dense<0.000000e+00> : vector<2xf32>
    %79 = vector.multi_reduction <add>, %76, %cst_43 [1] : vector<2x192xf32> to vector<2xf32>
    %80 = vector.shape_cast %79 : vector<2xf32> to vector<2x1xf32>
    %cst_44 = arith.constant 0.00520833349 : f32
    %81 = vector.broadcast %cst_44 : f32 to vector<2x1xf32>
    %82 = arith.mulf %80, %81 : vector<2x1xf32>
    %83 = vector.broadcast %82 : vector<2x1xf32> to vector<2x192xf32>
    %84 = arith.subf %76, %83 : vector<2x192xf32>
    %85 = arith.mulf %84, %84 : vector<2x192xf32>
    %cst_45 = arith.constant dense<0.000000e+00> : vector<2xf32>
    %86 = vector.multi_reduction <add>, %85, %cst_45 [1] : vector<2x192xf32> to vector<2xf32>
    %87 = vector.shape_cast %86 : vector<2xf32> to vector<2x1xf32>
    %cst_46 = arith.constant 0.00520833349 : f32
    %88 = vector.broadcast %cst_46 : f32 to vector<2x1xf32>
    %89 = arith.mulf %87, %88 : vector<2x1xf32>
    %cst_47 = arith.constant 9.99999974E-6 : f32
    %90 = vector.broadcast %cst_47 : f32 to vector<2x1xf32>
    %91 = arith.addf %89, %90 : vector<2x1xf32>
    %92 = math.rsqrt %91 : vector<2x1xf32>
    %93 = vector.broadcast %92 : vector<2x1xf32> to vector<2x192xf32>
    %94 = arith.mulf %84, %93 : vector<2x192xf32>
    %95 = vector.broadcast %77 : vector<1x192xf32> to vector<2x192xf32>
    %96 = arith.mulf %94, %95 : vector<2x192xf32>
    %97 = vector.broadcast %78 : vector<1x192xf32> to vector<2x192xf32>
    %98 = arith.addf %96, %97 : vector<2x192xf32>
    %cst_48 = arith.constant 5.000000e-01 : f32
    %99 = vector.broadcast %cst_48 : f32 to vector<2x192xf32>
    %100 = arith.mulf %99, %98 : vector<2x192xf32>
    %101 = math.tanh %100 : vector<2x192xf32>
    %cst_49 = arith.constant 5.000000e-01 : f32
    %102 = vector.broadcast %cst_49 : f32 to vector<2x192xf32>
    %103 = arith.mulf %102, %101 : vector<2x192xf32>
    %cst_50 = arith.constant 5.000000e-01 : f32
    %104 = vector.broadcast %cst_50 : f32 to vector<2x192xf32>
    %105 = arith.addf %103, %104 : vector<2x192xf32>
    %106 = arith.truncf %105 : vector<2x192xf32> to vector<2x192xbf16>
    %c0_51 = arith.constant 0 : index
    %c0_52 = arith.constant 0 : index
    %107 = vector.load %arg13[%c0_51, %c0_52] : memref<192x128xbf16, #tpu.memory_space<vmem>>, vector<192x128xbf16>
    %cst_53 = arith.constant dense<0.000000e+00> : vector<2x128xf32>
    %108 = tpu.matmul %106, %107, %cst_53 {dimension_numbers = #tpu.dot_dimension_numbers<[1], [0], [0], [1], [0, 0, 1, 1], [], []>} : vector<2x192xbf16>, vector<192x128xbf16>, vector<2x128xf32> -> vector<2x128xf32>
    %c0_54 = arith.constant 0 : index
    %c0_55 = arith.constant 0 : index
    %109 = vector.load %arg14[%c0_54, %c0_55] : memref<1x128xf32, #tpu.memory_space<vmem>>, vector<1x128xf32>
    %110 = vector.broadcast %109 : vector<1x128xf32> to vector<2x128xf32>
    %111 = arith.addf %108, %110 : vector<2x128xf32>
    %c0_56 = arith.constant 0 : index
    %c0_57 = arith.constant 0 : index
    %112 = vector.load %arg15[%c0_56, %c0_57] : memref<2x128xf32, #tpu.memory_space<vmem>>, vector<2x128xf32>
    tpu.vector_store %arg15[%c0_56, %c0_57], %111 {strides = array<i32>} : memref<2x128xf32, #tpu.memory_space<vmem>>, vector<2x128xf32>,
    return
  }
}

</mosaic_0001>

<llo_original>
// kernel: lenet_urban_forward.1
$region0: #{lenet_urban_forward.1}
  #allocation0 [shape = 'u32[]', space=smem, size = 0x4, offset = 0x4, fixed_abs, tag = 'smem constant byte address 0x4 - core index']
  #allocation1 [shape = 'u32[144,128]{1,0:T(1,128)}', space=vmem, size = 0x12000, scoped, tag = 'internal scratch']
  %s0 = inlined_call_operand.vmem [shape: f32[2,768], index: 0, kind: input, shape index: {}]
  %s1 = inlined_call_operand.hbm [shape: bf16[768,768], index: 1, kind: input, shape index: {}]
  %s2 = inlined_call_operand.hbm [shape: f32[1,768], index: 2, kind: input, shape index: {}]
  %s3 = inlined_call_operand.hbm [shape: f32[1,768], index: 3, kind: input, shape index: {}]
  %s4 = inlined_call_operand.hbm [shape: f32[1,768], index: 4, kind: input, shape index: {}]
  %s5 = inlined_call_operand.vmem [shape: bf16[768,192], index: 5, kind: input, shape index: {}]
  %s6 = inlined_call_operand.hbm [shape: f32[1,192], index: 6, kind: input, shape index: {}]
  %s7 = inlined_call_operand.hbm [shape: f32[1,192], index: 7, kind: input, shape index: {}]
  %s8 = inlined_call_operand.hbm [shape: f32[1,192], index: 8, kind: input, shape index: {}]
  %s9 = inlined_call_operand.hbm [shape: bf16[192,192], index: 9, kind: input, shape index: {}]
  %s10 = inlined_call_operand.hbm [shape: f32[1,192], index: 10, kind: input, shape index: {}]
  %s11 = inlined_call_operand.hbm [shape: f32[1,192], index: 11, kind: input, shape index: {}]
  %s12 = inlined_call_operand.hbm [shape: f32[1,192], index: 12, kind: input, shape index: {}]
  %s13 = inlined_call_operand.hbm [shape: bf16[192,128], index: 13, kind: input, shape index: {}]
  %s14 = inlined_call_operand.hbm [shape: f32[1,128], index: 14, kind: input, shape index: {}]
  %s15 = inlined_call_operand.hbm [shape: f32[2,128], index: 15, kind: output, shape index: {}]
  %s16 = sld [smem:[#allocation0]]
  $region122: #{lenet_urban_forward.1} parent=0
    _
  %s18 = ssub.s32 1, %s16
  %s19 = scalar_select 0, %s18, %s16
  $region1: #{lenet_urban_forward.1} parent=0
    #allocation2 [shape = 'u8[1179648]{0}', space=vmem, size = 0x120000, scoped, tag = 'input window, operand 1, single buffered']
    #allocation3 [shape = 's32[1]{0}', space=sflag, size = 0x4, scoped, tag = 'scoped memory for lenet_urban_forward.1']
    #allocation4 [shape = 's32[1]{0}', space=sflag, size = 0x4, scoped, tag = 'scoped memory for lenet_urban_forward.1']
    #allocation5 [shape = 'u8[3072]{0}', space=vmem, size = 0xc00, scoped, tag = 'input window, operand 2, single buffered']
    #allocation6 [shape = 's32[1]{0}', space=sflag, size = 0x4, scoped, tag = 'scoped memory for lenet_urban_forward.1']
    #allocation7 [shape = 'u8[3072]{0}', space=vmem, size = 0xc00, scoped, tag = 'input window, operand 3, single buffered']
    #allocation8 [shape = 'u8[3072]{0}', space=vmem, size = 0xc00, scoped, tag = 'input window, operand 4, single buffered']
    #allocation9 [shape = 's32[1]{0}', space=sflag, size = 0x4, scoped, tag = 'scoped memory for lenet_urban_forward.1']
    #allocation10 [shape = 'u8[1024]{0}', space=vmem, size = 0x400, scoped, tag = 'input window, operand 6, single buffered']
    #allocation11 [shape = 'u8[1024]{0}', space=vmem, size = 0x400, scoped, tag = 'input window, operand 7, single buffered']
    #allocation12 [shape = 's32[1]{0}', space=sflag, size = 0x4, scoped, tag = 'scoped memory for lenet_urban_forward.1']
    #allocation13 [shape = 'u8[1024]{0}', space=vmem, size = 0x400, scoped, tag = 'input window, operand 8, single buffered']
    #allocation14 [shape = 'u8[98304]{0}', space=vmem, size = 0x18000, scoped, tag = 'input window, operand 9, single buffered']
    #allocation15 [shape = 's32[1]{0}', space=sflag, size = 0x4, scoped, tag = 'scoped memory for lenet_urban_forward.1']
    #allocation16 [shape = 'u8[1024]{0}', space=vmem, size = 0x400, scoped, tag = 'input window, operand 10, single buffered']
    #allocation17 [shape = 'u8[1024]{0}', space=vmem, size = 0x400, scoped, tag = 'input window, operand 11, single buffered']
    #allocation18 [shape = 's32[1]{0}', space=sflag, size = 0x4, scoped, tag = 'scoped memory for lenet_urban_forward.1']
    #allocation19 [shape = 'u8[1024]{0}', space=vmem, size = 0x400, scoped, tag = 'input window, operand 12, single buffered']
    #allocation20 [shape = 'u8[49152]{0}', space=vmem, size = 0xc000, scoped, tag = 'input window, operand 13, single buffered']
    #allocation21 [shape = 's32[1]{0}', space=sflag, size = 0x4, scoped, tag = 'scoped memory for lenet_urban_forward.1']
    #allocation22 [shape = 'u8[512]{0}', space=vmem, size = 0x400, scoped, tag = 'input window, operand 14, single buffered']
    #allocation23 [shape = 'u8[1024]{0}', space=vmem, size = 0x400, scoped, tag = 'output window, operand 0, single buffered']
    %20 = vsyncpa [#allocation3], 0
    %21 = vsyncpa [#allocation6], 0
    %22 = vsyncpa [#allocation9], 0
    %23 = vsyncpa [#allocation12], 0
    %24 = vsyncpa [#allocation15], 0
    %25 = vsyncpa [#allocation18], 0
    %26 = vsyncpa [#allocation21], 0
    %27 = vsyncpa [#allocation4], 0
    // Predicated region
    $region2: #{lenet_urban_forward.1} parent=1 // pred_check
      _
    $region3: #{lenet_urban_forward.1} parent=1 // pred_check_branch
      %29 = sbr.rel (0) target = $region5
    $region4: #{lenet_urban_forward.1} parent=1 // pred_region
      _
    $region5: #{lenet_urban_forward.1} parent=1 // pred_fallthru
      _
    // Predicated region
    $region6: #{lenet_urban_forward.1} parent=1 // pred_check
      _
    $region7: #{lenet_urban_forward.1} parent=1 // pred_check_branch
      %31 = sbr.rel (0) target = $region9
    $region8: #{lenet_urban_forward.1} parent=1 // pred_region
      %s33 = ssub.s32 36864, 36864
      %34 = vsyncadd [#allocation3], %s33
      %s35 = sshll.u32 [#allocation2], 4
      %s36 = int_to_ptr.vmem [resolvable:$true] %s35
      %41 = dma.hbm_to_vmem [thread:$0]  %s1, 36864, %s36, [#allocation3], 384, 384, 24
    $region9: #{lenet_urban_forward.1} parent=1 // pred_fallthru
      _
    // Predicated region
    $region10: #{lenet_urban_forward.1} parent=1 // pred_check
      _
    $region11: #{lenet_urban_forward.1} parent=1 // pred_check_branch
      %43 = sbr.rel (0) target = $region13
    $region12: #{lenet_urban_forward.1} parent=1 // pred_region
      %s45 = ssub.s32 96, 96
      %46 = vsyncadd [#allocation6], %s45
      %s48 = sshll.u32 [#allocation5], 4
      %s49 = int_to_ptr.vmem [resolvable:$true] %s48
      %51 = dma.hbm_to_vmem [thread:$0]  %s2, 96, %s49, [#allocation6]
    $region13: #{lenet_urban_forward.1} parent=1 // pred_fallthru
      _
    // Predicated region
    $region14: #{lenet_urban_forward.1} parent=1 // pred_check
      _
    $region15: #{lenet_urban_forward.1} parent=1 // pred_check_branch
      %53 = sbr.rel (0) target = $region17
    $region16: #{lenet_urban_forward.1} parent=1 // pred_region
      %s55 = ssub.s32 96, 96
      %56 = vsyncadd [#allocation6], %s55
      %s58 = sshll.u32 [#allocation7], 4
      %s59 = int_to_ptr.vmem [resolvable:$true] %s58
      %61 = dma.hbm_to_vmem [thread:$0]  %s3, 96, %s59, [#allocation6]
    $region17: #{lenet_urban_forward.1} parent=1 // pred_fallthru
      _
    // Predicated region
    $region18: #{lenet_urban_forward.1} parent=1 // pred_check
      _
    $region19: #{lenet_urban_forward.1} parent=1 // pred_check_branch
      %63 = sbr.rel (0) target = $region21
    $region20: #{lenet_urban_forward.1} parent=1 // pred_region
      %s65 = ssub.s32 96, 96
      %66 = vsyncadd [#allocation9], %s65
      %s68 = sshll.u32 [#allocation8], 4
      %s69 = int_to_ptr.vmem [resolvable:$true] %s68
      %71 = dma.hbm_to_vmem [thread:$0]  %s4, 96, %s69, [#allocation9]
    $region21: #{lenet_urban_forward.1} parent=1 // pred_fallthru
      _
    // Predicated region
    $region22: #{lenet_urban_forward.1} parent=1 // pred_check
      _
    $region23: #{lenet_urban_forward.1} parent=1 // pred_check_branch
      %73 = sbr.rel (0) target = $region25
    $region24: #{lenet_urban_forward.1} parent=1 // pred_region
      _
    $region25: #{lenet_urban_forward.1} parent=1 // pred_fallthru
      _
    // Predicated region
    $region26: #{lenet_urban_forward.1} parent=1 // pred_check
      _
    $region27: #{lenet_urban_forward.1} parent=1 // pred_check_branch
      %75 = sbr.rel (0) target = $region29
    $region28: #{lenet_urban_forward.1} parent=1 // pred_region
      %s77 = ssub.s32 32, 32
      %78 = vsyncadd [#allocation9], %s77
      %s80 = sshll.u32 [#allocation10], 4
      %s81 = int_to_ptr.vmem [resolvable:$true] %s80
      %83 = dma.hbm_to_vmem [thread:$0]  %s6, 32, %s81, [#allocation9]
    $region29: #{lenet_urban_forward.1} parent=1 // pred_fallthru
      _
    // Predicated region
    $region30: #{lenet_urban_forward.1} parent=1 // pred_check
      _
    $region31: #{lenet_urban_forward.1} parent=1 // pred_check_branch
      %85 = sbr.rel (0) target = $region33
    $region32: #{lenet_urban_forward.1} parent=1 // pred_region
      %s87 = ssub.s32 32, 32
      %88 = vsyncadd [#allocation12], %s87
      %s90 = sshll.u32 [#allocation11], 4
      %s91 = int_to_ptr.vmem [resolvable:$true] %s90
      %93 = dma.hbm_to_vmem [thread:$0]  %s7, 32, %s91, [#allocation12]
    $region33: #{lenet_urban_forward.1} parent=1 // pred_fallthru
      _
    // Predicated region
    $region34: #{lenet_urban_forward.1} parent=1 // pred_check
      _
    $region35: #{lenet_urban_forward.1} parent=1 // pred_check_branch
      %95 = sbr.rel (0) target = $region37
    $region36: #{lenet_urban_forward.1} parent=1 // pred_region
      %s97 = ssub.s32 32, 32
      %98 = vsyncadd [#allocation12], %s97
      %s100 = sshll.u32 [#allocation13], 4
      %s101 = int_to_ptr.vmem [resolvable:$true] %s100
      %103 = dma.hbm_to_vmem [thread:$0]  %s8, 32, %s101, [#allocation12]
    $region37: #{lenet_urban_forward.1} parent=1 // pred_fallthru
      _
    // Predicated region
    $region38: #{lenet_urban_forward.1} parent=1 // pred_check
      _
    $region39: #{lenet_urban_forward.1} parent=1 // pred_check_branch
      %105 = sbr.rel (0) target = $region41
    $region40: #{lenet_urban_forward.1} parent=1 // pred_region
      %s107 = ssub.s32 3072, 3072
      %108 = vsyncadd [#allocation15], %s107
      %s109 = sshll.u32 [#allocation14], 4
      %s110 = int_to_ptr.vmem [resolvable:$true] %s109
      %115 = dma.hbm_to_vmem [thread:$0]  %s9, 3072, %s110, [#allocation15], 128, 128, 8
    $region41: #{lenet_urban_forward.1} parent=1 // pred_fallthru
      _
    // Predicated region
    $region42: #{lenet_urban_forward.1} parent=1 // pred_check
      _
    $region43: #{lenet_urban_forward.1} parent=1 // pred_check_branch
      %117 = sbr.rel (0) target = $region45
    $region44: #{lenet_urban_forward.1} parent=1 // pred_region
      %s119 = ssub.s32 32, 32
      %120 = vsyncadd [#allocation15], %s119
      %s122 = sshll.u32 [#allocation16], 4
      %s123 = int_to_ptr.vmem [resolvable:$true] %s122
      %125 = dma.hbm_to_vmem [thread:$0]  %s10, 32, %s123, [#allocation15]
    $region45: #{lenet_urban_forward.1} parent=1 // pred_fallthru
      _
    // Predicated region
    $region46: #{lenet_urban_forward.1} parent=1 // pred_check
      _
    $region47: #{lenet_urban_forward.1} parent=1 // pred_check_branch
      %127 = sbr.rel (0) target = $region49
    $region48: #{lenet_urban_forward.1} parent=1 // pred_region
      %s129 = ssub.s32 32, 32
      %130 = vsyncadd [#allocation18], %s129
      %s132 = sshll.u32 [#allocation17], 4
      %s133 = int_to_ptr.vmem [resolvable:$true] %s132
      %135 = dma.hbm_to_vmem [thread:$0]  %s11, 32, %s133, [#allocation18]
    $region49: #{lenet_urban_forward.1} parent=1 // pred_fallthru
      _
    // Predicated region
    $region50: #{lenet_urban_forward.1} parent=1 // pred_check
      _
    $region51: #{lenet_urban_forward.1} parent=1 // pred_check_branch
      %137 = sbr.rel (0) target = $region53
    $region52: #{lenet_urban_forward.1} parent=1 // pred_region
      %s139 = ssub.s32 32, 32
      %140 = vsyncadd [#allocation18], %s139
      %s142 = sshll.u32 [#allocation19], 4
      %s143 = int_to_ptr.vmem [resolvable:$true] %s142
      %145 = dma.hbm_to_vmem [thread:$0]  %s12, 32, %s143, [#allocation18]
    $region53: #{lenet_urban_forward.1} parent=1 // pred_fallthru
      _
    // Predicated region
    $region54: #{lenet_urban_forward.1} parent=1 // pred_check
      _
    $region55: #{lenet_urban_forward.1} parent=1 // pred_check_branch
      %147 = sbr.rel (0) target = $region57
    $region56: #{lenet_urban_forward.1} parent=1 // pred_region
      %s149 = ssub.s32 1536, 1536
      %150 = vsyncadd [#allocation21], %s149
      %s151 = sshll.u32 [#allocation20], 4
      %s152 = int_to_ptr.vmem [resolvable:$true] %s151
      %157 = dma.hbm_to_vmem [thread:$0]  %s13, 1536, %s152, [#allocation21], 64, 64, 4
    $region57: #{lenet_urban_forward.1} parent=1 // pred_fallthru
      _
    // Predicated region
    $region58: #{lenet_urban_forward.1} parent=1 // pred_check
      _
    $region59: #{lenet_urban_forward.1} parent=1 // pred_check_branch
      %159 = sbr.rel (0) target = $region61
    $region60: #{lenet_urban_forward.1} parent=1 // pred_region
      %s161 = ssub.s32 16, 16
      %162 = vsyncadd [#allocation21], %s161
      %s164 = sshll.u32 [#allocation22], 4
      %s165 = int_to_ptr.vmem [resolvable:$true] %s164
      %167 = dma.hbm_to_vmem [thread:$0]  %s14, 16, %s165, [#allocation21]
    $region61: #{lenet_urban_forward.1} parent=1 // pred_fallthru
      _
    // Predicated region
    $region62: #{lenet_urban_forward.1} parent=1 // pred_check
      _
    $region63: #{lenet_urban_forward.1} parent=1 // pred_check_branch
      %169 = sbr.rel (0) target = $region65
    $region64: #{lenet_urban_forward.1} parent=1 // pred_region
      %170 = dma.done [#allocation3], 36864
    $region65: #{lenet_urban_forward.1} parent=1 // pred_fallthru
      _
    // Predicated region
    $region66: #{lenet_urban_forward.1} parent=1 // pred_check
      _
    $region67: #{lenet_urban_forward.1} parent=1 // pred_check_branch
      %172 = sbr.rel (0) target = $region69
    $region68: #{lenet_urban_forward.1} parent=1 // pred_region
      %173 = dma.done [#allocation6], 96
    $region69: #{lenet_urban_forward.1} parent=1 // pred_fallthru
      _
    // Predicated region
    $region70: #{lenet_urban_forward.1} parent=1 // pred_check
      _
    $region71: #{lenet_urban_forward.1} parent=1 // pred_check_branch
      %175 = sbr.rel (0) target = $region73
    $region72: #{lenet_urban_forward.1} parent=1 // pred_region
      %176 = dma.done [#allocation6], 96
    $region73: #{lenet_urban_forward.1} parent=1 // pred_fallthru
      _
    // Predicated region
    $region74: #{lenet_urban_forward.1} parent=1 // pred_check
      _
    $region75: #{lenet_urban_forward.1} parent=1 // pred_check_branch
      %178 = sbr.rel (0) target = $region77
    $region76: #{lenet_urban_forward.1} parent=1 // pred_region
      %179 = dma.done [#allocation9], 96
    $region77: #{lenet_urban_forward.1} parent=1 // pred_fallthru
      _
    // Predicated region
    $region78: #{lenet_urban_forward.1} parent=1 // pred_check
      _
    $region79: #{lenet_urban_forward.1} parent=1 // pred_check_branch
      %181 = sbr.rel (0) target = $region81
    $region80: #{lenet_urban_forward.1} parent=1 // pred_region
      %182 = dma.done [#allocation9], 32
    $region81: #{lenet_urban_forward.1} parent=1 // pred_fallthru
      _
    // Predicated region
    $region82: #{lenet_urban_forward.1} parent=1 // pred_check
      _
    $region83: #{lenet_urban_forward.1} parent=1 // pred_check_branch
      %184 = sbr.rel (0) target = $region85
    $region84: #{lenet_urban_forward.1} parent=1 // pred_region
      %185 = dma.done [#allocation12], 32
    $region85: #{lenet_urban_forward.1} parent=1 // pred_fallthru
      _
    // Predicated region
    $region86: #{lenet_urban_forward.1} parent=1 // pred_check
      _
    $region87: #{lenet_urban_forward.1} parent=1 // pred_check_branch
      %187 = sbr.rel (0) target = $region89
    $region88: #{lenet_urban_forward.1} parent=1 // pred_region
      %188 = dma.done [#allocation12], 32
    $region89: #{lenet_urban_forward.1} parent=1 // pred_fallthru
      _
    // Predicated region
    $region90: #{lenet_urban_forward.1} parent=1 // pred_check
      _
    $region91: #{lenet_urban_forward.1} parent=1 // pred_check_branch
      %190 = sbr.rel (0) target = $region93
    $region92: #{lenet_urban_forward.1} parent=1 // pred_region
      %191 = dma.done [#allocation15], 3072
    $region93: #{lenet_urban_forward.1} parent=1 // pred_fallthru
      _
    // Predicated region
    $region94: #{lenet_urban_forward.1} parent=1 // pred_check
      _
    $region95: #{lenet_urban_forward.1} parent=1 // pred_check_branch
      %193 = sbr.rel (0) target = $region97
    $region96: #{lenet_urban_forward.1} parent=1 // pred_region
      %194 = dma.done [#allocation15], 32
    $region97: #{lenet_urban_forward.1} parent=1 // pred_fallthru
      _
    // Predicated region
    $region98: #{lenet_urban_forward.1} parent=1 // pred_check
      _
    $region99: #{lenet_urban_forward.1} parent=1 // pred_check_branch
      %196 = sbr.rel (0) target = $region101
    $region100: #{lenet_urban_forward.1} parent=1 // pred_region
      %197 = dma.done [#allocation18], 32
    $region101: #{lenet_urban_forward.1} parent=1 // pred_fallthru
      _
    // Predicated region
    $region102: #{lenet_urban_forward.1} parent=1 // pred_check
      _
    $region103: #{lenet_urban_forward.1} parent=1 // pred_check_branch
      %199 = sbr.rel (0) target = $region105
    $region104: #{lenet_urban_forward.1} parent=1 // pred_region
      %200 = dma.done [#allocation18], 32
    $region105: #{lenet_urban_forward.1} parent=1 // pred_fallthru
      _
    // Predicated region
    $region106: #{lenet_urban_forward.1} parent=1 // pred_check
      _
    $region107: #{lenet_urban_forward.1} parent=1 // pred_check_branch
      %202 = sbr.rel (0) target = $region109
    $region108: #{lenet_urban_forward.1} parent=1 // pred_region
      %203 = dma.done [#allocation21], 1536
    $region109: #{lenet_urban_forward.1} parent=1 // pred_fallthru
      _
    // Predicated region
    $region110: #{lenet_urban_forward.1} parent=1 // pred_check
      _
    $region111: #{lenet_urban_forward.1} parent=1 // pred_check_branch
      %205 = sbr.rel (0) target = $region113
    $region112: #{lenet_urban_forward.1} parent=1 // pred_region
      %206 = dma.done [#allocation21], 16
    $region113: #{lenet_urban_forward.1} parent=1 // pred_fallthru
      _
    %v208 = vld [vmem:[%s0] sm:$0xff]
    %v209 = vld [vmem:[%s0 + $0x8] sm:$0xf]
    %v212 = vcombine.high %v208, %v208
    %v214 = vunpack.c.l.s4 1983009808
    %v215 = vunpack.c.0.s8 %v214
    %v216 = vlaneseq
    %v217 = vshrl.u32 %v216, 7
    %v218 = vsub.s32 %v215, %v217
    %v219 = vrot.slane %v208, %v218
    %v221 = vunpack.c.l.s4 1983009808
    %v222 = vunpack.c.0.s8 %v221
    %v223 = vlaneseq
    %v224 = vshrl.u32 %v223, 7
    %v225 = vsub.s32 %v222, %v224
    %v226 = vrot.slane %v212, %v225
    %v227 = vcombine.high %v219, %v219
    %v228 = vcombine.high %v226, %v226
    %v230 = vunpack.c.l.s4 1983009808
    %v231 = vunpack.c.0.s8 %v230
    %v232 = vlaneseq
    %v233 = vshrl.u32 %v232, 7
    %v234 = vsub.s32 %v231, %v233
    %v235 = vrot.slane %v209, %v234
    %v236 = vcombine.high %v235, %v235
    %v243 = vpack.c.bf16 %v219, %v219
    %v244 = vpack.c.bf16 %v227, %v227
    %v245 = vpack.c.bf16 %v226, %v226
    %v246 = vpack.c.bf16 %v228, %v228
    %v247 = vpack.c.bf16 %v235, %v235
    %v248 = vpack.c.bf16 %v236, %v236
    %v249 = vld [vmem:[#allocation2] sm:$0xff]
    %v250 = vld [vmem:[#allocation2 + $0x8] sm:$0xff]
    %v251 = vld [vmem:[#allocation2 + $0x10] sm:$0xff]
    %v252 = vld [vmem:[#allocation2 + $0x18] sm:$0xff]
    %v253 = vld [vmem:[#allocation2 + $0x20] sm:$0xff]
    %v254 = vld [vmem:[#allocation2 + $0x28] sm:$0xff]
    %v255 = vld [vmem:[#allocation2 + $0x30] sm:$0xff]
    %v256 = vld [vmem:[#allocation2 + $0x38] sm:$0xff]
    %v257 = vld [vmem:[#allocation2 + $0x40] sm:$0xff]
    %v258 = vld [vmem:[#allocation2 + $0x48] sm:$0xff]
    %v259 = vld [vmem:[#allocation2 + $0x50] sm:$0xff]
    %v260 = vld [vmem:[#allocation2 + $0x58] sm:$0xff]
    %v261 = vld [vmem:[#allocation2 + $0x60] sm:$0xff]
    %v262 = vld [vmem:[#allocation2 + $0x68] sm:$0xff]
    %v263 = vld [vmem:[#allocation2 + $0x70] sm:$0xff]
    %v264 = vld [vmem:[#allocation2 + $0x78] sm:$0xff]
    %v265 = vld [vmem:[#allocation2 + $0x80] sm:$0xff]
    %v266 = vld [vmem:[#allocation2 + $0x88] sm:$0xff]
    %v267 = vld [vmem:[#allocation2 + $0x90] sm:$0xff]
    %v268 = vld [vmem:[#allocation2 + $0x98] sm:$0xff]
    %v269 = vld [vmem:[#allocation2 + $0xa0] sm:$0xff]
    %v270 = vld [vmem:[#allocation2 + $0xa8] sm:$0xff]
    %v271 = vld [vmem:[#allocation2 + $0xb0] sm:$0xff]
    %v272 = vld [vmem:[#allocation2 + $0xb8] sm:$0xff]
    %v273 = vld [vmem:[#allocation2 + $0xc0] sm:$0xff]
    %v274 = vld [vmem:[#allocation2 + $0xc8] sm:$0xff]
    %v275 = vld [vmem:[#allocation2 + $0xd0] sm:$0xff]
    %v276 = vld [vmem:[#allocation2 + $0xd8] sm:$0xff]
    %v277 = vld [vmem:[#allocation2 + $0xe0] sm:$0xff]
    %v278 = vld [vmem:[#allocation2 + $0xe8] sm:$0xff]
    %v279 = vld [vmem:[#allocation2 + $0xf0] sm:$0xff]
    %v280 = vld [vmem:[#allocation2 + $0xf8] sm:$0xff]
    %v281 = vld [vmem:[#allocation2 + $0x100] sm:$0xff]
    %v282 = vld [vmem:[#allocation2 + $0x108] sm:$0xff]
    %v283 = vld [vmem:[#allocation2 + $0x110] sm:$0xff]
    %v284 = vld [vmem:[#allocation2 + $0x118] sm:$0xff]
    %v285 = vld [vmem:[#allocation2 + $0x120] sm:$0xff]
    %v286 = vld [vmem:[#allocation2 + $0x128] sm:$0xff]
    %v287 = vld [vmem:[#allocation2 + $0x130] sm:$0xff]
    %v288 = vld [vmem:[#allocation2 + $0x138] sm:$0xff]
    %v289 = vld [vmem:[#allocation2 + $0x140] sm:$0xff]
    %v290 = vld [vmem:[#allocation2 + $0x148] sm:$0xff]
    %v291 = vld [vmem:[#allocation2 + $0x150] sm:$0xff]
    %v292 = vld [vmem:[#allocation2 + $0x158] sm:$0xff]
    %v293 = vld [vmem:[#allocation2 + $0x160] sm:$0xff]
    %v294 = vld [vmem:[#allocation2 + $0x168] sm:$0xff]
    %v295 = vld [vmem:[#allocation2 + $0x170] sm:$0xff]
    %v296 = vld [vmem:[#allocation2 + $0x178] sm:$0xff]
    %v297 = vld [vmem:[#allocation2 + $0x180] sm:$0xff]
    %v298 = vld [vmem:[#allocation2 + $0x188] sm:$0xff]
    %v299 = vld [vmem:[#allocation2 + $0x190] sm:$0xff]
    %v300 = vld [vmem:[#allocation2 + $0x198] sm:$0xff]
    %v301 = vld [vmem:[#allocation2 + $0x1a0] sm:$0xff]
    %v302 = vld [vmem:[#allocation2 + $0x1a8] sm:$0xff]
    %v303 = vld [vmem:[#allocation2 + $0x1b0] sm:$0xff]
    %v304 = vld [vmem:[#allocation2 + $0x1b8] sm:$0xff]
    %v305 = vld [vmem:[#allocation2 + $0x1c0] sm:$0xff]
    %v306 = vld [vmem:[#allocation2 + $0x1c8] sm:$0xff]
    %v307 = vld [vmem:[#allocation2 + $0x1d0] sm:$0xff]
    %v308 = vld [vmem:[#allocation2 + $0x1d8] sm:$0xff]
    %v309 = vld [vmem:[#allocation2 + $0x1e0] sm:$0xff]
    %v310 = vld [vmem:[#allocation2 + $0x1e8] sm:$0xff]
    %v311 = vld [vmem:[#allocation2 + $0x1f0] sm:$0xff]
    %v312 = vld [vmem:[#allocation2 + $0x1f8] sm:$0xff]
    %v313 = vld [vmem:[#allocation2 + $0x200] sm:$0xff]
    %v314 = vld [vmem:[#allocation2 + $0x208] sm:$0xff]
    %v315 = vld [vmem:[#allocation2 + $0x210] sm:$0xff]
    %v316 = vld [vmem:[#allocation2 + $0x218] sm:$0xff]
    %v317 = vld [vmem:[#allocation2 + $0x220] sm:$0xff]
    %v318 = vld [vmem:[#allocation2 + $0x228] sm:$0xff]
    %v319 = vld [vmem:[#allocation2 + $0x230] sm:$0xff]
    %v320 = vld [vmem:[#allocation2 + $0x238] sm:$0xff]
    %v321 = vld [vmem:[#allocation2 + $0x240] sm:$0xff]
    %v322 = vld [vmem:[#allocation2 + $0x248] sm:$0xff]
    %v323 = vld [vmem:[#allocation2 + $0x250] sm:$0xff]
    %v324 = vld [vmem:[#allocation2 + $0x258] sm:$0xff]
    %v325 = vld [vmem:[#allocation2 + $0x260] sm:$0xff]
    %v326 = vld [vmem:[#allocation2 + $0x268] sm:$0xff]
    %v327 = vld [vmem:[#allocation2 + $0x270] sm:$0xff]
    %v328 = vld [vmem:[#allocation2 + $0x278] sm:$0xff]
    %v329 = vld [vmem:[#allocation2 + $0x280] sm:$0xff]
    %v330 = vld [vmem:[#allocation2 + $0x288] sm:$0xff]
    %v331 = vld [vmem:[#allocation2 + $0x290] sm:$0xff]
    %v332 = vld [vmem:[#allocation2 + $0x298] sm:$0xff]
    %v333 = vld [vmem:[#allocation2 + $0x2a0] sm:$0xff]
    %v334 = vld [vmem:[#allocation2 + $0x2a8] sm:$0xff]
    %v335 = vld [vmem:[#allocation2 + $0x2b0] sm:$0xff]
    %v336 = vld [vmem:[#allocation2 + $0x2b8] sm:$0xff]
    %v337 = vld [vmem:[#allocation2 + $0x2c0] sm:$0xff]
    %v338 = vld [vmem:[#allocation2 + $0x2c8] sm:$0xff]
    %v339 = vld [vmem:[#allocation2 + $0x2d0] sm:$0xff]
    %v340 = vld [vmem:[#allocation2 + $0x2d8] sm:$0xff]
    %v341 = vld [vmem:[#allocation2 + $0x2e0] sm:$0xff]
    %v342 = vld [vmem:[#allocation2 + $0x2e8] sm:$0xff]
    %v343 = vld [vmem:[#allocation2 + $0x2f0] sm:$0xff]
    %v344 = vld [vmem:[#allocation2 + $0x2f8] sm:$0xff]
    %v345 = vld [vmem:[#allocation2 + $0x300] sm:$0xff]
    %v346 = vld [vmem:[#allocation2 + $0x308] sm:$0xff]
    %v347 = vld [vmem:[#allocation2 + $0x310] sm:$0xff]
    %v348 = vld [vmem:[#allocation2 + $0x318] sm:$0xff]
    %v349 = vld [vmem:[#allocation2 + $0x320] sm:$0xff]
    %v350 = vld [vmem:[#allocation2 + $0x328] sm:$0xff]
    %v351 = vld [vmem:[#allocation2 + $0x330] sm:$0xff]
    %v352 = vld [vmem:[#allocation2 + $0x338] sm:$0xff]
    %v353 = vld [vmem:[#allocation2 + $0x340] sm:$0xff]
    %v354 = vld [vmem:[#allocation2 + $0x348] sm:$0xff]
    %v355 = vld [vmem:[#allocation2 + $0x350] sm:$0xff]
    %v356 = vld [vmem:[#allocation2 + $0x358] sm:$0xff]
    %v357 = vld [vmem:[#allocation2 + $0x360] sm:$0xff]
    %v358 = vld [vmem:[#allocation2 + $0x368] sm:$0xff]
    %v359 = vld [vmem:[#allocation2 + $0x370] sm:$0xff]
    %v360 = vld [vmem:[#allocation2 + $0x378] sm:$0xff]
    %v361 = vld [vmem:[#allocation2 + $0x380] sm:$0xff]
    %v362 = vld [vmem:[#allocation2 + $0x388] sm:$0xff]
    %v363 = vld [vmem:[#allocation2 + $0x390] sm:$0xff]
    %v364 = vld [vmem:[#allocation2 + $0x398] sm:$0xff]
    %v365 = vld [vmem:[#allocation2 + $0x3a0] sm:$0xff]
    %v366 = vld [vmem:[#allocation2 + $0x3a8] sm:$0xff]
    %v367 = vld [vmem:[#allocation2 + $0x3b0] sm:$0xff]
    %v368 = vld [vmem:[#allocation2 + $0x3b8] sm:$0xff]
    %v369 = vld [vmem:[#allocation2 + $0x3c0] sm:$0xff]
    %v370 = vld [vmem:[#allocation2 + $0x3c8] sm:$0xff]
    %v371 = vld [vmem:[#allocation2 + $0x3d0] sm:$0xff]
    %v372 = vld [vmem:[#allocation2 + $0x3d8] sm:$0xff]
    %v373 = vld [vmem:[#allocation2 + $0x3e0] sm:$0xff]
    %v374 = vld [vmem:[#allocation2 + $0x3e8] sm:$0xff]
    %v375 = vld [vmem:[#allocation2 + $0x3f0] sm:$0xff]
    %v376 = vld [vmem:[#allocation2 + $0x3f8] sm:$0xff]
    %v377 = vld [vmem:[#allocation2 + $0x400] sm:$0xff]
    %v378 = vld [vmem:[#allocation2 + $0x408] sm:$0xff]
    %v379 = vld [vmem:[#allocation2 + $0x410] sm:$0xff]
    %v380 = vld [vmem:[#allocation2 + $0x418] sm:$0xff]
    %v381 = vld [vmem:[#allocation2 + $0x420] sm:$0xff]
    %v382 = vld [vmem:[#allocation2 + $0x428] sm:$0xff]
    %v383 = vld [vmem:[#allocation2 + $0x430] sm:$0xff]
    %v384 = vld [vmem:[#allocation2 + $0x438] sm:$0xff]
    %v385 = vld [vmem:[#allocation2 + $0x440] sm:$0xff]
    %v386 = vld [vmem:[#allocation2 + $0x448] sm:$0xff]
    %v387 = vld [vmem:[#allocation2 + $0x450] sm:$0xff]
    %v388 = vld [vmem:[#allocation2 + $0x458] sm:$0xff]
    %v389 = vld [vmem:[#allocation2 + $0x460] sm:$0xff]
    %v390 = vld [vmem:[#allocation2 + $0x468] sm:$0xff]
    %v391 = vld [vmem:[#allocation2 + $0x470] sm:$0xff]
    %v392 = vld [vmem:[#allocation2 + $0x478] sm:$0xff]
    %v393 = vld [vmem:[#allocation2 + $0x480] sm:$0xff]
    %v394 = vld [vmem:[#allocation2 + $0x488] sm:$0xff]
    %v395 = vld [vmem:[#allocation2 + $0x490] sm:$0xff]
    %v396 = vld [vmem:[#allocation2 + $0x498] sm:$0xff]
    %v397 = vld [vmem:[#allocation2 + $0x4a0] sm:$0xff]
    %v398 = vld [vmem:[#allocation2 + $0x4a8] sm:$0xff]
    %v399 = vld [vmem:[#allocation2 + $0x4b0] sm:$0xff]
    %v400 = vld [vmem:[#allocation2 + $0x4b8] sm:$0xff]
    %v401 = vld [vmem:[#allocation2 + $0x4c0] sm:$0xff]
    %v402 = vld [vmem:[#allocation2 + $0x4c8] sm:$0xff]
    %v403 = vld [vmem:[#allocation2 + $0x4d0] sm:$0xff]
    %v404 = vld [vmem:[#allocation2 + $0x4d8] sm:$0xff]
    %v405 = vld [vmem:[#allocation2 + $0x4e0] sm:$0xff]
    %v406 = vld [vmem:[#allocation2 + $0x4e8] sm:$0xff]
    %v407 = vld [vmem:[#allocation2 + $0x4f0] sm:$0xff]
    %v408 = vld [vmem:[#allocation2 + $0x4f8] sm:$0xff]
    %v409 = vld [vmem:[#allocation2 + $0x500] sm:$0xff]
    %v410 = vld [vmem:[#allocation2 + $0x508] sm:$0xff]
    %v411 = vld [vmem:[#allocation2 + $0x510] sm:$0xff]
    %v412 = vld [vmem:[#allocation2 + $0x518] sm:$0xff]
    %v413 = vld [vmem:[#allocation2 + $0x520] sm:$0xff]
    %v414 = vld [vmem:[#allocation2 + $0x528] sm:$0xff]
    %v415 = vld [vmem:[#allocation2 + $0x530] sm:$0xff]
    %v416 = vld [vmem:[#allocation2 + $0x538] sm:$0xff]
    %v417 = vld [vmem:[#allocation2 + $0x540] sm:$0xff]
    %v418 = vld [vmem:[#allocation2 + $0x548] sm:$0xff]
    %v419 = vld [vmem:[#allocation2 + $0x550] sm:$0xff]
    %v420 = vld [vmem:[#allocation2 + $0x558] sm:$0xff]
    %v421 = vld [vmem:[#allocation2 + $0x560] sm:$0xff]
    %v422 = vld [vmem:[#allocation2 + $0x568] sm:$0xff]
    %v423 = vld [vmem:[#allocation2 + $0x570] sm:$0xff]
    %v424 = vld [vmem:[#allocation2 + $0x578] sm:$0xff]
    %v425 = vld [vmem:[#allocation2 + $0x580] sm:$0xff]
    %v426 = vld [vmem:[#allocation2 + $0x588] sm:$0xff]
    %v427 = vld [vmem:[#allocation2 + $0x590] sm:$0xff]
    %v428 = vld [vmem:[#allocation2 + $0x598] sm:$0xff]
    %v429 = vld [vmem:[#allocation2 + $0x5a0] sm:$0xff]
    %v430 = vld [vmem:[#allocation2 + $0x5a8] sm:$0xff]
    %v431 = vld [vmem:[#allocation2 + $0x5b0] sm:$0xff]
    %v432 = vld [vmem:[#allocation2 + $0x5b8] sm:$0xff]
    %v433 = vld [vmem:[#allocation2 + $0x5c0] sm:$0xff]
    %v434 = vld [vmem:[#allocation2 + $0x5c8] sm:$0xff]
    %v435 = vld [vmem:[#allocation2 + $0x5d0] sm:$0xff]
    %v436 = vld [vmem:[#allocation2 + $0x5d8] sm:$0xff]
    %v437 = vld [vmem:[#allocation2 + $0x5e0] sm:$0xff]
    %v438 = vld [vmem:[#allocation2 + $0x5e8] sm:$0xff]
    %v439 = vld [vmem:[#allocation2 + $0x5f0] sm:$0xff]
    %v440 = vld [vmem:[#allocation2 + $0x5f8] sm:$0xff]
    %v441 = vld [vmem:[#allocation2 + $0x600] sm:$0xff]
    %v442 = vld [vmem:[#allocation2 + $0x608] sm:$0xff]
    %v443 = vld [vmem:[#allocation2 + $0x610] sm:$0xff]
    %v444 = vld [vmem:[#allocation2 + $0x618] sm:$0xff]
    %v445 = vld [vmem:[#allocation2 + $0x620] sm:$0xff]
    %v446 = vld [vmem:[#allocation2 + $0x628] sm:$0xff]
    %v447 = vld [vmem:[#allocation2 + $0x630] sm:$0xff]
    %v448 = vld [vmem:[#allocation2 + $0x638] sm:$0xff]
    %v449 = vld [vmem:[#allocation2 + $0x640] sm:$0xff]
    %v450 = vld [vmem:[#allocation2 + $0x648] sm:$0xff]
    %v451 = vld [vmem:[#allocation2 + $0x650] sm:$0xff]
    %v452 = vld [vmem:[#allocation2 + $0x658] sm:$0xff]
    %v453 = vld [vmem:[#allocation2 + $0x660] sm:$0xff]
    %v454 = vld [vmem:[#allocation2 + $0x668] sm:$0xff]
    %v455 = vld [vmem:[#allocation2 + $0x670] sm:$0xff]
    %v456 = vld [vmem:[#allocation2 + $0x678] sm:$0xff]
    %v457 = vld [vmem:[#allocation2 + $0x680] sm:$0xff]
    %v458 = vld [vmem:[#allocation2 + $0x688] sm:$0xff]
    %v459 = vld [vmem:[#allocation2 + $0x690] sm:$0xff]
    %v460 = vld [vmem:[#allocation2 + $0x698] sm:$0xff]
    %v461 = vld [vmem:[#allocation2 + $0x6a0] sm:$0xff]
    %v462 = vld [vmem:[#allocation2 + $0x6a8] sm:$0xff]
    %v463 = vld [vmem:[#allocation2 + $0x6b0] sm:$0xff]
    %v464 = vld [vmem:[#allocation2 + $0x6b8] sm:$0xff]
    %v465 = vld [vmem:[#allocation2 + $0x6c0] sm:$0xff]
    %v466 = vld [vmem:[#allocation2 + $0x6c8] sm:$0xff]
    %v467 = vld [vmem:[#allocation2 + $0x6d0] sm:$0xff]
    %v468 = vld [vmem:[#allocation2 + $0x6d8] sm:$0xff]
    %v469 = vld [vmem:[#allocation2 + $0x6e0] sm:$0xff]
    %v470 = vld [vmem:[#allocation2 + $0x6e8] sm:$0xff]
    %v471 = vld [vmem:[#allocation2 + $0x6f0] sm:$0xff]
    %v472 = vld [vmem:[#allocation2 + $0x6f8] sm:$0xff]
    %v473 = vld [vmem:[#allocation2 + $0x700] sm:$0xff]
    %v474 = vld [vmem:[#allocation2 + $0x708] sm:$0xff]
    %v475 = vld [vmem:[#allocation2 + $0x710] sm:$0xff]
    %v476 = vld [vmem:[#allocation2 + $0x718] sm:$0xff]
    %v477 = vld [vmem:[#allocation2 + $0x720] sm:$0xff]
    %v478 = vld [vmem:[#allocation2 + $0x728] sm:$0xff]
    %v479 = vld [vmem:[#allocation2 + $0x730] sm:$0xff]
    %v480 = vld [vmem:[#allocation2 + $0x738] sm:$0xff]
    %v481 = vld [vmem:[#allocation2 + $0x740] sm:$0xff]
    %v482 = vld [vmem:[#allocation2 + $0x748] sm:$0xff]
    %v483 = vld [vmem:[#allocation2 + $0x750] sm:$0xff]
    %v484 = vld [vmem:[#allocation2 + $0x758] sm:$0xff]
    %v485 = vld [vmem:[#allocation2 + $0x760] sm:$0xff]
    %v486 = vld [vmem:[#allocation2 + $0x768] sm:$0xff]
    %v487 = vld [vmem:[#allocation2 + $0x770] sm:$0xff]
    %v488 = vld [vmem:[#allocation2 + $0x778] sm:$0xff]
    %v489 = vld [vmem:[#allocation2 + $0x780] sm:$0xff]
    %v490 = vld [vmem:[#allocation2 + $0x788] sm:$0xff]
    %v491 = vld [vmem:[#allocation2 + $0x790] sm:$0xff]
    %v492 = vld [vmem:[#allocation2 + $0x798] sm:$0xff]
    %v493 = vld [vmem:[#allocation2 + $0x7a0] sm:$0xff]
    %v494 = vld [vmem:[#allocation2 + $0x7a8] sm:$0xff]
    %v495 = vld [vmem:[#allocation2 + $0x7b0] sm:$0xff]
    %v496 = vld [vmem:[#allocation2 + $0x7b8] sm:$0xff]
    %v497 = vld [vmem:[#allocation2 + $0x7c0] sm:$0xff]
    %v498 = vld [vmem:[#allocation2 + $0x7c8] sm:$0xff]
    %v499 = vld [vmem:[#allocation2 + $0x7d0] sm:$0xff]
    %v500 = vld [vmem:[#allocation2 + $0x7d8] sm:$0xff]
    %v501 = vld [vmem:[#allocation2 + $0x7e0] sm:$0xff]
    %v502 = vld [vmem:[#allocation2 + $0x7e8] sm:$0xff]
    %v503 = vld [vmem:[#allocation2 + $0x7f0] sm:$0xff]
    %v504 = vld [vmem:[#allocation2 + $0x7f8] sm:$0xff]
    %v505 = vld [vmem:[#allocation2 + $0x800] sm:$0xff]
    %v506 = vld [vmem:[#allocation2 + $0x808] sm:$0xff]
    %v507 = vld [vmem:[#allocation2 + $0x810] sm:$0xff]
    %v508 = vld [vmem:[#allocation2 + $0x818] sm:$0xff]
    %v509 = vld [vmem:[#allocation2 + $0x820] sm:$0xff]
    %v510 = vld [vmem:[#allocation2 + $0x828] sm:$0xff]
    %v511 = vld [vmem:[#allocation2 + $0x830] sm:$0xff]
    %v512 = vld [vmem:[#allocation2 + $0x838] sm:$0xff]
    %v513 = vld [vmem:[#allocation2 + $0x840] sm:$0xff]
    %v514 = vld [vmem:[#allocation2 + $0x848] sm:$0xff]
    %v515 = vld [vmem:[#allocation2 + $0x850] sm:$0xff]
    %v516 = vld [vmem:[#allocation2 + $0x858] sm:$0xff]
    %v517 = vld [vmem:[#allocation2 + $0x860] sm:$0xff]
    %v518 = vld [vmem:[#allocation2 + $0x868] sm:$0xff]
    %v519 = vld [vmem:[#allocation2 + $0x870] sm:$0xff]
    %v520 = vld [vmem:[#allocation2 + $0x878] sm:$0xff]
    %v521 = vld [vmem:[#allocation2 + $0x880] sm:$0xff]
    %v522 = vld [vmem:[#allocation2 + $0x888] sm:$0xff]
    %v523 = vld [vmem:[#allocation2 + $0x890] sm:$0xff]
    %v524 = vld [vmem:[#allocation2 + $0x898] sm:$0xff]
    %v525 = vld [vmem:[#allocation2 + $0x8a0] sm:$0xff]
    %v526 = vld [vmem:[#allocation2 + $0x8a8] sm:$0xff]
    %v527 = vld [vmem:[#allocation2 + $0x8b0] sm:$0xff]
    %v528 = vld [vmem:[#allocation2 + $0x8b8] sm:$0xff]
    %v529 = vld [vmem:[#allocation2 + $0x8c0] sm:$0xff]
    %v530 = vld [vmem:[#allocation2 + $0x8c8] sm:$0xff]
    %v531 = vld [vmem:[#allocation2 + $0x8d0] sm:$0xff]
    %v532 = vld [vmem:[#allocation2 + $0x8d8] sm:$0xff]
    %v533 = vld [vmem:[#allocation2 + $0x8e0] sm:$0xff]
    %v534 = vld [vmem:[#allocation2 + $0x8e8] sm:$0xff]
    %v535 = vld [vmem:[#allocation2 + $0x8f0] sm:$0xff]
    %v536 = vld [vmem:[#allocation2 + $0x8f8] sm:$0xff]
    %v537 = vld [vmem:[#allocation5] sm:$0x3f]
    %v539 = vlaneseq
    %v540 = vshrl.u32 %v539, 7
    %v541 = vsub.s32 0, %v540
    %v542 = vrot.slane %v537, %v541
    %v543 = vlaneseq
    %v544 = vshrl.u32 %v543, 7
    %v545 = vsub.s32 1, %v544
    %v546 = vrot.slane %v537, %v545
    %v547 = vlaneseq
    %v548 = vshrl.u32 %v547, 7
    %v549 = vsub.s32 2, %v548
    %v550 = vrot.slane %v537, %v549
    %v551 = vlaneseq
    %v552 = vshrl.u32 %v551, 7
    %v553 = vsub.s32 3, %v552
    %v554 = vrot.slane %v537, %v553
    %v555 = vlaneseq
    %v556 = vshrl.u32 %v555, 7
    %v557 = vsub.s32 4, %v556
    %v558 = vrot.slane %v537, %v557
    %v559 = vlaneseq
    %v560 = vshrl.u32 %v559, 7
    %v561 = vsub.s32 5, %v560
    %v562 = vrot.slane %v537, %v561
    %v857 = vunpack.c.l.b16 %v249
    %v858 = vunpack.c.h.b16 %v249
    %v859 = vunpack.c.l.b16 %v250
    %v860 = vunpack.c.h.b16 %v250
    %v861 = vunpack.c.l.b16 %v251
    %v862 = vunpack.c.h.b16 %v251
    %v863 = vunpack.c.l.b16 %v252
    %v864 = vunpack.c.h.b16 %v252
    %v865 = vunpack.c.l.b16 %v253
    %v866 = vunpack.c.h.b16 %v253
    %v867 = vunpack.c.l.b16 %v254
    %v868 = vunpack.c.h.b16 %v254
    %v869 = vunpack.c.l.b16 %v255
    %v870 = vunpack.c.h.b16 %v255
    %v871 = vunpack.c.l.b16 %v256
    %v872 = vunpack.c.h.b16 %v256
    %v873 = vunpack.c.l.b16 %v257
    %v874 = vunpack.c.h.b16 %v257
    %v875 = vunpack.c.l.b16 %v258
    %v876 = vunpack.c.h.b16 %v258
    %v877 = vunpack.c.l.b16 %v259
    %v878 = vunpack.c.h.b16 %v259
    %v879 = vunpack.c.l.b16 %v260
    %v880 = vunpack.c.h.b16 %v260
    %v881 = vunpack.c.l.b16 %v261
    %v882 = vunpack.c.h.b16 %v261
    %v883 = vunpack.c.l.b16 %v262
    %v884 = vunpack.c.h.b16 %v262
    %v885 = vunpack.c.l.b16 %v263
    %v886 = vunpack.c.h.b16 %v263
    %v887 = vunpack.c.l.b16 %v264
    %v888 = vunpack.c.h.b16 %v264
    %v889 = vunpack.c.l.b16 %v265
    %v890 = vunpack.c.h.b16 %v265
    %v891 = vunpack.c.l.b16 %v266
    %v892 = vunpack.c.h.b16 %v266
    %v893 = vunpack.c.l.b16 %v267
    %v894 = vunpack.c.h.b16 %v267
    %v895 = vunpack.c.l.b16 %v268
    %v896 = vunpack.c.h.b16 %v268
    %v897 = vunpack.c.l.b16 %v269
    %v898 = vunpack.c.h.b16 %v269
    %v899 = vunpack.c.l.b16 %v270
    %v900 = vunpack.c.h.b16 %v270
    %v901 = vunpack.c.l.b16 %v271
    %v902 = vunpack.c.h.b16 %v271
    %v903 = vunpack.c.l.b16 %v272
    %v904 = vunpack.c.h.b16 %v272
    %v905 = vunpack.c.l.b16 %v273
    %v906 = vunpack.c.h.b16 %v273
    %v907 = vunpack.c.l.b16 %v274
    %v908 = vunpack.c.h.b16 %v274
    %v909 = vunpack.c.l.b16 %v275
    %v910 = vunpack.c.h.b16 %v275
    %v911 = vunpack.c.l.b16 %v276
    %v912 = vunpack.c.h.b16 %v276
    %v913 = vunpack.c.l.b16 %v277
    %v914 = vunpack.c.h.b16 %v277
    %v915 = vunpack.c.l.b16 %v278
    %v916 = vunpack.c.h.b16 %v278
    %v917 = vunpack.c.l.b16 %v279
    %v918 = vunpack.c.h.b16 %v279
    %v919 = vunpack.c.l.b16 %v280
    %v920 = vunpack.c.h.b16 %v280
    %v921 = vunpack.c.l.b16 %v281
    %v922 = vunpack.c.h.b16 %v281
    %v923 = vunpack.c.l.b16 %v282
    %v924 = vunpack.c.h.b16 %v282
    %v925 = vunpack.c.l.b16 %v283
    %v926 = vunpack.c.h.b16 %v283
    %v927 = vunpack.c.l.b16 %v284
    %v928 = vunpack.c.h.b16 %v284
    %v929 = vunpack.c.l.b16 %v285
    %v930 = vunpack.c.h.b16 %v285
    %v931 = vunpack.c.l.b16 %v286
    %v932 = vunpack.c.h.b16 %v286
    %v933 = vunpack.c.l.b16 %v287
    %v934 = vunpack.c.h.b16 %v287
    %v935 = vunpack.c.l.b16 %v288
    %v936 = vunpack.c.h.b16 %v288
    %v937 = vunpack.c.l.b16 %v289
    %v938 = vunpack.c.h.b16 %v289
    %v939 = vunpack.c.l.b16 %v290
    %v940 = vunpack.c.h.b16 %v290
    %v941 = vunpack.c.l.b16 %v291
    %v942 = vunpack.c.h.b16 %v291
    %v943 = vunpack.c.l.b16 %v292
    %v944 = vunpack.c.h.b16 %v292
    %v945 = vunpack.c.l.b16 %v293
    %v946 = vunpack.c.h.b16 %v293
    %v947 = vunpack.c.l.b16 %v294
    %v948 = vunpack.c.h.b16 %v294
    %v949 = vunpack.c.l.b16 %v295
    %v950 = vunpack.c.h.b16 %v295
    %v951 = vunpack.c.l.b16 %v296
    %v952 = vunpack.c.h.b16 %v296
    %v953 = vunpack.c.l.b16 %v297
    %v954 = vunpack.c.h.b16 %v297
    %v955 = vunpack.c.l.b16 %v298
    %v956 = vunpack.c.h.b16 %v298
    %v957 = vunpack.c.l.b16 %v299
    %v958 = vunpack.c.h.b16 %v299
    %v959 = vunpack.c.l.b16 %v300
    %v960 = vunpack.c.h.b16 %v300
    %v961 = vunpack.c.l.b16 %v301
    %v962 = vunpack.c.h.b16 %v301
    %v963 = vunpack.c.l.b16 %v302
    %v964 = vunpack.c.h.b16 %v302
    %v965 = vunpack.c.l.b16 %v303
    %v966 = vunpack.c.h.b16 %v303
    %v967 = vunpack.c.l.b16 %v304
    %v968 = vunpack.c.h.b16 %v304
    %v969 = vunpack.c.l.b16 %v305
    %v970 = vunpack.c.h.b16 %v305
    %v971 = vunpack.c.l.b16 %v306
    %v972 = vunpack.c.h.b16 %v306
    %v973 = vunpack.c.l.b16 %v307
    %v974 = vunpack.c.h.b16 %v307
    %v975 = vunpack.c.l.b16 %v308
    %v976 = vunpack.c.h.b16 %v308
    %v977 = vunpack.c.l.b16 %v309
    %v978 = vunpack.c.h.b16 %v309
    %v979 = vunpack.c.l.b16 %v310
    %v980 = vunpack.c.h.b16 %v310
    %v981 = vunpack.c.l.b16 %v311
    %v982 = vunpack.c.h.b16 %v311
    %v983 = vunpack.c.l.b16 %v312
    %v984 = vunpack.c.h.b16 %v312
    %v985 = vunpack.c.l.b16 %v313
    %v986 = vunpack.c.h.b16 %v313
    %v987 = vunpack.c.l.b16 %v314
    %v988 = vunpack.c.h.b16 %v314
    %v989 = vunpack.c.l.b16 %v315
    %v990 = vunpack.c.h.b16 %v315
    %v991 = vunpack.c.l.b16 %v316
    %v992 = vunpack.c.h.b16 %v316
    %v993 = vunpack.c.l.b16 %v317
    %v994 = vunpack.c.h.b16 %v317
    %v995 = vunpack.c.l.b16 %v318
    %v996 = vunpack.c.h.b16 %v318
    %v997 = vunpack.c.l.b16 %v319
    %v998 = vunpack.c.h.b16 %v319
    %v999 = vunpack.c.l.b16 %v320
    %v1000 = vunpack.c.h.b16 %v320
    %v1001 = vunpack.c.l.b16 %v321
    %v1002 = vunpack.c.h.b16 %v321
    %v1003 = vunpack.c.l.b16 %v322
    %v1004 = vunpack.c.h.b16 %v322
    %v1005 = vunpack.c.l.b16 %v323
    %v1006 = vunpack.c.h.b16 %v323
    %v1007 = vunpack.c.l.b16 %v324
    %v1008 = vunpack.c.h.b16 %v324
    %v1009 = vunpack.c.l.b16 %v325
    %v1010 = vunpack.c.h.b16 %v325
    %v1011 = vunpack.c.l.b16 %v326
    %v1012 = vunpack.c.h.b16 %v326
    %v1013 = vunpack.c.l.b16 %v327
    %v1014 = vunpack.c.h.b16 %v327
    %v1015 = vunpack.c.l.b16 %v328
    %v1016 = vunpack.c.h.b16 %v328
    %v1017 = vunpack.c.l.b16 %v329
    %v1018 = vunpack.c.h.b16 %v329
    %v1019 = vunpack.c.l.b16 %v330
    %v1020 = vunpack.c.h.b16 %v330
    %v1021 = vunpack.c.l.b16 %v331
    %v1022 = vunpack.c.h.b16 %v331
    %v1023 = vunpack.c.l.b16 %v332
    %v1024 = vunpack.c.h.b16 %v332
    %v1025 = vunpack.c.l.b16 %v333
    %v1026 = vunpack.c.h.b16 %v333
    %v1027 = vunpack.c.l.b16 %v334
    %v1028 = vunpack.c.h.b16 %v334
    %v1029 = vunpack.c.l.b16 %v335
    %v1030 = vunpack.c.h.b16 %v335
    %v1031 = vunpack.c.l.b16 %v336
    %v1032 = vunpack.c.h.b16 %v336
    %v1033 = vunpack.c.l.b16 %v337
    %v1034 = vunpack.c.h.b16 %v337
    %v1035 = vunpack.c.l.b16 %v338
    %v1036 = vunpack.c.h.b16 %v338
    %v1037 = vunpack.c.l.b16 %v339
    %v1038 = vunpack.c.h.b16 %v339
    %v1039 = vunpack.c.l.b16 %v340
    %v1040 = vunpack.c.h.b16 %v340
    %v1041 = vunpack.c.l.b16 %v341
    %v1042 = vunpack.c.h.b16 %v341
    %v1043 = vunpack.c.l.b16 %v342
    %v1044 = vunpack.c.h.b16 %v342
    %v1045 = vunpack.c.l.b16 %v343
    %v1046 = vunpack.c.h.b16 %v343
    %v1047 = vunpack.c.l.b16 %v344
    %v1048 = vunpack.c.h.b16 %v344
    %v1049 = vunpack.c.l.b16 %v345
    %v1050 = vunpack.c.h.b16 %v345
    %v1051 = vunpack.c.l.b16 %v346
    %v1052 = vunpack.c.h.b16 %v346
    %v1053 = vunpack.c.l.b16 %v347
    %v1054 = vunpack.c.h.b16 %v347
    %v1055 = vunpack.c.l.b16 %v348
    %v1056 = vunpack.c.h.b16 %v348
    %v1057 = vunpack.c.l.b16 %v349
    %v1058 = vunpack.c.h.b16 %v349
    %v1059 = vunpack.c.l.b16 %v350
    %v1060 = vunpack.c.h.b16 %v350
    %v1061 = vunpack.c.l.b16 %v351
    %v1062 = vunpack.c.h.b16 %v351
    %v1063 = vunpack.c.l.b16 %v352
    %v1064 = vunpack.c.h.b16 %v352
    %v1065 = vunpack.c.l.b16 %v353
    %v1066 = vunpack.c.h.b16 %v353
    %v1067 = vunpack.c.l.b16 %v354
    %v1068 = vunpack.c.h.b16 %v354
    %v1069 = vunpack.c.l.b16 %v355
    %v1070 = vunpack.c.h.b16 %v355
    %v1071 = vunpack.c.l.b16 %v356
    %v1072 = vunpack.c.h.b16 %v356
    %v1073 = vunpack.c.l.b16 %v357
    %v1074 = vunpack.c.h.b16 %v357
    %v1075 = vunpack.c.l.b16 %v358
    %v1076 = vunpack.c.h.b16 %v358
    %v1077 = vunpack.c.l.b16 %v359
    %v1078 = vunpack.c.h.b16 %v359
    %v1079 = vunpack.c.l.b16 %v360
    %v1080 = vunpack.c.h.b16 %v360
    %v1081 = vunpack.c.l.b16 %v361
    %v1082 = vunpack.c.h.b16 %v361
    %v1083 = vunpack.c.l.b16 %v362
    %v1084 = vunpack.c.h.b16 %v362
    %v1085 = vunpack.c.l.b16 %v363
    %v1086 = vunpack.c.h.b16 %v363
    %v1087 = vunpack.c.l.b16 %v364
    %v1088 = vunpack.c.h.b16 %v364
    %v1089 = vunpack.c.l.b16 %v365
    %v1090 = vunpack.c.h.b16 %v365
    %v1091 = vunpack.c.l.b16 %v366
    %v1092 = vunpack.c.h.b16 %v366
    %v1093 = vunpack.c.l.b16 %v367
    %v1094 = vunpack.c.h.b16 %v367
    %v1095 = vunpack.c.l.b16 %v368
    %v1096 = vunpack.c.h.b16 %v368
    %v1097 = vunpack.c.l.b16 %v369
    %v1098 = vunpack.c.h.b16 %v369
    %v1099 = vunpack.c.l.b16 %v370
    %v1100 = vunpack.c.h.b16 %v370
    %v1101 = vunpack.c.l.b16 %v371
    %v1102 = vunpack.c.h.b16 %v371
    %v1103 = vunpack.c.l.b16 %v372
    %v1104 = vunpack.c.h.b16 %v372
    %v1105 = vunpack.c.l.b16 %v373
    %v1106 = vunpack.c.h.b16 %v373
    %v1107 = vunpack.c.l.b16 %v374
    %v1108 = vunpack.c.h.b16 %v374
    %v1109 = vunpack.c.l.b16 %v375
    %v1110 = vunpack.c.h.b16 %v375
    %v1111 = vunpack.c.l.b16 %v376
    %v1112 = vunpack.c.h.b16 %v376
    %v1113 = vunpack.c.l.b16 %v377
    %v1114 = vunpack.c.h.b16 %v377
    %v1115 = vunpack.c.l.b16 %v378
    %v1116 = vunpack.c.h.b16 %v378
    %v1117 = vunpack.c.l.b16 %v379
    %v1118 = vunpack.c.h.b16 %v379
    %v1119 = vunpack.c.l.b16 %v380
    %v1120 = vunpack.c.h.b16 %v380
    %v1121 = vunpack.c.l.b16 %v381
    %v1122 = vunpack.c.h.b16 %v381
    %v1123 = vunpack.c.l.b16 %v382
    %v1124 = vunpack.c.h.b16 %v382
    %v1125 = vunpack.c.l.b16 %v383
    %v1126 = vunpack.c.h.b16 %v383
    %v1127 = vunpack.c.l.b16 %v384
    %v1128 = vunpack.c.h.b16 %v384
    %v1129 = vunpack.c.l.b16 %v385
    %v1130 = vunpack.c.h.b16 %v385
    %v1131 = vunpack.c.l.b16 %v386
    %v1132 = vunpack.c.h.b16 %v386
    %v1133 = vunpack.c.l.b16 %v387
    %v1134 = vunpack.c.h.b16 %v387
    %v1135 = vunpack.c.l.b16 %v388
    %v1136 = vunpack.c.h.b16 %v388
    %v1137 = vunpack.c.l.b16 %v389
    %v1138 = vunpack.c.h.b16 %v389
    %v1139 = vunpack.c.l.b16 %v390
    %v1140 = vunpack.c.h.b16 %v390
    %v1141 = vunpack.c.l.b16 %v391
    %v1142 = vunpack.c.h.b16 %v391
    %v1143 = vunpack.c.l.b16 %v392
    %v1144 = vunpack.c.h.b16 %v392
    %v1145 = vunpack.c.l.b16 %v393
    %v1146 = vunpack.c.h.b16 %v393
    %v1147 = vunpack.c.l.b16 %v394
    %v1148 = vunpack.c.h.b16 %v394
    %v1149 = vunpack.c.l.b16 %v395
    %v1150 = vunpack.c.h.b16 %v395
    %v1151 = vunpack.c.l.b16 %v396
    %v1152 = vunpack.c.h.b16 %v396
    %v1153 = vunpack.c.l.b16 %v397
    %v1154 = vunpack.c.h.b16 %v397
    %v1155 = vunpack.c.l.b16 %v398
    %v1156 = vunpack.c.h.b16 %v398
    %v1157 = vunpack.c.l.b16 %v399
    %v1158 = vunpack.c.h.b16 %v399
    %v1159 = vunpack.c.l.b16 %v400
    %v1160 = vunpack.c.h.b16 %v400
    %v1161 = vunpack.c.l.b16 %v401
    %v1162 = vunpack.c.h.b16 %v401
    %v1163 = vunpack.c.l.b16 %v402
    %v1164 = vunpack.c.h.b16 %v402
    %v1165 = vunpack.c.l.b16 %v403
    %v1166 = vunpack.c.h.b16 %v403
    %v1167 = vunpack.c.l.b16 %v404
    %v1168 = vunpack.c.h.b16 %v404
    %v1169 = vunpack.c.l.b16 %v405
    %v1170 = vunpack.c.h.b16 %v405
    %v1171 = vunpack.c.l.b16 %v406
    %v1172 = vunpack.c.h.b16 %v406
    %v1173 = vunpack.c.l.b16 %v407
    %v1174 = vunpack.c.h.b16 %v407
    %v1175 = vunpack.c.l.b16 %v408
    %v1176 = vunpack.c.h.b16 %v408
    %v1177 = vunpack.c.l.b16 %v409
    %v1178 = vunpack.c.h.b16 %v409
    %v1179 = vunpack.c.l.b16 %v410
    %v1180 = vunpack.c.h.b16 %v410
    %v1181 = vunpack.c.l.b16 %v411
    %v1182 = vunpack.c.h.b16 %v411
    %v1183 = vunpack.c.l.b16 %v412
    %v1184 = vunpack.c.h.b16 %v412
    %v1185 = vunpack.c.l.b16 %v413
    %v1186 = vunpack.c.h.b16 %v413
    %v1187 = vunpack.c.l.b16 %v414
    %v1188 = vunpack.c.h.b16 %v414
    %v1189 = vunpack.c.l.b16 %v415
    %v1190 = vunpack.c.h.b16 %v415
    %v1191 = vunpack.c.l.b16 %v416
    %v1192 = vunpack.c.h.b16 %v416
    %v1193 = vunpack.c.l.b16 %v417
    %v1194 = vunpack.c.h.b16 %v417
    %v1195 = vunpack.c.l.b16 %v418
    %v1196 = vunpack.c.h.b16 %v418
    %v1197 = vunpack.c.l.b16 %v419
    %v1198 = vunpack.c.h.b16 %v419
    %v1199 = vunpack.c.l.b16 %v420
    %v1200 = vunpack.c.h.b16 %v420
    %v1201 = vunpack.c.l.b16 %v421
    %v1202 = vunpack.c.h.b16 %v421
    %v1203 = vunpack.c.l.b16 %v422
    %v1204 = vunpack.c.h.b16 %v422
    %v1205 = vunpack.c.l.b16 %v423
    %v1206 = vunpack.c.h.b16 %v423
    %v1207 = vunpack.c.l.b16 %v424
    %v1208 = vunpack.c.h.b16 %v424
    %v1209 = vunpack.c.l.b16 %v425
    %v1210 = vunpack.c.h.b16 %v425
    %v1211 = vunpack.c.l.b16 %v426
    %v1212 = vunpack.c.h.b16 %v426
    %v1213 = vunpack.c.l.b16 %v427
    %v1214 = vunpack.c.h.b16 %v427
    %v1215 = vunpack.c.l.b16 %v428
    %v1216 = vunpack.c.h.b16 %v428
    %v1217 = vunpack.c.l.b16 %v429
    %v1218 = vunpack.c.h.b16 %v429
    %v1219 = vunpack.c.l.b16 %v430
    %v1220 = vunpack.c.h.b16 %v430
    %v1221 = vunpack.c.l.b16 %v431
    %v1222 = vunpack.c.h.b16 %v431
    %v1223 = vunpack.c.l.b16 %v432
    %v1224 = vunpack.c.h.b16 %v432
    %v1225 = vunpack.c.l.b16 %v433
    %v1226 = vunpack.c.h.b16 %v433
    %v1227 = vunpack.c.l.b16 %v434
    %v1228 = vunpack.c.h.b16 %v434
    %v1229 = vunpack.c.l.b16 %v435
    %v1230 = vunpack.c.h.b16 %v435
    %v1231 = vunpack.c.l.b16 %v436
    %v1232 = vunpack.c.h.b16 %v436
    %v1233 = vunpack.c.l.b16 %v437
    %v1234 = vunpack.c.h.b16 %v437
    %v1235 = vunpack.c.l.b16 %v438
    %v1236 = vunpack.c.h.b16 %v438
    %v1237 = vunpack.c.l.b16 %v439
    %v1238 = vunpack.c.h.b16 %v439
    %v1239 = vunpack.c.l.b16 %v440
    %v1240 = vunpack.c.h.b16 %v440
    %v1241 = vunpack.c.l.b16 %v441
    %v1242 = vunpack.c.h.b16 %v441
    %v1243 = vunpack.c.l.b16 %v442
    %v1244 = vunpack.c.h.b16 %v442
    %v1245 = vunpack.c.l.b16 %v443
    %v1246 = vunpack.c.h.b16 %v443
    %v1247 = vunpack.c.l.b16 %v444
    %v1248 = vunpack.c.h.b16 %v444
    %v1249 = vunpack.c.l.b16 %v445
    %v1250 = vunpack.c.h.b16 %v445
    %v1251 = vunpack.c.l.b16 %v446
    %v1252 = vunpack.c.h.b16 %v446
    %v1253 = vunpack.c.l.b16 %v447
    %v1254 = vunpack.c.h.b16 %v447
    %v1255 = vunpack.c.l.b16 %v448
    %v1256 = vunpack.c.h.b16 %v448
    %v1257 = vunpack.c.l.b16 %v449
    %v1258 = vunpack.c.h.b16 %v449
    %v1259 = vunpack.c.l.b16 %v450
    %v1260 = vunpack.c.h.b16 %v450
    %v1261 = vunpack.c.l.b16 %v451
    %v1262 = vunpack.c.h.b16 %v451
    %v1263 = vunpack.c.l.b16 %v452
    %v1264 = vunpack.c.h.b16 %v452
    %v1265 = vunpack.c.l.b16 %v453
    %v1266 = vunpack.c.h.b16 %v453
    %v1267 = vunpack.c.l.b16 %v454
    %v1268 = vunpack.c.h.b16 %v454
    %v1269 = vunpack.c.l.b16 %v455
    %v1270 = vunpack.c.h.b16 %v455
    %v1271 = vunpack.c.l.b16 %v456
    %v1272 = vunpack.c.h.b16 %v456
    %v1273 = vunpack.c.l.b16 %v457
    %v1274 = vunpack.c.h.b16 %v457
    %v1275 = vunpack.c.l.b16 %v458
    %v1276 = vunpack.c.h.b16 %v458
    %v1277 = vunpack.c.l.b16 %v459
    %v1278 = vunpack.c.h.b16 %v459
    %v1279 = vunpack.c.l.b16 %v460
    %v1280 = vunpack.c.h.b16 %v460
    %v1281 = vunpack.c.l.b16 %v461
    %v1282 = vunpack.c.h.b16 %v461
    %v1283 = vunpack.c.l.b16 %v462
    %v1284 = vunpack.c.h.b16 %v462
    %v1285 = vunpack.c.l.b16 %v463
    %v1286 = vunpack.c.h.b16 %v463
    %v1287 = vunpack.c.l.b16 %v464
    %v1288 = vunpack.c.h.b16 %v464
    %v1289 = vunpack.c.l.b16 %v465
    %v1290 = vunpack.c.h.b16 %v465
    %v1291 = vunpack.c.l.b16 %v466
    %v1292 = vunpack.c.h.b16 %v466
    %v1293 = vunpack.c.l.b16 %v467
    %v1294 = vunpack.c.h.b16 %v467
    %v1295 = vunpack.c.l.b16 %v468
    %v1296 = vunpack.c.h.b16 %v468
    %v1297 = vunpack.c.l.b16 %v469
    %v1298 = vunpack.c.h.b16 %v469
    %v1299 = vunpack.c.l.b16 %v470
    %v1300 = vunpack.c.h.b16 %v470
    %v1301 = vunpack.c.l.b16 %v471
    %v1302 = vunpack.c.h.b16 %v471
    %v1303 = vunpack.c.l.b16 %v472
    %v1304 = vunpack.c.h.b16 %v472
    %v1305 = vunpack.c.l.b16 %v473
    %v1306 = vunpack.c.h.b16 %v473
    %v1307 = vunpack.c.l.b16 %v474
    %v1308 = vunpack.c.h.b16 %v474
    %v1309 = vunpack.c.l.b16 %v475
    %v1310 = vunpack.c.h.b16 %v475
    %v1311 = vunpack.c.l.b16 %v476
    %v1312 = vunpack.c.h.b16 %v476
    %v1313 = vunpack.c.l.b16 %v477
    %v1314 = vunpack.c.h.b16 %v477
    %v1315 = vunpack.c.l.b16 %v478
    %v1316 = vunpack.c.h.b16 %v478
    %v1317 = vunpack.c.l.b16 %v479
    %v1318 = vunpack.c.h.b16 %v479
    %v1319 = vunpack.c.l.b16 %v480
    %v1320 = vunpack.c.h.b16 %v480
    %v1321 = vunpack.c.l.b16 %v481
    %v1322 = vunpack.c.h.b16 %v481
    %v1323 = vunpack.c.l.b16 %v482
    %v1324 = vunpack.c.h.b16 %v482
    %v1325 = vunpack.c.l.b16 %v483
    %v1326 = vunpack.c.h.b16 %v483
    %v1327 = vunpack.c.l.b16 %v484
    %v1328 = vunpack.c.h.b16 %v484
    %v1329 = vunpack.c.l.b16 %v485
    %v1330 = vunpack.c.h.b16 %v485
    %v1331 = vunpack.c.l.b16 %v486
    %v1332 = vunpack.c.h.b16 %v486
    %v1333 = vunpack.c.l.b16 %v487
    %v1334 = vunpack.c.h.b16 %v487
    %v1335 = vunpack.c.l.b16 %v488
    %v1336 = vunpack.c.h.b16 %v488
    %v1337 = vunpack.c.l.b16 %v489
    %v1338 = vunpack.c.h.b16 %v489
    %v1339 = vunpack.c.l.b16 %v490
    %v1340 = vunpack.c.h.b16 %v490
    %v1341 = vunpack.c.l.b16 %v491
    %v1342 = vunpack.c.h.b16 %v491
    %v1343 = vunpack.c.l.b16 %v492
    %v1344 = vunpack.c.h.b16 %v492
    %v1345 = vunpack.c.l.b16 %v493
    %v1346 = vunpack.c.h.b16 %v493
    %v1347 = vunpack.c.l.b16 %v494
    %v1348 = vunpack.c.h.b16 %v494
    %v1349 = vunpack.c.l.b16 %v495
    %v1350 = vunpack.c.h.b16 %v495
    %v1351 = vunpack.c.l.b16 %v496
    %v1352 = vunpack.c.h.b16 %v496
    %v1353 = vunpack.c.l.b16 %v497
    %v1354 = vunpack.c.h.b16 %v497
    %v1355 = vunpack.c.l.b16 %v498
    %v1356 = vunpack.c.h.b16 %v498
    %v1357 = vunpack.c.l.b16 %v499
    %v1358 = vunpack.c.h.b16 %v499
    %v1359 = vunpack.c.l.b16 %v500
    %v1360 = vunpack.c.h.b16 %v500
    %v1361 = vunpack.c.l.b16 %v501
    %v1362 = vunpack.c.h.b16 %v501
    %v1363 = vunpack.c.l.b16 %v502
    %v1364 = vunpack.c.h.b16 %v502
    %v1365 = vunpack.c.l.b16 %v503
    %v1366 = vunpack.c.h.b16 %v503
    %v1367 = vunpack.c.l.b16 %v504
    %v1368 = vunpack.c.h.b16 %v504
    %v1369 = vunpack.c.l.b16 %v505
    %v1370 = vunpack.c.h.b16 %v505
    %v1371 = vunpack.c.l.b16 %v506
    %v1372 = vunpack.c.h.b16 %v506
    %v1373 = vunpack.c.l.b16 %v507
    %v1374 = vunpack.c.h.b16 %v507
    %v1375 = vunpack.c.l.b16 %v508
    %v1376 = vunpack.c.h.b16 %v508
    %v1377 = vunpack.c.l.b16 %v509
    %v1378 = vunpack.c.h.b16 %v509
    %v1379 = vunpack.c.l.b16 %v510
    %v1380 = vunpack.c.h.b16 %v510
    %v1381 = vunpack.c.l.b16 %v511
    %v1382 = vunpack.c.h.b16 %v511
    %v1383 = vunpack.c.l.b16 %v512
    %v1384 = vunpack.c.h.b16 %v512
    %v1385 = vunpack.c.l.b16 %v513
    %v1386 = vunpack.c.h.b16 %v513
    %v1387 = vunpack.c.l.b16 %v514
    %v1388 = vunpack.c.h.b16 %v514
    %v1389 = vunpack.c.l.b16 %v515
    %v1390 = vunpack.c.h.b16 %v515
    %v1391 = vunpack.c.l.b16 %v516
    %v1392 = vunpack.c.h.b16 %v516
    %v1393 = vunpack.c.l.b16 %v517
    %v1394 = vunpack.c.h.b16 %v517
    %v1395 = vunpack.c.l.b16 %v518
    %v1396 = vunpack.c.h.b16 %v518
    %v1397 = vunpack.c.l.b16 %v519
    %v1398 = vunpack.c.h.b16 %v519
    %v1399 = vunpack.c.l.b16 %v520
    %v1400 = vunpack.c.h.b16 %v520
    %v1401 = vunpack.c.l.b16 %v521
    %v1402 = vunpack.c.h.b16 %v521
    %v1403 = vunpack.c.l.b16 %v522
    %v1404 = vunpack.c.h.b16 %v522
    %v1405 = vunpack.c.l.b16 %v523
    %v1406 = vunpack.c.h.b16 %v523
    %v1407 = vunpack.c.l.b16 %v524
    %v1408 = vunpack.c.h.b16 %v524
    %v1409 = vunpack.c.l.b16 %v525
    %v1410 = vunpack.c.h.b16 %v525
    %v1411 = vunpack.c.l.b16 %v526
    %v1412 = vunpack.c.h.b16 %v526
    %v1413 = vunpack.c.l.b16 %v527
    %v1414 = vunpack.c.h.b16 %v527
    %v1415 = vunpack.c.l.b16 %v528
    %v1416 = vunpack.c.h.b16 %v528
    %v1417 = vunpack.c.l.b16 %v529
    %v1418 = vunpack.c.h.b16 %v529
    %v1419 = vunpack.c.l.b16 %v530
    %v1420 = vunpack.c.h.b16 %v530
    %v1421 = vunpack.c.l.b16 %v531
    %v1422 = vunpack.c.h.b16 %v531
    %v1423 = vunpack.c.l.b16 %v532
    %v1424 = vunpack.c.h.b16 %v532
    %v1425 = vunpack.c.l.b16 %v533
    %v1426 = vunpack.c.h.b16 %v533
    %v1427 = vunpack.c.l.b16 %v534
    %v1428 = vunpack.c.h.b16 %v534
    %v1429 = vunpack.c.l.b16 %v535
    %v1430 = vunpack.c.h.b16 %v535
    %v1431 = vunpack.c.l.b16 %v536
    %v1432 = vunpack.c.h.b16 %v536
    %v1433 = vpack.c.b16 %v863, %v857
    %v1434 = vpack.c.b16 %v864, %v858
    %v1435 = vpack.c.b16 %v865, %v859
    %v1436 = vpack.c.b16 %v866, %v860
    %v1437 = vpack.c.b16 %v867, %v861
    %v1438 = vpack.c.b16 %v868, %v862
    %v1439 = vpack.c.b16 %v875, %v869
    %v1440 = vpack.c.b16 %v876, %v870
    %v1441 = vpack.c.b16 %v877, %v871
    %v1442 = vpack.c.b16 %v878, %v872
    %v1443 = vpack.c.b16 %v879, %v873
    %v1444 = vpack.c.b16 %v880, %v874
    %v1445 = vpack.c.b16 %v887, %v881
    %v1446 = vpack.c.b16 %v888, %v882
    %v1447 = vpack.c.b16 %v889, %v883
    %v1448 = vpack.c.b16 %v890, %v884
    %v1449 = vpack.c.b16 %v891, %v885
    %v1450 = vpack.c.b16 %v892, %v886
    %v1451 = vpack.c.b16 %v899, %v893
    %v1452 = vpack.c.b16 %v900, %v894
    %v1453 = vpack.c.b16 %v901, %v895
    %v1454 = vpack.c.b16 %v902, %v896
    %v1455 = vpack.c.b16 %v903, %v897
    %v1456 = vpack.c.b16 %v904, %v898
    %v1457 = vpack.c.b16 %v911, %v905
    %v1458 = vpack.c.b16 %v912, %v906
    %v1459 = vpack.c.b16 %v913, %v907
    %v1460 = vpack.c.b16 %v914, %v908
    %v1461 = vpack.c.b16 %v915, %v909
    %v1462 = vpack.c.b16 %v916, %v910
    %v1463 = vpack.c.b16 %v923, %v917
    %v1464 = vpack.c.b16 %v924, %v918
    %v1465 = vpack.c.b16 %v925, %v919
    %v1466 = vpack.c.b16 %v926, %v920
    %v1467 = vpack.c.b16 %v927, %v921
    %v1468 = vpack.c.b16 %v928, %v922
    %v1469 = vpack.c.b16 %v935, %v929
    %v1470 = vpack.c.b16 %v936, %v930
    %v1471 = vpack.c.b16 %v937, %v931
    %v1472 = vpack.c.b16 %v938, %v932
    %v1473 = vpack.c.b16 %v939, %v933
    %v1474 = vpack.c.b16 %v940, %v934
    %v1475 = vpack.c.b16 %v947, %v941
    %v1476 = vpack.c.b16 %v948, %v942
    %v1477 = vpack.c.b16 %v949, %v943
    %v1478 = vpack.c.b16 %v950, %v944
    %v1479 = vpack.c.b16 %v951, %v945
    %v1480 = vpack.c.b16 %v952, %v946
    %v1481 = vpack.c.b16 %v959, %v953
    %v1482 = vpack.c.b16 %v960, %v954
    %v1483 = vpack.c.b16 %v961, %v955
    %v1484 = vpack.c.b16 %v962, %v956
    %v1485 = vpack.c.b16 %v963, %v957
    %v1486 = vpack.c.b16 %v964, %v958
    %v1487 = vpack.c.b16 %v971, %v965
    %v1488 = vpack.c.b16 %v972, %v966
    %v1489 = vpack.c.b16 %v973, %v967
    %v1490 = vpack.c.b16 %v974, %v968
    %v1491 = vpack.c.b16 %v975, %v969
    %v1492 = vpack.c.b16 %v976, %v970
    %v1493 = vpack.c.b16 %v983, %v977
    %v1494 = vpack.c.b16 %v984, %v978
    %v1495 = vpack.c.b16 %v985, %v979
    %v1496 = vpack.c.b16 %v986, %v980
    %v1497 = vpack.c.b16 %v987, %v981
    %v1498 = vpack.c.b16 %v988, %v982
    %v1499 = vpack.c.b16 %v995, %v989
    %v1500 = vpack.c.b16 %v996, %v990
    %v1501 = vpack.c.b16 %v997, %v991
    %v1502 = vpack.c.b16 %v998, %v992
    %v1503 = vpack.c.b16 %v999, %v993
    %v1504 = vpack.c.b16 %v1000, %v994
    %v1505 = vpack.c.b16 %v1007, %v1001
    %v1506 = vpack.c.b16 %v1008, %v1002
    %v1507 = vpack.c.b16 %v1009, %v1003
    %v1508 = vpack.c.b16 %v1010, %v1004
    %v1509 = vpack.c.b16 %v1011, %v1005
    %v1510 = vpack.c.b16 %v1012, %v1006
    %v1511 = vpack.c.b16 %v1019, %v1013
    %v1512 = vpack.c.b16 %v1020, %v1014
    %v1513 = vpack.c.b16 %v1021, %v1015
    %v1514 = vpack.c.b16 %v1022, %v1016
    %v1515 = vpack.c.b16 %v1023, %v1017
    %v1516 = vpack.c.b16 %v1024, %v1018
    %v1517 = vpack.c.b16 %v1031, %v1025
    %v1518 = vpack.c.b16 %v1032, %v1026
    %v1519 = vpack.c.b16 %v1033, %v1027
    %v1520 = vpack.c.b16 %v1034, %v1028
    %v1521 = vpack.c.b16 %v1035, %v1029
    %v1522 = vpack.c.b16 %v1036, %v1030
    %v1523 = vpack.c.b16 %v1043, %v1037
    %v1524 = vpack.c.b16 %v1044, %v1038
    %v1525 = vpack.c.b16 %v1045, %v1039
    %v1526 = vpack.c.b16 %v1046, %v1040
    %v1527 = vpack.c.b16 %v1047, %v1041
    %v1528 = vpack.c.b16 %v1048, %v1042
    %v1529 = vpack.c.b16 %v1055, %v1049
    %v1530 = vpack.c.b16 %v1056, %v1050
    %v1531 = vpack.c.b16 %v1057, %v1051
    %v1532 = vpack.c.b16 %v1058, %v1052
    %v1533 = vpack.c.b16 %v1059, %v1053
    %v1534 = vpack.c.b16 %v1060, %v1054
    %v1535 = vpack.c.b16 %v1067, %v1061
    %v1536 = vpack.c.b16 %v1068, %v1062
    %v1537 = vpack.c.b16 %v1069, %v1063
    %v1538 = vpack.c.b16 %v1070, %v1064
    %v1539 = vpack.c.b16 %v1071, %v1065
    %v1540 = vpack.c.b16 %v1072, %v1066
    %v1541 = vpack.c.b16 %v1079, %v1073
    %v1542 = vpack.c.b16 %v1080, %v1074
    %v1543 = vpack.c.b16 %v1081, %v1075
    %v1544 = vpack.c.b16 %v1082, %v1076
    %v1545 = vpack.c.b16 %v1083, %v1077
    %v1546 = vpack.c.b16 %v1084, %v1078
    %v1547 = vpack.c.b16 %v1091, %v1085
    %v1548 = vpack.c.b16 %v1092, %v1086
    %v1549 = vpack.c.b16 %v1093, %v1087
    %v1550 = vpack.c.b16 %v1094, %v1088
    %v1551 = vpack.c.b16 %v1095, %v1089
    %v1552 = vpack.c.b16 %v1096, %v1090
    %v1553 = vpack.c.b16 %v1103, %v1097
    %v1554 = vpack.c.b16 %v1104, %v1098
    %v1555 = vpack.c.b16 %v1105, %v1099
    %v1556 = vpack.c.b16 %v1106, %v1100
    %v1557 = vpack.c.b16 %v1107, %v1101
    %v1558 = vpack.c.b16 %v1108, %v1102
    %v1559 = vpack.c.b16 %v1115, %v1109
    %v1560 = vpack.c.b16 %v1116, %v1110
    %v1561 = vpack.c.b16 %v1117, %v1111
    %v1562 = vpack.c.b16 %v1118, %v1112
    %v1563 = vpack.c.b16 %v1119, %v1113
    %v1564 = vpack.c.b16 %v1120, %v1114
    %v1565 = vpack.c.b16 %v1127, %v1121
    %v1566 = vpack.c.b16 %v1128, %v1122
    %v1567 = vpack.c.b16 %v1129, %v1123
    %v1568 = vpack.c.b16 %v1130, %v1124
    %v1569 = vpack.c.b16 %v1131, %v1125
    %v1570 = vpack.c.b16 %v1132, %v1126
    %v1571 = vpack.c.b16 %v1139, %v1133
    %v1572 = vpack.c.b16 %v1140, %v1134
    %v1573 = vpack.c.b16 %v1141, %v1135
    %v1574 = vpack.c.b16 %v1142, %v1136
    %v1575 = vpack.c.b16 %v1143, %v1137
    %v1576 = vpack.c.b16 %v1144, %v1138
    %v1577 = vpack.c.b16 %v1151, %v1145
    %v1578 = vpack.c.b16 %v1152, %v1146
    %v1579 = vpack.c.b16 %v1153, %v1147
    %v1580 = vpack.c.b16 %v1154, %v1148
    %v1581 = vpack.c.b16 %v1155, %v1149
    %v1582 = vpack.c.b16 %v1156, %v1150
    %v1583 = vpack.c.b16 %v1163, %v1157
    %v1584 = vpack.c.b16 %v1164, %v1158
    %v1585 = vpack.c.b16 %v1165, %v1159
    %v1586 = vpack.c.b16 %v1166, %v1160
    %v1587 = vpack.c.b16 %v1167, %v1161
    %v1588 = vpack.c.b16 %v1168, %v1162
    %v1589 = vpack.c.b16 %v1175, %v1169
    %v1590 = vpack.c.b16 %v1176, %v1170
    %v1591 = vpack.c.b16 %v1177, %v1171
    %v1592 = vpack.c.b16 %v1178, %v1172
    %v1593 = vpack.c.b16 %v1179, %v1173
    %v1594 = vpack.c.b16 %v1180, %v1174
    %v1595 = vpack.c.b16 %v1187, %v1181
    %v1596 = vpack.c.b16 %v1188, %v1182
    %v1597 = vpack.c.b16 %v1189, %v1183
    %v1598 = vpack.c.b16 %v1190, %v1184
    %v1599 = vpack.c.b16 %v1191, %v1185
    %v1600 = vpack.c.b16 %v1192, %v1186
    %v1601 = vpack.c.b16 %v1199, %v1193
    %v1602 = vpack.c.b16 %v1200, %v1194
    %v1603 = vpack.c.b16 %v1201, %v1195
    %v1604 = vpack.c.b16 %v1202, %v1196
    %v1605 = vpack.c.b16 %v1203, %v1197
    %v1606 = vpack.c.b16 %v1204, %v1198
    %v1607 = vpack.c.b16 %v1211, %v1205
    %v1608 = vpack.c.b16 %v1212, %v1206
    %v1609 = vpack.c.b16 %v1213, %v1207
    %v1610 = vpack.c.b16 %v1214, %v1208
    %v1611 = vpack.c.b16 %v1215, %v1209
    %v1612 = vpack.c.b16 %v1216, %v1210
    %v1613 = vpack.c.b16 %v1223, %v1217
    %v1614 = vpack.c.b16 %v1224, %v1218
    %v1615 = vpack.c.b16 %v1225, %v1219
    %v1616 = vpack.c.b16 %v1226, %v1220
    %v1617 = vpack.c.b16 %v1227, %v1221
    %v1618 = vpack.c.b16 %v1228, %v1222
    %v1619 = vpack.c.b16 %v1235, %v1229
    %v1620 = vpack.c.b16 %v1236, %v1230
    %v1621 = vpack.c.b16 %v1237, %v1231
    %v1622 = vpack.c.b16 %v1238, %v1232
    %v1623 = vpack.c.b16 %v1239, %v1233
    %v1624 = vpack.c.b16 %v1240, %v1234
    %v1625 = vpack.c.b16 %v1247, %v1241
    %v1626 = vpack.c.b16 %v1248, %v1242
    %v1627 = vpack.c.b16 %v1249, %v1243
    %v1628 = vpack.c.b16 %v1250, %v1244
    %v1629 = vpack.c.b16 %v1251, %v1245
    %v1630 = vpack.c.b16 %v1252, %v1246
    %v1631 = vpack.c.b16 %v1259, %v1253
    %v1632 = vpack.c.b16 %v1260, %v1254
    %v1633 = vpack.c.b16 %v1261, %v1255
    %v1634 = vpack.c.b16 %v1262, %v1256
    %v1635 = vpack.c.b16 %v1263, %v1257
    %v1636 = vpack.c.b16 %v1264, %v1258
    %v1637 = vpack.c.b16 %v1271, %v1265
    %v1638 = vpack.c.b16 %v1272, %v1266
    %v1639 = vpack.c.b16 %v1273, %v1267
    %v1640 = vpack.c.b16 %v1274, %v1268
    %v1641 = vpack.c.b16 %v1275, %v1269
    %v1642 = vpack.c.b16 %v1276, %v1270
    %v1643 = vpack.c.b16 %v1283, %v1277
    %v1644 = vpack.c.b16 %v1284, %v1278
    %v1645 = vpack.c.b16 %v1285, %v1279
    %v1646 = vpack.c.b16 %v1286, %v1280
    %v1647 = vpack.c.b16 %v1287, %v1281
    %v1648 = vpack.c.b16 %v1288, %v1282
    %v1649 = vpack.c.b16 %v1295, %v1289
    %v1650 = vpack.c.b16 %v1296, %v1290
    %v1651 = vpack.c.b16 %v1297, %v1291
    %v1652 = vpack.c.b16 %v1298, %v1292
    %v1653 = vpack.c.b16 %v1299, %v1293
    %v1654 = vpack.c.b16 %v1300, %v1294
    %v1655 = vpack.c.b16 %v1307, %v1301
    %v1656 = vpack.c.b16 %v1308, %v1302
    %v1657 = vpack.c.b16 %v1309, %v1303
    %v1658 = vpack.c.b16 %v1310, %v1304
    %v1659 = vpack.c.b16 %v1311, %v1305
    %v1660 = vpack.c.b16 %v1312, %v1306
    %v1661 = vpack.c.b16 %v1319, %v1313
    %v1662 = vpack.c.b16 %v1320, %v1314
    %v1663 = vpack.c.b16 %v1321, %v1315
    %v1664 = vpack.c.b16 %v1322, %v1316
    %v1665 = vpack.c.b16 %v1323, %v1317
    %v1666 = vpack.c.b16 %v1324, %v1318
    %v1667 = vpack.c.b16 %v1331, %v1325
    %v1668 = vpack.c.b16 %v1332, %v1326
    %v1669 = vpack.c.b16 %v1333, %v1327
    %v1670 = vpack.c.b16 %v1334, %v1328
    %v1671 = vpack.c.b16 %v1335, %v1329
    %v1672 = vpack.c.b16 %v1336, %v1330
    %v1673 = vpack.c.b16 %v1343, %v1337
    %v1674 = vpack.c.b16 %v1344, %v1338
    %v1675 = vpack.c.b16 %v1345, %v1339
    %v1676 = vpack.c.b16 %v1346, %v1340
    %v1677 = vpack.c.b16 %v1347, %v1341
    %v1678 = vpack.c.b16 %v1348, %v1342
    %v1679 = vpack.c.b16 %v1355, %v1349
    %v1680 = vpack.c.b16 %v1356, %v1350
    %v1681 = vpack.c.b16 %v1357, %v1351
    %v1682 = vpack.c.b16 %v1358, %v1352
    %v1683 = vpack.c.b16 %v1359, %v1353
    %v1684 = vpack.c.b16 %v1360, %v1354
    %v1685 = vpack.c.b16 %v1367, %v1361
    %v1686 = vpack.c.b16 %v1368, %v1362
    %v1687 = vpack.c.b16 %v1369, %v1363
    %v1688 = vpack.c.b16 %v1370, %v1364
    %v1689 = vpack.c.b16 %v1371, %v1365
    %v1690 = vpack.c.b16 %v1372, %v1366
    %v1691 = vpack.c.b16 %v1379, %v1373
    %v1692 = vpack.c.b16 %v1380, %v1374
    %v1693 = vpack.c.b16 %v1381, %v1375
    %v1694 = vpack.c.b16 %v1382, %v1376
    %v1695 = vpack.c.b16 %v1383, %v1377
    %v1696 = vpack.c.b16 %v1384, %v1378
    %v1697 = vpack.c.b16 %v1391, %v1385
    %v1698 = vpack.c.b16 %v1392, %v1386
    %v1699 = vpack.c.b16 %v1393, %v1387
    %v1700 = vpack.c.b16 %v1394, %v1388
    %v1701 = vpack.c.b16 %v1395, %v1389
    %v1702 = vpack.c.b16 %v1396, %v1390
    %v1703 = vpack.c.b16 %v1403, %v1397
    %v1704 = vpack.c.b16 %v1404, %v1398
    %v1705 = vpack.c.b16 %v1405, %v1399
    %v1706 = vpack.c.b16 %v1406, %v1400
    %v1707 = vpack.c.b16 %v1407, %v1401
    %v1708 = vpack.c.b16 %v1408, %v1402
    %v1709 = vpack.c.b16 %v1415, %v1409
    %v1710 = vpack.c.b16 %v1416, %v1410
    %v1711 = vpack.c.b16 %v1417, %v1411
    %v1712 = vpack.c.b16 %v1418, %v1412
    %v1713 = vpack.c.b16 %v1419, %v1413
    %v1714 = vpack.c.b16 %v1420, %v1414
    %v1715 = vpack.c.b16 %v1427, %v1421
    %v1716 = vpack.c.b16 %v1428, %v1422
    %v1717 = vpack.c.b16 %v1429, %v1423
    %v1718 = vpack.c.b16 %v1430, %v1424
    %v1719 = vpack.c.b16 %v1431, %v1425
    %v1720 = vpack.c.b16 %v1432, %v1426
    %2009 = vmatprep.subr.bf16.mxu0 %v1476
    %2010 = vmatpush1.bf16.msra.mxu0 %v1475
    %2011 = vmatprep.subr.bf16.mxu0 %v1470
    %2012 = vmatpush1.bf16.msra.mxu0 %v1469
    %2013 = vmatprep.subr.bf16.mxu0 %v1464
    %2014 = vmatpush1.bf16.msra.mxu0 %v1463
    %2015 = vmatprep.subr.bf16.mxu0 %v1458
    %2016 = vmatpush1.bf16.msra.mxu0 %v1457
    %2017 = vmatprep.subr.bf16.mxu0 %v1452
    %2018 = vmatpush1.bf16.msra.mxu0 %v1451
    %2019 = vmatprep.subr.bf16.mxu0 %v1446
    %2020 = vmatpush1.bf16.msra.mxu0 %v1445
    %2021 = vmatprep.subr.bf16.mxu0 %v1440
    %2022 = vmatpush1.bf16.msra.mxu0 %v1439
    %2023 = vmatprep.subr.bf16.mxu0 %v1434
    %2024 = vmatpush1.bf16.msra.mxu0 %v1433
    %2025 = vmatprep.subr.bf16.mxu0 %v1524
    %2026 = vmatpush2.bf16.msra.mxu0 %v1523
    %2027 = vmatprep.subr.bf16.mxu0 %v1518
    %2028 = vmatpush2.bf16.msra.mxu0 %v1517
    %2029 = vmatprep.subr.bf16.mxu0 %v1512
    %2030 = vmatpush2.bf16.msra.mxu0 %v1511
    %2031 = vmatprep.subr.bf16.mxu0 %v1506
    %2032 = vmatpush2.bf16.msra.mxu0 %v1505
    %2033 = vmatprep.subr.bf16.mxu0 %v1500
    %2034 = vmatpush2.bf16.msra.mxu0 %v1499
    %2035 = vmatprep.subr.bf16.mxu0 %v1494
    %2036 = vmatpush2.bf16.msra.mxu0 %v1493
    %2037 = vmatprep.subr.bf16.mxu0 %v1488
    %2038 = vmatpush2.bf16.msra.mxu0 %v1487
    %2039 = vmatprep.subr.bf16.mxu0 %v1482
    %2040 = vmatpush2.bf16.msra.mxu0 %v1481
    %2041 = vmatprep.mubr.bf16.mxu0 %v244
    %2042 = vmatmul.mubr.bf16.gmra.mxu0 %v243
    %v2043 = vpop.f32.mrf.mxu0
    %v2044 = vadd.f32 %v542, %v2043
    %v2045 = vpop.f32.mrf.mxu0
    %v2046 = vadd.f32 %v546, %v2045
    %v2047 = vpop.f32.mrf.mxu0
    %v2048 = vpop.f32.mrf.mxu0
    %2049 = vdwg.mxu0
    %2050 = vmatprep.subr.bf16.mxu0 %v1572
    %2051 = vmatpush1.bf16.msra.mxu0 %v1571
    %2052 = vmatprep.subr.bf16.mxu0 %v1566
    %2053 = vmatpush1.bf16.msra.mxu0 %v1565
    %2054 = vmatprep.subr.bf16.mxu0 %v1560
    %2055 = vmatpush1.bf16.msra.mxu0 %v1559
    %2056 = vmatprep.subr.bf16.mxu0 %v1554
    %2057 = vmatpush1.bf16.msra.mxu0 %v1553
    %2058 = vmatprep.subr.bf16.mxu0 %v1548
    %2059 = vmatpush1.bf16.msra.mxu0 %v1547
    %2060 = vmatprep.subr.bf16.mxu0 %v1542
    %2061 = vmatpush1.bf16.msra.mxu0 %v1541
    %2062 = vmatprep.subr.bf16.mxu0 %v1536
    %2063 = vmatpush1.bf16.msra.mxu0 %v1535
    %2064 = vmatprep.subr.bf16.mxu0 %v1530
    %2065 = vmatpush1.bf16.msra.mxu0 %v1529
    %2066 = vmatprep.subr.bf16.mxu0 %v1620
    %2067 = vmatpush2.bf16.msra.mxu0 %v1619
    %2068 = vmatprep.subr.bf16.mxu0 %v1614
    %2069 = vmatpush2.bf16.msra.mxu0 %v1613
    %2070 = vmatprep.subr.bf16.mxu0 %v1608
    %2071 = vmatpush2.bf16.msra.mxu0 %v1607
    %2072 = vmatprep.subr.bf16.mxu0 %v1602
    %2073 = vmatpush2.bf16.msra.mxu0 %v1601
    %2074 = vmatprep.subr.bf16.mxu0 %v1596
    %2075 = vmatpush2.bf16.msra.mxu0 %v1595
    %2076 = vmatprep.subr.bf16.mxu0 %v1590
    %2077 = vmatpush2.bf16.msra.mxu0 %v1589
    %2078 = vmatprep.subr.bf16.mxu0 %v1584
    %2079 = vmatpush2.bf16.msra.mxu0 %v1583
    %2080 = vmatprep.subr.bf16.mxu0 %v1578
    %2081 = vmatpush2.bf16.msra.mxu0 %v1577
    %2082 = vmatprep.mubr.bf16.mxu0 %v246
    %2083 = vmatmul.mubr.bf16.gmra.mxu0 %v245
    %v2084 = vpop.f32.mrf.mxu0
    %v2085 = vadd.f32 %v2044, %v2084
    %v2086 = vpop.f32.mrf.mxu0
    %v2087 = vadd.f32 %v2046, %v2086
    %v2088 = vpop.f32.mrf.mxu0
    %v2089 = vpop.f32.mrf.mxu0
    %2090 = vdwg.mxu0
    %2091 = vmatprep.subr.bf16.mxu0 %v1668
    %2092 = vmatpush1.bf16.msra.mxu0 %v1667
    %2093 = vmatprep.subr.bf16.mxu0 %v1662
    %2094 = vmatpush1.bf16.msra.mxu0 %v1661
    %2095 = vmatprep.subr.bf16.mxu0 %v1656
    %2096 = vmatpush1.bf16.msra.mxu0 %v1655
    %2097 = vmatprep.subr.bf16.mxu0 %v1650
    %2098 = vmatpush1.bf16.msra.mxu0 %v1649
    %2099 = vmatprep.subr.bf16.mxu0 %v1644
    %2100 = vmatpush1.bf16.msra.mxu0 %v1643
    %2101 = vmatprep.subr.bf16.mxu0 %v1638
    %2102 = vmatpush1.bf16.msra.mxu0 %v1637
    %2103 = vmatprep.subr.bf16.mxu0 %v1632
    %2104 = vmatpush1.bf16.msra.mxu0 %v1631
    %2105 = vmatprep.subr.bf16.mxu0 %v1626
    %2106 = vmatpush1.bf16.msra.mxu0 %v1625
    %2107 = vmatprep.subr.bf16.mxu0 %v1716
    %2108 = vmatpush2.bf16.msra.mxu0 %v1715
    %2109 = vmatprep.subr.bf16.mxu0 %v1710
    %2110 = vmatpush2.bf16.msra.mxu0 %v1709
    %2111 = vmatprep.subr.bf16.mxu0 %v1704
    %2112 = vmatpush2.bf16.msra.mxu0 %v1703
    %2113 = vmatprep.subr.bf16.mxu0 %v1698
    %2114 = vmatpush2.bf16.msra.mxu0 %v1697
    %2115 = vmatprep.subr.bf16.mxu0 %v1692
    %2116 = vmatpush2.bf16.msra.mxu0 %v1691
    %2117 = vmatprep.subr.bf16.mxu0 %v1686
    %2118 = vmatpush2.bf16.msra.mxu0 %v1685
    %2119 = vmatprep.subr.bf16.mxu0 %v1680
    %2120 = vmatpush2.bf16.msra.mxu0 %v1679
    %2121 = vmatprep.subr.bf16.mxu0 %v1674
    %2122 = vmatpush2.bf16.msra.mxu0 %v1673
    %2123 = vmatprep.mubr.bf16.mxu0 %v248
    %2124 = vmatmul.mubr.bf16.gmra.mxu0 %v247
    %v2125 = vpop.f32.mrf.mxu0
    %v2126 = vadd.f32 %v2085, %v2125
    %v2127 = vpop.f32.mrf.mxu0
    %v2128 = vadd.f32 %v2087, %v2127
    %v2129 = vpop.f32.mrf.mxu0
    %v2130 = vpop.f32.mrf.mxu0
    %2131 = vdwg.mxu0
    %2132 = vmatprep.subr.bf16.mxu0 %v1478
    %2133 = vmatpush1.bf16.msra.mxu0 %v1477
    %2134 = vmatprep.subr.bf16.mxu0 %v1472
    %2135 = vmatpush1.bf16.msra.mxu0 %v1471
    %2136 = vmatprep.subr.bf16.mxu0 %v1466
    %2137 = vmatpush1.bf16.msra.mxu0 %v1465
    %2138 = vmatprep.subr.bf16.mxu0 %v1460
    %2139 = vmatpush1.bf16.msra.mxu0 %v1459
    %2140 = vmatprep.subr.bf16.mxu0 %v1454
    %2141 = vmatpush1.bf16.msra.mxu0 %v1453
    %2142 = vmatprep.subr.bf16.mxu0 %v1448
    %2143 = vmatpush1.bf16.msra.mxu0 %v1447
    %2144 = vmatprep.subr.bf16.mxu0 %v1442
    %2145 = vmatpush1.bf16.msra.mxu0 %v1441
    %2146 = vmatprep.subr.bf16.mxu0 %v1436
    %2147 = vmatpush1.bf16.msra.mxu0 %v1435
    %2148 = vmatprep.subr.bf16.mxu0 %v1526
    %2149 = vmatpush2.bf16.msra.mxu0 %v1525
    %2150 = vmatprep.subr.bf16.mxu0 %v1520
    %2151 = vmatpush2.bf16.msra.mxu0 %v1519
    %2152 = vmatprep.subr.bf16.mxu0 %v1514
    %2153 = vmatpush2.bf16.msra.mxu0 %v1513
    %2154 = vmatprep.subr.bf16.mxu0 %v1508
    %2155 = vmatpush2.bf16.msra.mxu0 %v1507
    %2156 = vmatprep.subr.bf16.mxu0 %v1502
    %2157 = vmatpush2.bf16.msra.mxu0 %v1501
    %2158 = vmatprep.subr.bf16.mxu0 %v1496
    %2159 = vmatpush2.bf16.msra.mxu0 %v1495
    %2160 = vmatprep.subr.bf16.mxu0 %v1490
    %2161 = vmatpush2.bf16.msra.mxu0 %v1489
    %2162 = vmatprep.subr.bf16.mxu0 %v1484
    %2163 = vmatpush2.bf16.msra.mxu0 %v1483
    %2164 = vmatprep.mubr.bf16.mxu0 %v244
    %2165 = vmatmul.mubr.bf16.gmra.mxu0 %v243
    %v2166 = vpop.f32.mrf.mxu0
    %v2167 = vadd.f32 %v550, %v2166
    %v2168 = vpop.f32.mrf.mxu0
    %v2169 = vadd.f32 %v554, %v2168
    %v2170 = vpop.f32.mrf.mxu0
    %v2171 = vpop.f32.mrf.mxu0
    %2172 = vdwg.mxu0
    %2173 = vmatprep.subr.bf16.mxu0 %v1574
    %2174 = vmatpush1.bf16.msra.mxu0 %v1573
    %2175 = vmatprep.subr.bf16.mxu0 %v1568
    %2176 = vmatpush1.bf16.msra.mxu0 %v1567
    %2177 = vmatprep.subr.bf16.mxu0 %v1562
    %2178 = vmatpush1.bf16.msra.mxu0 %v1561
    %2179 = vmatprep.subr.bf16.mxu0 %v1556
    %2180 = vmatpush1.bf16.msra.mxu0 %v1555
    %2181 = vmatprep.subr.bf16.mxu0 %v1550
    %2182 = vmatpush1.bf16.msra.mxu0 %v1549
    %2183 = vmatprep.subr.bf16.mxu0 %v1544
    %2184 = vmatpush1.bf16.msra.mxu0 %v1543
    %2185 = vmatprep.subr.bf16.mxu0 %v1538
    %2186 = vmatpush1.bf16.msra.mxu0 %v1537
    %2187 = vmatprep.subr.bf16.mxu0 %v1532
    %2188 = vmatpush1.bf16.msra.mxu0 %v1531
    %2189 = vmatprep.subr.bf16.mxu0 %v1622
    %2190 = vmatpush2.bf16.msra.mxu0 %v1621
    %2191 = vmatprep.subr.bf16.mxu0 %v1616
    %2192 = vmatpush2.bf16.msra.mxu0 %v1615
    %2193 = vmatprep.subr.bf16.mxu0 %v1610
    %2194 = vmatpush2.bf16.msra.mxu0 %v1609
    %2195 = vmatprep.subr.bf16.mxu0 %v1604
    %2196 = vmatpush2.bf16.msra.mxu0 %v1603
    %2197 = vmatprep.subr.bf16.mxu0 %v1598
    %2198 = vmatpush2.bf16.msra.mxu0 %v1597
    %2199 = vmatprep.subr.bf16.mxu0 %v1592
    %2200 = vmatpush2.bf16.msra.mxu0 %v1591
    %2201 = vmatprep.subr.bf16.mxu0 %v1586
    %2202 = vmatpush2.bf16.msra.mxu0 %v1585
    %2203 = vmatprep.subr.bf16.mxu0 %v1580
    %2204 = vmatpush2.bf16.msra.mxu0 %v1579
    %2205 = vmatprep.mubr.bf16.mxu0 %v246
    %2206 = vmatmul.mubr.bf16.gmra.mxu0 %v245
    %v2207 = vpop.f32.mrf.mxu0
    %v2208 = vadd.f32 %v2167, %v2207
    %v2209 = vpop.f32.mrf.mxu0
    %v2210 = vadd.f32 %v2169, %v2209
    %v2211 = vpop.f32.mrf.mxu0
    %v2212 = vpop.f32.mrf.mxu0
    %2213 = vdwg.mxu0
    %2214 = vmatprep.subr.bf16.mxu0 %v1670
    %2215 = vmatpush1.bf16.msra.mxu0 %v1669
    %2216 = vmatprep.subr.bf16.mxu0 %v1664
    %2217 = vmatpush1.bf16.msra.mxu0 %v1663
    %2218 = vmatprep.subr.bf16.mxu0 %v1658
    %2219 = vmatpush1.bf16.msra.mxu0 %v1657
    %2220 = vmatprep.subr.bf16.mxu0 %v1652
    %2221 = vmatpush1.bf16.msra.mxu0 %v1651
    %2222 = vmatprep.subr.bf16.mxu0 %v1646
    %2223 = vmatpush1.bf16.msra.mxu0 %v1645
    %2224 = vmatprep.subr.bf16.mxu0 %v1640
    %2225 = vmatpush1.bf16.msra.mxu0 %v1639
    %2226 = vmatprep.subr.bf16.mxu0 %v1634
    %2227 = vmatpush1.bf16.msra.mxu0 %v1633
    %2228 = vmatprep.subr.bf16.mxu0 %v1628
    %2229 = vmatpush1.bf16.msra.mxu0 %v1627
    %2230 = vmatprep.subr.bf16.mxu0 %v1718
    %2231 = vmatpush2.bf16.msra.mxu0 %v1717
    %2232 = vmatprep.subr.bf16.mxu0 %v1712
    %2233 = vmatpush2.bf16.msra.mxu0 %v1711
    %2234 = vmatprep.subr.bf16.mxu0 %v1706
    %2235 = vmatpush2.bf16.msra.mxu0 %v1705
    %2236 = vmatprep.subr.bf16.mxu0 %v1700
    %2237 = vmatpush2.bf16.msra.mxu0 %v1699
    %2238 = vmatprep.subr.bf16.mxu0 %v1694
    %2239 = vmatpush2.bf16.msra.mxu0 %v1693
    %2240 = vmatprep.subr.bf16.mxu0 %v1688
    %2241 = vmatpush2.bf16.msra.mxu0 %v1687
    %2242 = vmatprep.subr.bf16.mxu0 %v1682
    %2243 = vmatpush2.bf16.msra.mxu0 %v1681
    %2244 = vmatprep.subr.bf16.mxu0 %v1676
    %2245 = vmatpush2.bf16.msra.mxu0 %v1675
    %2246 = vmatprep.mubr.bf16.mxu0 %v248
    %2247 = vmatmul.mubr.bf16.gmra.mxu0 %v247
    %v2248 = vpop.f32.mrf.mxu0
    %v2249 = vadd.f32 %v2208, %v2248
    %v2250 = vpop.f32.mrf.mxu0
    %v2251 = vadd.f32 %v2210, %v2250
    %v2252 = vpop.f32.mrf.mxu0
    %v2253 = vpop.f32.mrf.mxu0
    %2254 = vdwg.mxu0
    %2255 = vmatprep.subr.bf16.mxu0 %v1480
    %2256 = vmatpush1.bf16.msra.mxu0 %v1479
    %2257 = vmatprep.subr.bf16.mxu0 %v1474
    %2258 = vmatpush1.bf16.msra.mxu0 %v1473
    %2259 = vmatprep.subr.bf16.mxu0 %v1468
    %2260 = vmatpush1.bf16.msra.mxu0 %v1467
    %2261 = vmatprep.subr.bf16.mxu0 %v1462
    %2262 = vmatpush1.bf16.msra.mxu0 %v1461
    %2263 = vmatprep.subr.bf16.mxu0 %v1456
    %2264 = vmatpush1.bf16.msra.mxu0 %v1455
    %2265 = vmatprep.subr.bf16.mxu0 %v1450
    %2266 = vmatpush1.bf16.msra.mxu0 %v1449
    %2267 = vmatprep.subr.bf16.mxu0 %v1444
    %2268 = vmatpush1.bf16.msra.mxu0 %v1443
    %2269 = vmatprep.subr.bf16.mxu0 %v1438
    %2270 = vmatpush1.bf16.msra.mxu0 %v1437
    %2271 = vmatprep.subr.bf16.mxu0 %v1528
    %2272 = vmatpush2.bf16.msra.mxu0 %v1527
    %2273 = vmatprep.subr.bf16.mxu0 %v1522
    %2274 = vmatpush2.bf16.msra.mxu0 %v1521
    %2275 = vmatprep.subr.bf16.mxu0 %v1516
    %2276 = vmatpush2.bf16.msra.mxu0 %v1515
    %2277 = vmatprep.subr.bf16.mxu0 %v1510
    %2278 = vmatpush2.bf16.msra.mxu0 %v1509
    %2279 = vmatprep.subr.bf16.mxu0 %v1504
    %2280 = vmatpush2.bf16.msra.mxu0 %v1503
    %2281 = vmatprep.subr.bf16.mxu0 %v1498
    %2282 = vmatpush2.bf16.msra.mxu0 %v1497
    %2283 = vmatprep.subr.bf16.mxu0 %v1492
    %2284 = vmatpush2.bf16.msra.mxu0 %v1491
    %2285 = vmatprep.subr.bf16.mxu0 %v1486
    %2286 = vmatpush2.bf16.msra.mxu0 %v1485
    %2287 = vmatprep.mubr.bf16.mxu0 %v244
    %2288 = vmatmul.mubr.bf16.gmra.mxu0 %v243
    %v2289 = vpop.f32.mrf.mxu0
    %v2290 = vadd.f32 %v558, %v2289
    %v2291 = vpop.f32.mrf.mxu0
    %v2292 = vadd.f32 %v562, %v2291
    %v2293 = vpop.f32.mrf.mxu0
    %v2294 = vpop.f32.mrf.mxu0
    %2295 = vdwg.mxu0
    %2296 = vmatprep.subr.bf16.mxu0 %v1576
    %2297 = vmatpush1.bf16.msra.mxu0 %v1575
    %2298 = vmatprep.subr.bf16.mxu0 %v1570
    %2299 = vmatpush1.bf16.msra.mxu0 %v1569
    %2300 = vmatprep.subr.bf16.mxu0 %v1564
    %2301 = vmatpush1.bf16.msra.mxu0 %v1563
    %2302 = vmatprep.subr.bf16.mxu0 %v1558
    %2303 = vmatpush1.bf16.msra.mxu0 %v1557
    %2304 = vmatprep.subr.bf16.mxu0 %v1552
    %2305 = vmatpush1.bf16.msra.mxu0 %v1551
    %2306 = vmatprep.subr.bf16.mxu0 %v1546
    %2307 = vmatpush1.bf16.msra.mxu0 %v1545
    %2308 = vmatprep.subr.bf16.mxu0 %v1540
    %2309 = vmatpush1.bf16.msra.mxu0 %v1539
    %2310 = vmatprep.subr.bf16.mxu0 %v1534
    %2311 = vmatpush1.bf16.msra.mxu0 %v1533
    %2312 = vmatprep.subr.bf16.mxu0 %v1624
    %2313 = vmatpush2.bf16.msra.mxu0 %v1623
    %2314 = vmatprep.subr.bf16.mxu0 %v1618
    %2315 = vmatpush2.bf16.msra.mxu0 %v1617
    %2316 = vmatprep.subr.bf16.mxu0 %v1612
    %2317 = vmatpush2.bf16.msra.mxu0 %v1611
    %2318 = vmatprep.subr.bf16.mxu0 %v1606
    %2319 = vmatpush2.bf16.msra.mxu0 %v1605
    %2320 = vmatprep.subr.bf16.mxu0 %v1600
    %2321 = vmatpush2.bf16.msra.mxu0 %v1599
    %2322 = vmatprep.subr.bf16.mxu0 %v1594
    %2323 = vmatpush2.bf16.msra.mxu0 %v1593
    %2324 = vmatprep.subr.bf16.mxu0 %v1588
    %2325 = vmatpush2.bf16.msra.mxu0 %v1587
    %2326 = vmatprep.subr.bf16.mxu0 %v1582
    %2327 = vmatpush2.bf16.msra.mxu0 %v1581
    %2328 = vmatprep.mubr.bf16.mxu0 %v246
    %2329 = vmatmul.mubr.bf16.gmra.mxu0 %v245
    %v2330 = vpop.f32.mrf.mxu0
    %v2331 = vadd.f32 %v2290, %v2330
    %v2332 = vpop.f32.mrf.mxu0
    %v2333 = vadd.f32 %v2292, %v2332
    %v2334 = vpop.f32.mrf.mxu0
    %v2335 = vpop.f32.mrf.mxu0
    %2336 = vdwg.mxu0
    %2337 = vmatprep.subr.bf16.mxu0 %v1672
    %2338 = vmatpush1.bf16.msra.mxu0 %v1671
    %2339 = vmatprep.subr.bf16.mxu0 %v1666
    %2340 = vmatpush1.bf16.msra.mxu0 %v1665
    %2341 = vmatprep.subr.bf16.mxu0 %v1660
    %2342 = vmatpush1.bf16.msra.mxu0 %v1659
    %2343 = vmatprep.subr.bf16.mxu0 %v1654
    %2344 = vmatpush1.bf16.msra.mxu0 %v1653
    %2345 = vmatprep.subr.bf16.mxu0 %v1648
    %2346 = vmatpush1.bf16.msra.mxu0 %v1647
    %2347 = vmatprep.subr.bf16.mxu0 %v1642
    %2348 = vmatpush1.bf16.msra.mxu0 %v1641
    %2349 = vmatprep.subr.bf16.mxu0 %v1636
    %2350 = vmatpush1.bf16.msra.mxu0 %v1635
    %2351 = vmatprep.subr.bf16.mxu0 %v1630
    %2352 = vmatpush1.bf16.msra.mxu0 %v1629
    %2353 = vmatprep.subr.bf16.mxu0 %v1720
    %2354 = vmatpush2.bf16.msra.mxu0 %v1719
    %2355 = vmatprep.subr.bf16.mxu0 %v1714
    %2356 = vmatpush2.bf16.msra.mxu0 %v1713
    %2357 = vmatprep.subr.bf16.mxu0 %v1708
    %2358 = vmatpush2.bf16.msra.mxu0 %v1707
    %2359 = vmatprep.subr.bf16.mxu0 %v1702
    %2360 = vmatpush2.bf16.msra.mxu0 %v1701
    %2361 = vmatprep.subr.bf16.mxu0 %v1696
    %2362 = vmatpush2.bf16.msra.mxu0 %v1695
    %2363 = vmatprep.subr.bf16.mxu0 %v1690
    %2364 = vmatpush2.bf16.msra.mxu0 %v1689
    %2365 = vmatprep.subr.bf16.mxu0 %v1684
    %2366 = vmatpush2.bf16.msra.mxu0 %v1683
    %2367 = vmatprep.subr.bf16.mxu0 %v1678
    %2368 = vmatpush2.bf16.msra.mxu0 %v1677
    %2369 = vmatprep.mubr.bf16.mxu0 %v248
    %2370 = vmatmul.mubr.bf16.gmra.mxu0 %v247
    %v2371 = vpop.f32.mrf.mxu0
    %v2372 = vadd.f32 %v2331, %v2371
    %v2373 = vpop.f32.mrf.mxu0
    %v2374 = vadd.f32 %v2333, %v2373
    %v2375 = vpop.f32.mrf.mxu0
    %v2376 = vpop.f32.mrf.mxu0
    %2377 = vdwg.mxu0
    %v2378 = vld [vmem:[#allocation7] sm:$0x3f]
    %v2379 = vld [vmem:[#allocation8] sm:$0x3f]
    %vm2380 = vcmask 1041408
    %v2381 = vsel %vm2380, %v2126, 0.0
    %v2382 = vsel %vm2380, %v2128, 0.0
    %v2383 = vadd.f32 %v2381, %v2382
    %v2384 = vsel %vm2380, %v2249, 0.0
    %v2385 = vadd.f32 %v2383, %v2384
    %v2386 = vsel %vm2380, %v2251, 0.0
    %v2387 = vadd.f32 %v2385, %v2386
    %v2388 = vsel %vm2380, %v2372, 0.0
    %v2389 = vadd.f32 %v2387, %v2388
    %v2390 = vsel %vm2380, %v2374, 0.0
    %v2391 = vadd.f32 %v2389, %v2390
    %2392 = vadd.xlane.f32.xlu0 %v2391
    %v2393 = vpop.xlane.xlu0 %2392
    %v2394 = vmul.f32 %v2393, 0.0013020834
    %v2395 = vsub.f32 %v2126, %v2394
    %v2396 = vsub.f32 %v2128, %v2394
    %v2397 = vsub.f32 %v2249, %v2394
    %v2398 = vsub.f32 %v2251, %v2394
    %v2399 = vsub.f32 %v2372, %v2394
    %v2400 = vsub.f32 %v2374, %v2394
    %v2401 = vmul.f32 %v2395, %v2395
    %v2402 = vmul.f32 %v2396, %v2396
    %v2403 = vmul.f32 %v2397, %v2397
    %v2404 = vmul.f32 %v2398, %v2398
    %v2405 = vmul.f32 %v2399, %v2399
    %v2406 = vmul.f32 %v2400, %v2400
    %v2407 = vsel %vm2380, %v2401, 0.0
    %v2408 = vsel %vm2380, %v2402, 0.0
    %v2409 = vadd.f32 %v2407, %v2408
    %v2410 = vsel %vm2380, %v2403, 0.0
    %v2411 = vadd.f32 %v2409, %v2410
    %v2412 = vsel %vm2380, %v2404, 0.0
    %v2413 = vadd.f32 %v2411, %v2412
    %v2414 = vsel %vm2380, %v2405, 0.0
    %v2415 = vadd.f32 %v2413, %v2414
    %v2416 = vsel %vm2380, %v2406, 0.0
    %v2417 = vadd.f32 %v2415, %v2416
    %2418 = vadd.xlane.f32.xlu0 %v2417
    %v2419 = vpop.xlane.xlu0 %2418
    %v2420 = vmul.f32 %v2419, 0.0013020834
    %v2421 = vadd.f32 %v2420, 1e-05
    %v2422 = vrsqrt.pop %v2421
    %v2423 = vmul.f32 %v2395, %v2422
    %v2424 = vmul.f32 %v2396, %v2422
    %v2425 = vmul.f32 %v2397, %v2422
    %v2426 = vmul.f32 %v2398, %v2422
    %v2427 = vmul.f32 %v2399, %v2422
    %v2428 = vmul.f32 %v2400, %v2422
    %v2430 = vlaneseq
    %v2431 = vshrl.u32 %v2430, 7
    %v2432 = vsub.s32 0, %v2431
    %v2433 = vrot.slane %v2378, %v2432
    %v2434 = vlaneseq
    %v2435 = vshrl.u32 %v2434, 7
    %v2436 = vsub.s32 1, %v2435
    %v2437 = vrot.slane %v2378, %v2436
    %v2438 = vlaneseq
    %v2439 = vshrl.u32 %v2438, 7
    %v2440 = vsub.s32 2, %v2439
    %v2441 = vrot.slane %v2378, %v2440
    %v2442 = vlaneseq
    %v2443 = vshrl.u32 %v2442, 7
    %v2444 = vsub.s32 3, %v2443
    %v2445 = vrot.slane %v2378, %v2444
    %v2446 = vlaneseq
    %v2447 = vshrl.u32 %v2446, 7
    %v2448 = vsub.s32 4, %v2447
    %v2449 = vrot.slane %v2378, %v2448
    %v2450 = vlaneseq
    %v2451 = vshrl.u32 %v2450, 7
    %v2452 = vsub.s32 5, %v2451
    %v2453 = vrot.slane %v2378, %v2452
    %v2460 = vmul.f32 %v2423, %v2433
    %v2461 = vmul.f32 %v2424, %v2437
    %v2462 = vmul.f32 %v2425, %v2441
    %v2463 = vmul.f32 %v2426, %v2445
    %v2464 = vmul.f32 %v2427, %v2449
    %v2465 = vmul.f32 %v2428, %v2453
    %v2467 = vlaneseq
    %v2468 = vshrl.u32 %v2467, 7
    %v2469 = vsub.s32 0, %v2468
    %v2470 = vrot.slane %v2379, %v2469
    %v2471 = vlaneseq
    %v2472 = vshrl.u32 %v2471, 7
    %v2473 = vsub.s32 1, %v2472
    %v2474 = vrot.slane %v2379, %v2473
    %v2475 = vlaneseq
    %v2476 = vshrl.u32 %v2475, 7
    %v2477 = vsub.s32 2, %v2476
    %v2478 = vrot.slane %v2379, %v2477
    %v2479 = vlaneseq
    %v2480 = vshrl.u32 %v2479, 7
    %v2481 = vsub.s32 3, %v2480
    %v2482 = vrot.slane %v2379, %v2481
    %v2483 = vlaneseq
    %v2484 = vshrl.u32 %v2483, 7
    %v2485 = vsub.s32 4, %v2484
    %v2486 = vrot.slane %v2379, %v2485
    %v2487 = vlaneseq
    %v2488 = vshrl.u32 %v2487, 7
    %v2489 = vsub.s32 5, %v2488
    %v2490 = vrot.slane %v2379, %v2489
    %v2497 = vadd.f32 %v2460, %v2470
    %v2498 = vadd.f32 %v2461, %v2474
    %v2499 = vadd.f32 %v2462, %v2478
    %v2500 = vadd.f32 %v2463, %v2482
    %v2501 = vadd.f32 %v2464, %v2486
    %v2502 = vadd.f32 %v2465, %v2490
    %v2503 = vmul.f32 %v2497, 0.5
    %v2504 = vmul.f32 %v2498, 0.5
    %v2505 = vmul.f32 %v2499, 0.5
    %v2506 = vmul.f32 %v2500, 0.5
    %v2507 = vmul.f32 %v2501, 0.5
    %v2508 = vmul.f32 %v2502, 0.5
    %v2509 = vtanh.pop %v2503
    %v2510 = vtanh.pop %v2504
    %v2511 = vtanh.pop %v2505
    %v2512 = vtanh.pop %v2506
    %v2513 = vtanh.pop %v2507
    %v2514 = vtanh.pop %v2508
    %v2515 = vmul.f32 %v2509, 0.5
    %v2516 = vmul.f32 %v2510, 0.5
    %v2517 = vmul.f32 %v2511, 0.5
    %v2518 = vmul.f32 %v2512, 0.5
    %v2519 = vmul.f32 %v2513, 0.5
    %v2520 = vmul.f32 %v2514, 0.5
    %v2521 = vadd.f32 %v2515, 0.5
    %v2522 = vadd.f32 %v2516, 0.5
    %v2523 = vadd.f32 %v2517, 0.5
    %v2524 = vadd.f32 %v2518, 0.5
    %v2525 = vadd.f32 %v2519, 0.5
    %v2526 = vadd.f32 %v2520, 0.5
    %v2527 = vpack.c.bf16 %v2521, %v2521
    %v2528 = vpack.c.bf16 %v2522, %v2522
    %v2529 = vpack.c.bf16 %v2523, %v2523
    %v2530 = vpack.c.bf16 %v2524, %v2524
    %v2531 = vpack.c.bf16 %v2525, %v2525
    %v2532 = vpack.c.bf16 %v2526, %v2526
    %v2533 = vld [vmem:[%s5] sm:$0xff]
    %v2534 = vld [vmem:[%s5 + $0x8] sm:$0xff]
    %v2535 = vld [vmem:[%s5 + $0x10] sm:$0xff]
    %v2536 = vld [vmem:[%s5 + $0x18] sm:$0xff]
    %v2537 = vld [vmem:[%s5 + $0x20] sm:$0xff]
    %v2538 = vld [vmem:[%s5 + $0x28] sm:$0xff]
    %v2539 = vld [vmem:[%s5 + $0x30] sm:$0xff]
    %v2540 = vld [vmem:[%s5 + $0x38] sm:$0xff]
    %v2541 = vld [vmem:[%s5 + $0x40] sm:$0xff]
    %v2542 = vld [vmem:[%s5 + $0x48] sm:$0xff]
    %v2543 = vld [vmem:[%s5 + $0x50] sm:$0xff]
    %v2544 = vld [vmem:[%s5 + $0x58] sm:$0xff]
    %v2545 = vld [vmem:[%s5 + $0x60] sm:$0xff]
    %v2546 = vld [vmem:[%s5 + $0x68] sm:$0xff]
    %v2547 = vld [vmem:[%s5 + $0x70] sm:$0xff]
    %v2548 = vld [vmem:[%s5 + $0x78] sm:$0xff]
    %v2549 = vld [vmem:[%s5 + $0x80] sm:$0xff]
    %v2550 = vld [vmem:[%s5 + $0x88] sm:$0xff]
    %v2551 = vld [vmem:[%s5 + $0x90] sm:$0xff]
    %v2552 = vld [vmem:[%s5 + $0x98] sm:$0xff]
    %v2553 = vld [vmem:[%s5 + $0xa0] sm:$0xff]
    %v2554 = vld [vmem:[%s5 + $0xa8] sm:$0xff]
    %v2555 = vld [vmem:[%s5 + $0xb0] sm:$0xff]
    %v2556 = vld [vmem:[%s5 + $0xb8] sm:$0xff]
    %v2557 = vld [vmem:[%s5 + $0xc0] sm:$0xff]
    %v2558 = vld [vmem:[%s5 + $0xc8] sm:$0xff]
    %v2559 = vld [vmem:[%s5 + $0xd0] sm:$0xff]
    %v2560 = vld [vmem:[%s5 + $0xd8] sm:$0xff]
    %v2561 = vld [vmem:[%s5 + $0xe0] sm:$0xff]
    %v2562 = vld [vmem:[%s5 + $0xe8] sm:$0xff]
    %v2563 = vld [vmem:[%s5 + $0xf0] sm:$0xff]
    %v2564 = vld [vmem:[%s5 + $0xf8] sm:$0xff]
    %v2565 = vld [vmem:[%s5 + $0x100] sm:$0xff]
    %v2566 = vld [vmem:[%s5 + $0x108] sm:$0xff]
    %v2567 = vld [vmem:[%s5 + $0x110] sm:$0xff]
    %v2568 = vld [vmem:[%s5 + $0x118] sm:$0xff]
    %v2569 = vld [vmem:[%s5 + $0x120] sm:$0xff]
    %v2570 = vld [vmem:[%s5 + $0x128] sm:$0xff]
    %v2571 = vld [vmem:[%s5 + $0x130] sm:$0xff]
    %v2572 = vld [vmem:[%s5 + $0x138] sm:$0xff]
    %v2573 = vld [vmem:[%s5 + $0x140] sm:$0xff]
    %v2574 = vld [vmem:[%s5 + $0x148] sm:$0xff]
    %v2575 = vld [vmem:[%s5 + $0x150] sm:$0xff]
    %v2576 = vld [vmem:[%s5 + $0x158] sm:$0xff]
    %v2577 = vld [vmem:[%s5 + $0x160] sm:$0xff]
    %v2578 = vld [vmem:[%s5 + $0x168] sm:$0xff]
    %v2579 = vld [vmem:[%s5 + $0x170] sm:$0xff]
    %v2580 = vld [vmem:[%s5 + $0x178] sm:$0xff]
    %v2581 = vld [vmem:[%s5 + $0x180] sm:$0xff]
    %v2582 = vld [vmem:[%s5 + $0x188] sm:$0xff]
    %v2583 = vld [vmem:[%s5 + $0x190] sm:$0xff]
    %v2584 = vld [vmem:[%s5 + $0x198] sm:$0xff]
    %v2585 = vld [vmem:[%s5 + $0x1a0] sm:$0xff]
    %v2586 = vld [vmem:[%s5 + $0x1a8] sm:$0xff]
    %v2587 = vld [vmem:[%s5 + $0x1b0] sm:$0xff]
    %v2588 = vld [vmem:[%s5 + $0x1b8] sm:$0xff]
    %v2589 = vld [vmem:[%s5 + $0x1c0] sm:$0xff]
    %v2590 = vld [vmem:[%s5 + $0x1c8] sm:$0xff]
    %v2591 = vld [vmem:[%s5 + $0x1d0] sm:$0xff]
    %v2592 = vld [vmem:[%s5 + $0x1d8] sm:$0xff]
    %v2593 = vld [vmem:[%s5 + $0x1e0] sm:$0xff]
    %v2594 = vld [vmem:[%s5 + $0x1e8] sm:$0xff]
    %v2595 = vld [vmem:[%s5 + $0x1f0] sm:$0xff]
    %v2596 = vld [vmem:[%s5 + $0x1f8] sm:$0xff]
    %v2597 = vld [vmem:[%s5 + $0x200] sm:$0xff]
    %v2598 = vld [vmem:[%s5 + $0x208] sm:$0xff]
    %v2599 = vld [vmem:[%s5 + $0x210] sm:$0xff]
    %v2600 = vld [vmem:[%s5 + $0x218] sm:$0xff]
    %v2601 = vld [vmem:[%s5 + $0x220] sm:$0xff]
    %v2602 = vld [vmem:[%s5 + $0x228] sm:$0xff]
    %v2603 = vld [vmem:[%s5 + $0x230] sm:$0xff]
    %v2604 = vld [vmem:[%s5 + $0x238] sm:$0xff]
    %v2605 = vld [vmem:[%s5 + $0x240] sm:$0xff]
    %v2606 = vld [vmem:[%s5 + $0x248] sm:$0xff]
    %v2607 = vld [vmem:[%s5 + $0x250] sm:$0xff]
    %v2608 = vld [vmem:[%s5 + $0x258] sm:$0xff]
    %v2609 = vld [vmem:[%s5 + $0x260] sm:$0xff]
    %v2610 = vld [vmem:[%s5 + $0x268] sm:$0xff]
    %v2611 = vld [vmem:[%s5 + $0x270] sm:$0xff]
    %v2612 = vld [vmem:[%s5 + $0x278] sm:$0xff]
    %v2613 = vld [vmem:[%s5 + $0x280] sm:$0xff]
    %v2614 = vld [vmem:[%s5 + $0x288] sm:$0xff]
    %v2615 = vld [vmem:[%s5 + $0x290] sm:$0xff]
    %v2616 = vld [vmem:[%s5 + $0x298] sm:$0xff]
    %v2617 = vld [vmem:[%s5 + $0x2a0] sm:$0xff]
    %v2618 = vld [vmem:[%s5 + $0x2a8] sm:$0xff]
    %v2619 = vld [vmem:[%s5 + $0x2b0] sm:$0xff]
    %v2620 = vld [vmem:[%s5 + $0x2b8] sm:$0xff]
    %v2621 = vld [vmem:[%s5 + $0x2c0] sm:$0xff]
    %v2622 = vld [vmem:[%s5 + $0x2c8] sm:$0xff]
    %v2623 = vld [vmem:[%s5 + $0x2d0] sm:$0xff]
    %v2624 = vld [vmem:[%s5 + $0x2d8] sm:$0xff]
    %v2625 = vld [vmem:[%s5 + $0x2e0] sm:$0xff]
    %v2626 = vld [vmem:[%s5 + $0x2e8] sm:$0xff]
    %v2627 = vld [vmem:[%s5 + $0x2f0] sm:$0xff]
    %v2628 = vld [vmem:[%s5 + $0x2f8] sm:$0xff]
    %v2629 = vld [vmem:[#allocation10] sm:$0x3]
    %v2631 = vlaneseq
    %v2632 = vshrl.u32 %v2631, 7
    %v2633 = vsub.s32 0, %v2632
    %v2634 = vrot.slane %v2629, %v2633
    %v2635 = vlaneseq
    %v2636 = vshrl.u32 %v2635, 7
    %v2637 = vsub.s32 1, %v2636
    %v2638 = vrot.slane %v2629, %v2637
    %v2737 = vunpack.c.l.b16 %v2533
    %v2738 = vunpack.c.h.b16 %v2533
    %v2739 = vunpack.c.l.b16 %v2534
    %v2740 = vunpack.c.h.b16 %v2534
    %v2741 = vunpack.c.l.b16 %v2535
    %v2742 = vunpack.c.h.b16 %v2535
    %v2743 = vunpack.c.l.b16 %v2536
    %v2744 = vunpack.c.h.b16 %v2536
    %v2745 = vunpack.c.l.b16 %v2537
    %v2746 = vunpack.c.h.b16 %v2537
    %v2747 = vunpack.c.l.b16 %v2538
    %v2748 = vunpack.c.h.b16 %v2538
    %v2749 = vunpack.c.l.b16 %v2539
    %v2750 = vunpack.c.h.b16 %v2539
    %v2751 = vunpack.c.l.b16 %v2540
    %v2752 = vunpack.c.h.b16 %v2540
    %v2753 = vunpack.c.l.b16 %v2541
    %v2754 = vunpack.c.h.b16 %v2541
    %v2755 = vunpack.c.l.b16 %v2542
    %v2756 = vunpack.c.h.b16 %v2542
    %v2757 = vunpack.c.l.b16 %v2543
    %v2758 = vunpack.c.h.b16 %v2543
    %v2759 = vunpack.c.l.b16 %v2544
    %v2760 = vunpack.c.h.b16 %v2544
    %v2761 = vunpack.c.l.b16 %v2545
    %v2762 = vunpack.c.h.b16 %v2545
    %v2763 = vunpack.c.l.b16 %v2546
    %v2764 = vunpack.c.h.b16 %v2546
    %v2765 = vunpack.c.l.b16 %v2547
    %v2766 = vunpack.c.h.b16 %v2547
    %v2767 = vunpack.c.l.b16 %v2548
    %v2768 = vunpack.c.h.b16 %v2548
    %v2769 = vunpack.c.l.b16 %v2549
    %v2770 = vunpack.c.h.b16 %v2549
    %v2771 = vunpack.c.l.b16 %v2550
    %v2772 = vunpack.c.h.b16 %v2550
    %v2773 = vunpack.c.l.b16 %v2551
    %v2774 = vunpack.c.h.b16 %v2551
    %v2775 = vunpack.c.l.b16 %v2552
    %v2776 = vunpack.c.h.b16 %v2552
    %v2777 = vunpack.c.l.b16 %v2553
    %v2778 = vunpack.c.h.b16 %v2553
    %v2779 = vunpack.c.l.b16 %v2554
    %v2780 = vunpack.c.h.b16 %v2554
    %v2781 = vunpack.c.l.b16 %v2555
    %v2782 = vunpack.c.h.b16 %v2555
    %v2783 = vunpack.c.l.b16 %v2556
    %v2784 = vunpack.c.h.b16 %v2556
    %v2785 = vunpack.c.l.b16 %v2557
    %v2786 = vunpack.c.h.b16 %v2557
    %v2787 = vunpack.c.l.b16 %v2558
    %v2788 = vunpack.c.h.b16 %v2558
    %v2789 = vunpack.c.l.b16 %v2559
    %v2790 = vunpack.c.h.b16 %v2559
    %v2791 = vunpack.c.l.b16 %v2560
    %v2792 = vunpack.c.h.b16 %v2560
    %v2793 = vunpack.c.l.b16 %v2561
    %v2794 = vunpack.c.h.b16 %v2561
    %v2795 = vunpack.c.l.b16 %v2562
    %v2796 = vunpack.c.h.b16 %v2562
    %v2797 = vunpack.c.l.b16 %v2563
    %v2798 = vunpack.c.h.b16 %v2563
    %v2799 = vunpack.c.l.b16 %v2564
    %v2800 = vunpack.c.h.b16 %v2564
    %v2801 = vunpack.c.l.b16 %v2565
    %v2802 = vunpack.c.h.b16 %v2565
    %v2803 = vunpack.c.l.b16 %v2566
    %v2804 = vunpack.c.h.b16 %v2566
    %v2805 = vunpack.c.l.b16 %v2567
    %v2806 = vunpack.c.h.b16 %v2567
    %v2807 = vunpack.c.l.b16 %v2568
    %v2808 = vunpack.c.h.b16 %v2568
    %v2809 = vunpack.c.l.b16 %v2569
    %v2810 = vunpack.c.h.b16 %v2569
    %v2811 = vunpack.c.l.b16 %v2570
    %v2812 = vunpack.c.h.b16 %v2570
    %v2813 = vunpack.c.l.b16 %v2571
    %v2814 = vunpack.c.h.b16 %v2571
    %v2815 = vunpack.c.l.b16 %v2572
    %v2816 = vunpack.c.h.b16 %v2572
    %v2817 = vunpack.c.l.b16 %v2573
    %v2818 = vunpack.c.h.b16 %v2573
    %v2819 = vunpack.c.l.b16 %v2574
    %v2820 = vunpack.c.h.b16 %v2574
    %v2821 = vunpack.c.l.b16 %v2575
    %v2822 = vunpack.c.h.b16 %v2575
    %v2823 = vunpack.c.l.b16 %v2576
    %v2824 = vunpack.c.h.b16 %v2576
    %v2825 = vunpack.c.l.b16 %v2577
    %v2826 = vunpack.c.h.b16 %v2577
    %v2827 = vunpack.c.l.b16 %v2578
    %v2828 = vunpack.c.h.b16 %v2578
    %v2829 = vunpack.c.l.b16 %v2579
    %v2830 = vunpack.c.h.b16 %v2579
    %v2831 = vunpack.c.l.b16 %v2580
    %v2832 = vunpack.c.h.b16 %v2580
    %v2833 = vunpack.c.l.b16 %v2581
    %v2834 = vunpack.c.h.b16 %v2581
    %v2835 = vunpack.c.l.b16 %v2582
    %v2836 = vunpack.c.h.b16 %v2582
    %v2837 = vunpack.c.l.b16 %v2583
    %v2838 = vunpack.c.h.b16 %v2583
    %v2839 = vunpack.c.l.b16 %v2584
    %v2840 = vunpack.c.h.b16 %v2584
    %v2841 = vunpack.c.l.b16 %v2585
    %v2842 = vunpack.c.h.b16 %v2585
    %v2843 = vunpack.c.l.b16 %v2586
    %v2844 = vunpack.c.h.b16 %v2586
    %v2845 = vunpack.c.l.b16 %v2587
    %v2846 = vunpack.c.h.b16 %v2587
    %v2847 = vunpack.c.l.b16 %v2588
    %v2848 = vunpack.c.h.b16 %v2588
    %v2849 = vunpack.c.l.b16 %v2589
    %v2850 = vunpack.c.h.b16 %v2589
    %v2851 = vunpack.c.l.b16 %v2590
    %v2852 = vunpack.c.h.b16 %v2590
    %v2853 = vunpack.c.l.b16 %v2591
    %v2854 = vunpack.c.h.b16 %v2591
    %v2855 = vunpack.c.l.b16 %v2592
    %v2856 = vunpack.c.h.b16 %v2592
    %v2857 = vunpack.c.l.b16 %v2593
    %v2858 = vunpack.c.h.b16 %v2593
    %v2859 = vunpack.c.l.b16 %v2594
    %v2860 = vunpack.c.h.b16 %v2594
    %v2861 = vunpack.c.l.b16 %v2595
    %v2862 = vunpack.c.h.b16 %v2595
    %v2863 = vunpack.c.l.b16 %v2596
    %v2864 = vunpack.c.h.b16 %v2596
    %v2865 = vunpack.c.l.b16 %v2597
    %v2866 = vunpack.c.h.b16 %v2597
    %v2867 = vunpack.c.l.b16 %v2598
    %v2868 = vunpack.c.h.b16 %v2598
    %v2869 = vunpack.c.l.b16 %v2599
    %v2870 = vunpack.c.h.b16 %v2599
    %v2871 = vunpack.c.l.b16 %v2600
    %v2872 = vunpack.c.h.b16 %v2600
    %v2873 = vunpack.c.l.b16 %v2601
    %v2874 = vunpack.c.h.b16 %v2601
    %v2875 = vunpack.c.l.b16 %v2602
    %v2876 = vunpack.c.h.b16 %v2602
    %v2877 = vunpack.c.l.b16 %v2603
    %v2878 = vunpack.c.h.b16 %v2603
    %v2879 = vunpack.c.l.b16 %v2604
    %v2880 = vunpack.c.h.b16 %v2604
    %v2881 = vunpack.c.l.b16 %v2605
    %v2882 = vunpack.c.h.b16 %v2605
    %v2883 = vunpack.c.l.b16 %v2606
    %v2884 = vunpack.c.h.b16 %v2606
    %v2885 = vunpack.c.l.b16 %v2607
    %v2886 = vunpack.c.h.b16 %v2607
    %v2887 = vunpack.c.l.b16 %v2608
    %v2888 = vunpack.c.h.b16 %v2608
    %v2889 = vunpack.c.l.b16 %v2609
    %v2890 = vunpack.c.h.b16 %v2609
    %v2891 = vunpack.c.l.b16 %v2610
    %v2892 = vunpack.c.h.b16 %v2610
    %v2893 = vunpack.c.l.b16 %v2611
    %v2894 = vunpack.c.h.b16 %v2611
    %v2895 = vunpack.c.l.b16 %v2612
    %v2896 = vunpack.c.h.b16 %v2612
    %v2897 = vunpack.c.l.b16 %v2613
    %v2898 = vunpack.c.h.b16 %v2613
    %v2899 = vunpack.c.l.b16 %v2614
    %v2900 = vunpack.c.h.b16 %v2614
    %v2901 = vunpack.c.l.b16 %v2615
    %v2902 = vunpack.c.h.b16 %v2615
    %v2903 = vunpack.c.l.b16 %v2616
    %v2904 = vunpack.c.h.b16 %v2616
    %v2905 = vunpack.c.l.b16 %v2617
    %v2906 = vunpack.c.h.b16 %v2617
    %v2907 = vunpack.c.l.b16 %v2618
    %v2908 = vunpack.c.h.b16 %v2618
    %v2909 = vunpack.c.l.b16 %v2619
    %v2910 = vunpack.c.h.b16 %v2619
    %v2911 = vunpack.c.l.b16 %v2620
    %v2912 = vunpack.c.h.b16 %v2620
    %v2913 = vunpack.c.l.b16 %v2621
    %v2914 = vunpack.c.h.b16 %v2621
    %v2915 = vunpack.c.l.b16 %v2622
    %v2916 = vunpack.c.h.b16 %v2622
    %v2917 = vunpack.c.l.b16 %v2623
    %v2918 = vunpack.c.h.b16 %v2623
    %v2919 = vunpack.c.l.b16 %v2624
    %v2920 = vunpack.c.h.b16 %v2624
    %v2921 = vunpack.c.l.b16 %v2625
    %v2922 = vunpack.c.h.b16 %v2625
    %v2923 = vunpack.c.l.b16 %v2626
    %v2924 = vunpack.c.h.b16 %v2626
    %v2925 = vunpack.c.l.b16 %v2627
    %v2926 = vunpack.c.h.b16 %v2627
    %v2927 = vunpack.c.l.b16 %v2628
    %v2928 = vunpack.c.h.b16 %v2628
    %v2929 = vpack.c.b16 %v2739, %v2737
    %v2930 = vpack.c.b16 %v2740, %v2738
    %v2931 = vpack.c.b16 %v2743, %v2741
    %v2932 = vpack.c.b16 %v2744, %v2742
    %v2933 = vpack.c.b16 %v2747, %v2745
    %v2934 = vpack.c.b16 %v2748, %v2746
    %v2935 = vpack.c.b16 %v2751, %v2749
    %v2936 = vpack.c.b16 %v2752, %v2750
    %v2937 = vpack.c.b16 %v2755, %v2753
    %v2938 = vpack.c.b16 %v2756, %v2754
    %v2939 = vpack.c.b16 %v2759, %v2757
    %v2940 = vpack.c.b16 %v2760, %v2758
    %v2941 = vpack.c.b16 %v2763, %v2761
    %v2942 = vpack.c.b16 %v2764, %v2762
    %v2943 = vpack.c.b16 %v2767, %v2765
    %v2944 = vpack.c.b16 %v2768, %v2766
    %v2945 = vpack.c.b16 %v2771, %v2769
    %v2946 = vpack.c.b16 %v2772, %v2770
    %v2947 = vpack.c.b16 %v2775, %v2773
    %v2948 = vpack.c.b16 %v2776, %v2774
    %v2949 = vpack.c.b16 %v2779, %v2777
    %v2950 = vpack.c.b16 %v2780, %v2778
    %v2951 = vpack.c.b16 %v2783, %v2781
    %v2952 = vpack.c.b16 %v2784, %v2782
    %v2953 = vpack.c.b16 %v2787, %v2785
    %v2954 = vpack.c.b16 %v2788, %v2786
    %v2955 = vpack.c.b16 %v2791, %v2789
    %v2956 = vpack.c.b16 %v2792, %v2790
    %v2957 = vpack.c.b16 %v2795, %v2793
    %v2958 = vpack.c.b16 %v2796, %v2794
    %v2959 = vpack.c.b16 %v2799, %v2797
    %v2960 = vpack.c.b16 %v2800, %v2798
    %v2961 = vpack.c.b16 %v2803, %v2801
    %v2962 = vpack.c.b16 %v2804, %v2802
    %v2963 = vpack.c.b16 %v2807, %v2805
    %v2964 = vpack.c.b16 %v2808, %v2806
    %v2965 = vpack.c.b16 %v2811, %v2809
    %v2966 = vpack.c.b16 %v2812, %v2810
    %v2967 = vpack.c.b16 %v2815, %v2813
    %v2968 = vpack.c.b16 %v2816, %v2814
    %v2969 = vpack.c.b16 %v2819, %v2817
    %v2970 = vpack.c.b16 %v2820, %v2818
    %v2971 = vpack.c.b16 %v2823, %v2821
    %v2972 = vpack.c.b16 %v2824, %v2822
    %v2973 = vpack.c.b16 %v2827, %v2825
    %v2974 = vpack.c.b16 %v2828, %v2826
    %v2975 = vpack.c.b16 %v2831, %v2829
    %v2976 = vpack.c.b16 %v2832, %v2830
    %v2977 = vpack.c.b16 %v2835, %v2833
    %v2978 = vpack.c.b16 %v2836, %v2834
    %v2979 = vpack.c.b16 %v2839, %v2837
    %v2980 = vpack.c.b16 %v2840, %v2838
    %v2981 = vpack.c.b16 %v2843, %v2841
    %v2982 = vpack.c.b16 %v2844, %v2842
    %v2983 = vpack.c.b16 %v2847, %v2845
    %v2984 = vpack.c.b16 %v2848, %v2846
    %v2985 = vpack.c.b16 %v2851, %v2849
    %v2986 = vpack.c.b16 %v2852, %v2850
    %v2987 = vpack.c.b16 %v2855, %v2853
    %v2988 = vpack.c.b16 %v2856, %v2854
    %v2989 = vpack.c.b16 %v2859, %v2857
    %v2990 = vpack.c.b16 %v2860, %v2858
    %v2991 = vpack.c.b16 %v2863, %v2861
    %v2992 = vpack.c.b16 %v2864, %v2862
    %v2993 = vpack.c.b16 %v2867, %v2865
    %v2994 = vpack.c.b16 %v2868, %v2866
    %v2995 = vpack.c.b16 %v2871, %v2869
    %v2996 = vpack.c.b16 %v2872, %v2870
    %v2997 = vpack.c.b16 %v2875, %v2873
    %v2998 = vpack.c.b16 %v2876, %v2874
    %v2999 = vpack.c.b16 %v2879, %v2877
    %v3000 = vpack.c.b16 %v2880, %v2878
    %v3001 = vpack.c.b16 %v2883, %v2881
    %v3002 = vpack.c.b16 %v2884, %v2882
    %v3003 = vpack.c.b16 %v2887, %v2885
    %v3004 = vpack.c.b16 %v2888, %v2886
    %v3005 = vpack.c.b16 %v2891, %v2889
    %v3006 = vpack.c.b16 %v2892, %v2890
    %v3007 = vpack.c.b16 %v2895, %v2893
    %v3008 = vpack.c.b16 %v2896, %v2894
    %v3009 = vpack.c.b16 %v2899, %v2897
    %v3010 = vpack.c.b16 %v2900, %v2898
    %v3011 = vpack.c.b16 %v2903, %v2901
    %v3012 = vpack.c.b16 %v2904, %v2902
    %v3013 = vpack.c.b16 %v2907, %v2905
    %v3014 = vpack.c.b16 %v2908, %v2906
    %v3015 = vpack.c.b16 %v2911, %v2909
    %v3016 = vpack.c.b16 %v2912, %v2910
    %v3017 = vpack.c.b16 %v2915, %v2913
    %v3018 = vpack.c.b16 %v2916, %v2914
    %v3019 = vpack.c.b16 %v2919, %v2917
    %v3020 = vpack.c.b16 %v2920, %v2918
    %v3021 = vpack.c.b16 %v2923, %v2921
    %v3022 = vpack.c.b16 %v2924, %v2922
    %v3023 = vpack.c.b16 %v2927, %v2925
    %v3024 = vpack.c.b16 %v2928, %v2926
    %3121 = vmatprep.subr.bf16.mxu0 %v2944
    %3122 = vmatpush1.bf16.msra.mxu0 %v2943
    %3123 = vmatprep.subr.bf16.mxu0 %v2942
    %3124 = vmatpush1.bf16.msra.mxu0 %v2941
    %3125 = vmatprep.subr.bf16.mxu0 %v2940
    %3126 = vmatpush1.bf16.msra.mxu0 %v2939
    %3127 = vmatprep.subr.bf16.mxu0 %v2938
    %3128 = vmatpush1.bf16.msra.mxu0 %v2937
    %3129 = vmatprep.subr.bf16.mxu0 %v2936
    %3130 = vmatpush1.bf16.msra.mxu0 %v2935
    %3131 = vmatprep.subr.bf16.mxu0 %v2934
    %3132 = vmatpush1.bf16.msra.mxu0 %v2933
    %3133 = vmatprep.subr.bf16.mxu0 %v2932
    %3134 = vmatpush1.bf16.msra.mxu0 %v2931
    %3135 = vmatprep.subr.bf16.mxu0 %v2930
    %3136 = vmatpush1.bf16.msra.mxu0 %v2929
    %3137 = vmatprep.subr.bf16.mxu0 %v2960
    %3138 = vmatpush2.bf16.msra.mxu0 %v2959
    %3139 = vmatprep.subr.bf16.mxu0 %v2958
    %3140 = vmatpush2.bf16.msra.mxu0 %v2957
    %3141 = vmatprep.subr.bf16.mxu0 %v2956
    %3142 = vmatpush2.bf16.msra.mxu0 %v2955
    %3143 = vmatprep.subr.bf16.mxu0 %v2954
    %3144 = vmatpush2.bf16.msra.mxu0 %v2953
    %3145 = vmatprep.subr.bf16.mxu0 %v2952
    %3146 = vmatpush2.bf16.msra.mxu0 %v2951
    %3147 = vmatprep.subr.bf16.mxu0 %v2950
    %3148 = vmatpush2.bf16.msra.mxu0 %v2949
    %3149 = vmatprep.subr.bf16.mxu0 %v2948
    %3150 = vmatpush2.bf16.msra.mxu0 %v2947
    %3151 = vmatprep.subr.bf16.mxu0 %v2946
    %3152 = vmatpush2.bf16.msra.mxu0 %v2945
    %3153 = vmatprep.mubr.bf16.mxu0 %v2528
    %3154 = vmatmul.mubr.bf16.gmra.mxu0 %v2527
    %v3155 = vpop.f32.mrf.mxu0
    %v3156 = vadd.f32 %v2634, %v3155
    %v3157 = vpop.f32.mrf.mxu0
    %v3158 = vadd.f32 %v2638, %v3157
    %v3159 = vpop.f32.mrf.mxu0
    %v3160 = vpop.f32.mrf.mxu0
    %3161 = vdwg.mxu0
    %3162 = vmatprep.subr.bf16.mxu0 %v2976
    %3163 = vmatpush1.bf16.msra.mxu0 %v2975
    %3164 = vmatprep.subr.bf16.mxu0 %v2974
    %3165 = vmatpush1.bf16.msra.mxu0 %v2973
    %3166 = vmatprep.subr.bf16.mxu0 %v2972
    %3167 = vmatpush1.bf16.msra.mxu0 %v2971
    %3168 = vmatprep.subr.bf16.mxu0 %v2970
    %3169 = vmatpush1.bf16.msra.mxu0 %v2969
    %3170 = vmatprep.subr.bf16.mxu0 %v2968
    %3171 = vmatpush1.bf16.msra.mxu0 %v2967
    %3172 = vmatprep.subr.bf16.mxu0 %v2966
    %3173 = vmatpush1.bf16.msra.mxu0 %v2965
    %3174 = vmatprep.subr.bf16.mxu0 %v2964
    %3175 = vmatpush1.bf16.msra.mxu0 %v2963
    %3176 = vmatprep.subr.bf16.mxu0 %v2962
    %3177 = vmatpush1.bf16.msra.mxu0 %v2961
    %3178 = vmatprep.subr.bf16.mxu0 %v2992
    %3179 = vmatpush2.bf16.msra.mxu0 %v2991
    %3180 = vmatprep.subr.bf16.mxu0 %v2990
    %3181 = vmatpush2.bf16.msra.mxu0 %v2989
    %3182 = vmatprep.subr.bf16.mxu0 %v2988
    %3183 = vmatpush2.bf16.msra.mxu0 %v2987
    %3184 = vmatprep.subr.bf16.mxu0 %v2986
    %3185 = vmatpush2.bf16.msra.mxu0 %v2985
    %3186 = vmatprep.subr.bf16.mxu0 %v2984
    %3187 = vmatpush2.bf16.msra.mxu0 %v2983
    %3188 = vmatprep.subr.bf16.mxu0 %v2982
    %3189 = vmatpush2.bf16.msra.mxu0 %v2981
    %3190 = vmatprep.subr.bf16.mxu0 %v2980
    %3191 = vmatpush2.bf16.msra.mxu0 %v2979
    %3192 = vmatprep.subr.bf16.mxu0 %v2978
    %3193 = vmatpush2.bf16.msra.mxu0 %v2977
    %3194 = vmatprep.mubr.bf16.mxu0 %v2530
    %3195 = vmatmul.mubr.bf16.gmra.mxu0 %v2529
    %v3196 = vpop.f32.mrf.mxu0
    %v3197 = vadd.f32 %v3156, %v3196
    %v3198 = vpop.f32.mrf.mxu0
    %v3199 = vadd.f32 %v3158, %v3198
    %v3200 = vpop.f32.mrf.mxu0
    %v3201 = vpop.f32.mrf.mxu0
    %3202 = vdwg.mxu0
    %3203 = vmatprep.subr.bf16.mxu0 %v3008
    %3204 = vmatpush1.bf16.msra.mxu0 %v3007
    %3205 = vmatprep.subr.bf16.mxu0 %v3006
    %3206 = vmatpush1.bf16.msra.mxu0 %v3005
    %3207 = vmatprep.subr.bf16.mxu0 %v3004
    %3208 = vmatpush1.bf16.msra.mxu0 %v3003
    %3209 = vmatprep.subr.bf16.mxu0 %v3002
    %3210 = vmatpush1.bf16.msra.mxu0 %v3001
    %3211 = vmatprep.subr.bf16.mxu0 %v3000
    %3212 = vmatpush1.bf16.msra.mxu0 %v2999
    %3213 = vmatprep.subr.bf16.mxu0 %v2998
    %3214 = vmatpush1.bf16.msra.mxu0 %v2997
    %3215 = vmatprep.subr.bf16.mxu0 %v2996
    %3216 = vmatpush1.bf16.msra.mxu0 %v2995
    %3217 = vmatprep.subr.bf16.mxu0 %v2994
    %3218 = vmatpush1.bf16.msra.mxu0 %v2993
    %3219 = vmatprep.subr.bf16.mxu0 %v3024
    %3220 = vmatpush2.bf16.msra.mxu0 %v3023
    %3221 = vmatprep.subr.bf16.mxu0 %v3022
    %3222 = vmatpush2.bf16.msra.mxu0 %v3021
    %3223 = vmatprep.subr.bf16.mxu0 %v3020
    %3224 = vmatpush2.bf16.msra.mxu0 %v3019
    %3225 = vmatprep.subr.bf16.mxu0 %v3018
    %3226 = vmatpush2.bf16.msra.mxu0 %v3017
    %3227 = vmatprep.subr.bf16.mxu0 %v3016
    %3228 = vmatpush2.bf16.msra.mxu0 %v3015
    %3229 = vmatprep.subr.bf16.mxu0 %v3014
    %3230 = vmatpush2.bf16.msra.mxu0 %v3013
    %3231 = vmatprep.subr.bf16.mxu0 %v3012
    %3232 = vmatpush2.bf16.msra.mxu0 %v3011
    %3233 = vmatprep.subr.bf16.mxu0 %v3010
    %3234 = vmatpush2.bf16.msra.mxu0 %v3009
    %3235 = vmatprep.mubr.bf16.mxu0 %v2532
    %3236 = vmatmul.mubr.bf16.gmra.mxu0 %v2531
    %v3237 = vpop.f32.mrf.mxu0
    %v3238 = vadd.f32 %v3197, %v3237
    %v3239 = vpop.f32.mrf.mxu0
    %v3240 = vadd.f32 %v3199, %v3239
    %v3241 = vpop.f32.mrf.mxu0
    %v3242 = vpop.f32.mrf.mxu0
    %3243 = vdwg.mxu0
    %v3244 = vld [vmem:[#allocation11] sm:$0x3]
    %v3245 = vld [vmem:[#allocation13] sm:$0x3]
    %v3246 = vsel %vm2380, %v3238, 0.0
    %vm3247 = vcmask 517120
    %v3248 = vsel %vm3247, %v3240, 0.0
    %v3249 = vadd.f32 %v3246, %v3248
    %3250 = vadd.xlane.f32.xlu0 %v3249
    %v3251 = vpop.xlane.xlu0 %3250
    %v3252 = vmul.f32 %v3251, 0.0052083335
    %v3253 = vsub.f32 %v3238, %v3252
    %v3254 = vsub.f32 %v3240, %v3252
    %v3255 = vmul.f32 %v3253, %v3253
    %v3256 = vmul.f32 %v3254, %v3254
    %v3257 = vsel %vm2380, %v3255, 0.0
    %v3258 = vsel %vm3247, %v3256, 0.0
    %v3259 = vadd.f32 %v3257, %v3258
    %3260 = vadd.xlane.f32.xlu0 %v3259
    %v3261 = vpop.xlane.xlu0 %3260
    %v3262 = vmul.f32 %v3261, 0.0052083335
    %v3263 = vadd.f32 %v3262, 1e-05
    %v3264 = vrsqrt.pop %v3263
    %v3265 = vmul.f32 %v3253, %v3264
    %v3266 = vmul.f32 %v3254, %v3264
    %v3268 = vlaneseq
    %v3269 = vshrl.u32 %v3268, 7
    %v3270 = vsub.s32 0, %v3269
    %v3271 = vrot.slane %v3244, %v3270
    %v3272 = vlaneseq
    %v3273 = vshrl.u32 %v3272, 7
    %v3274 = vsub.s32 1, %v3273
    %v3275 = vrot.slane %v3244, %v3274
    %v3278 = vmul.f32 %v3265, %v3271
    %v3279 = vmul.f32 %v3266, %v3275
    %v3281 = vlaneseq
    %v3282 = vshrl.u32 %v3281, 7
    %v3283 = vsub.s32 0, %v3282
    %v3284 = vrot.slane %v3245, %v3283
    %v3285 = vlaneseq
    %v3286 = vshrl.u32 %v3285, 7
    %v3287 = vsub.s32 1, %v3286
    %v3288 = vrot.slane %v3245, %v3287
    %v3291 = vadd.f32 %v3278, %v3284
    %v3292 = vadd.f32 %v3279, %v3288
    %v3293 = vmul.f32 %v3291, 0.5
    %v3294 = vmul.f32 %v3292, 0.5
    %v3295 = vtanh.pop %v3293
    %v3296 = vtanh.pop %v3294
    %v3297 = vmul.f32 %v3295, 0.5
    %v3298 = vmul.f32 %v3296, 0.5
    %v3299 = vadd.f32 %v3297, 0.5
    %v3300 = vadd.f32 %v3298, 0.5
    %v3301 = vpack.c.bf16 %v3299, %v3299
    %v3302 = vpack.c.bf16 %v3300, %v3300
    %v3303 = vld [vmem:[#allocation14] sm:$0xff]
    %v3304 = vld [vmem:[#allocation14 + $0x8] sm:$0xff]
    %v3305 = vld [vmem:[#allocation14 + $0x10] sm:$0xff]
    %v3306 = vld [vmem:[#allocation14 + $0x18] sm:$0xff]
    %v3307 = vld [vmem:[#allocation14 + $0x20] sm:$0xff]
    %v3308 = vld [vmem:[#allocation14 + $0x28] sm:$0xff]
    %v3309 = vld [vmem:[#allocation14 + $0x30] sm:$0xff]
    %v3310 = vld [vmem:[#allocation14 + $0x38] sm:$0xff]
    %v3311 = vld [vmem:[#allocation14 + $0x40] sm:$0xff]
    %v3312 = vld [vmem:[#allocation14 + $0x48] sm:$0xff]
    %v3313 = vld [vmem:[#allocation14 + $0x50] sm:$0xff]
    %v3314 = vld [vmem:[#allocation14 + $0x58] sm:$0xff]
    %v3315 = vld [vmem:[#allocation14 + $0x60] sm:$0xff]
    %v3316 = vld [vmem:[#allocation14 + $0x68] sm:$0xff]
    %v3317 = vld [vmem:[#allocation14 + $0x70] sm:$0xff]
    %v3318 = vld [vmem:[#allocation14 + $0x78] sm:$0xff]
    %v3319 = vld [vmem:[#allocation14 + $0x80] sm:$0xff]
    %v3320 = vld [vmem:[#allocation14 + $0x88] sm:$0xff]
    %v3321 = vld [vmem:[#allocation14 + $0x90] sm:$0xff]
    %v3322 = vld [vmem:[#allocation14 + $0x98] sm:$0xff]
    %v3323 = vld [vmem:[#allocation14 + $0xa0] sm:$0xff]
    %v3324 = vld [vmem:[#allocation14 + $0xa8] sm:$0xff]
    %v3325 = vld [vmem:[#allocation14 + $0xb0] sm:$0xff]
    %v3326 = vld [vmem:[#allocation14 + $0xb8] sm:$0xff]
    %v3327 = vld [vmem:[#allocation16] sm:$0x3]
    %v3329 = vlaneseq
    %v3330 = vshrl.u32 %v3329, 7
    %v3331 = vsub.s32 0, %v3330
    %v3332 = vrot.slane %v3327, %v3331
    %v3333 = vlaneseq
    %v3334 = vshrl.u32 %v3333, 7
    %v3335 = vsub.s32 1, %v3334
    %v3336 = vrot.slane %v3327, %v3335
    %v3363 = vunpack.c.l.b16 %v3303
    %v3364 = vunpack.c.h.b16 %v3303
    %v3365 = vunpack.c.l.b16 %v3304
    %v3366 = vunpack.c.h.b16 %v3304
    %v3367 = vunpack.c.l.b16 %v3305
    %v3368 = vunpack.c.h.b16 %v3305
    %v3369 = vunpack.c.l.b16 %v3306
    %v3370 = vunpack.c.h.b16 %v3306
    %v3371 = vunpack.c.l.b16 %v3307
    %v3372 = vunpack.c.h.b16 %v3307
    %v3373 = vunpack.c.l.b16 %v3308
    %v3374 = vunpack.c.h.b16 %v3308
    %v3375 = vunpack.c.l.b16 %v3309
    %v3376 = vunpack.c.h.b16 %v3309
    %v3377 = vunpack.c.l.b16 %v3310
    %v3378 = vunpack.c.h.b16 %v3310
    %v3379 = vunpack.c.l.b16 %v3311
    %v3380 = vunpack.c.h.b16 %v3311
    %v3381 = vunpack.c.l.b16 %v3312
    %v3382 = vunpack.c.h.b16 %v3312
    %v3383 = vunpack.c.l.b16 %v3313
    %v3384 = vunpack.c.h.b16 %v3313
    %v3385 = vunpack.c.l.b16 %v3314
    %v3386 = vunpack.c.h.b16 %v3314
    %v3387 = vunpack.c.l.b16 %v3315
    %v3388 = vunpack.c.h.b16 %v3315
    %v3389 = vunpack.c.l.b16 %v3316
    %v3390 = vunpack.c.h.b16 %v3316
    %v3391 = vunpack.c.l.b16 %v3317
    %v3392 = vunpack.c.h.b16 %v3317
    %v3393 = vunpack.c.l.b16 %v3318
    %v3394 = vunpack.c.h.b16 %v3318
    %v3395 = vunpack.c.l.b16 %v3319
    %v3396 = vunpack.c.h.b16 %v3319
    %v3397 = vunpack.c.l.b16 %v3320
    %v3398 = vunpack.c.h.b16 %v3320
    %v3399 = vunpack.c.l.b16 %v3321
    %v3400 = vunpack.c.h.b16 %v3321
    %v3401 = vunpack.c.l.b16 %v3322
    %v3402 = vunpack.c.h.b16 %v3322
    %v3403 = vunpack.c.l.b16 %v3323
    %v3404 = vunpack.c.h.b16 %v3323
    %v3405 = vunpack.c.l.b16 %v3324
    %v3406 = vunpack.c.h.b16 %v3324
    %v3407 = vunpack.c.l.b16 %v3325
    %v3408 = vunpack.c.h.b16 %v3325
    %v3409 = vunpack.c.l.b16 %v3326
    %v3410 = vunpack.c.h.b16 %v3326
    %v3411 = vpack.c.b16 %v3365, %v3363
    %v3412 = vpack.c.b16 %v3366, %v3364
    %v3413 = vpack.c.b16 %v3369, %v3367
    %v3414 = vpack.c.b16 %v3370, %v3368
    %v3415 = vpack.c.b16 %v3373, %v3371
    %v3416 = vpack.c.b16 %v3374, %v3372
    %v3417 = vpack.c.b16 %v3377, %v3375
    %v3418 = vpack.c.b16 %v3378, %v3376
    %v3419 = vpack.c.b16 %v3381, %v3379
    %v3420 = vpack.c.b16 %v3382, %v3380
    %v3421 = vpack.c.b16 %v3385, %v3383
    %v3422 = vpack.c.b16 %v3386, %v3384
    %v3423 = vpack.c.b16 %v3389, %v3387
    %v3424 = vpack.c.b16 %v3390, %v3388
    %v3425 = vpack.c.b16 %v3393, %v3391
    %v3426 = vpack.c.b16 %v3394, %v3392
    %v3427 = vpack.c.b16 %v3397, %v3395
    %v3428 = vpack.c.b16 %v3398, %v3396
    %v3429 = vpack.c.b16 %v3401, %v3399
    %v3430 = vpack.c.b16 %v3402, %v3400
    %v3431 = vpack.c.b16 %v3405, %v3403
    %v3432 = vpack.c.b16 %v3406, %v3404
    %v3433 = vpack.c.b16 %v3409, %v3407
    %v3434 = vpack.c.b16 %v3410, %v3408
    %vm3459 = vcmask 523264
    %v3461 = vsel %vm3459, %v3302, 0
    %3463 = vmatprep.subr.bf16.mxu0 %v3426
    %3464 = vmatpush1.bf16.msra.mxu0 %v3425
    %3465 = vmatprep.subr.bf16.mxu0 %v3424
    %3466 = vmatpush1.bf16.msra.mxu0 %v3423
    %3467 = vmatprep.subr.bf16.mxu0 %v3422
    %3468 = vmatpush1.bf16.msra.mxu0 %v3421
    %3469 = vmatprep.subr.bf16.mxu0 %v3420
    %3470 = vmatpush1.bf16.msra.mxu0 %v3419
    %3471 = vmatprep.subr.bf16.mxu0 %v3418
    %3472 = vmatpush1.bf16.msra.mxu0 %v3417
    %3473 = vmatprep.subr.bf16.mxu0 %v3416
    %3474 = vmatpush1.bf16.msra.mxu0 %v3415
    %3475 = vmatprep.subr.bf16.mxu0 %v3414
    %3476 = vmatpush1.bf16.msra.mxu0 %v3413
    %3477 = vmatprep.subr.bf16.mxu0 %v3412
    %3478 = vmatpush1.bf16.msra.mxu0 %v3411
    %3479 = vmatprep.subr.bf16.mxu0 0
    %3480 = vmatpush2.bf16.msra.mxu0 0
    %3481 = vmatprep.subr.bf16.mxu0 0
    %3482 = vmatpush2.bf16.msra.mxu0 0
    %3483 = vmatprep.subr.bf16.mxu0 0
    %3484 = vmatpush2.bf16.msra.mxu0 0
    %3485 = vmatprep.subr.bf16.mxu0 0
    %3486 = vmatpush2.bf16.msra.mxu0 0
    %3487 = vmatprep.subr.bf16.mxu0 %v3434
    %3488 = vmatpush2.bf16.msra.mxu0 %v3433
    %3489 = vmatprep.subr.bf16.mxu0 %v3432
    %3490 = vmatpush2.bf16.msra.mxu0 %v3431
    %3491 = vmatprep.subr.bf16.mxu0 %v3430
    %3492 = vmatpush2.bf16.msra.mxu0 %v3429
    %3493 = vmatprep.subr.bf16.mxu0 %v3428
    %3494 = vmatpush2.bf16.msra.mxu0 %v3427
    %3495 = vmatprep.mubr.bf16.mxu0 %v3461
    %3496 = vmatmul.mubr.bf16.gmra.mxu0 %v3301
    %v3497 = vpop.f32.mrf.mxu0
    %v3498 = vadd.f32 %v3332, %v3497
    %v3499 = vpop.f32.mrf.mxu0
    %v3500 = vadd.f32 %v3336, %v3499
    %v3501 = vpop.f32.mrf.mxu0
    %v3502 = vpop.f32.mrf.mxu0
    %3503 = vdwg.mxu0
    %v3504 = vld [vmem:[#allocation17] sm:$0x3]
    %v3505 = vld [vmem:[#allocation19] sm:$0x3]
    %v3506 = vsel %vm2380, %v3498, 0.0
    %v3507 = vsel %vm3247, %v3500, 0.0
    %v3508 = vadd.f32 %v3506, %v3507
    %3509 = vadd.xlane.f32.xlu0 %v3508
    %v3510 = vpop.xlane.xlu0 %3509
    %v3511 = vmul.f32 %v3510, 0.0052083335
    %v3512 = vsub.f32 %v3498, %v3511
    %v3513 = vsub.f32 %v3500, %v3511
    %v3514 = vmul.f32 %v3512, %v3512
    %v3515 = vmul.f32 %v3513, %v3513
    %v3516 = vsel %vm2380, %v3514, 0.0
    %v3517 = vsel %vm3247, %v3515, 0.0
    %v3518 = vadd.f32 %v3516, %v3517
    %3519 = vadd.xlane.f32.xlu0 %v3518
    %v3520 = vpop.xlane.xlu0 %3519
    %v3521 = vmul.f32 %v3520, 0.0052083335
    %v3522 = vadd.f32 %v3521, 1e-05
    %v3523 = vrsqrt.pop %v3522
    %v3524 = vmul.f32 %v3512, %v3523
    %v3525 = vmul.f32 %v3513, %v3523
    %v3527 = vlaneseq
    %v3528 = vshrl.u32 %v3527, 7
    %v3529 = vsub.s32 0, %v3528
    %v3530 = vrot.slane %v3504, %v3529
    %v3531 = vlaneseq
    %v3532 = vshrl.u32 %v3531, 7
    %v3533 = vsub.s32 1, %v3532
    %v3534 = vrot.slane %v3504, %v3533
    %v3537 = vmul.f32 %v3524, %v3530
    %v3538 = vmul.f32 %v3525, %v3534
    %v3540 = vlaneseq
    %v3541 = vshrl.u32 %v3540, 7
    %v3542 = vsub.s32 0, %v3541
    %v3543 = vrot.slane %v3505, %v3542
    %v3544 = vlaneseq
    %v3545 = vshrl.u32 %v3544, 7
    %v3546 = vsub.s32 1, %v3545
    %v3547 = vrot.slane %v3505, %v3546
    %v3550 = vadd.f32 %v3537, %v3543
    %v3551 = vadd.f32 %v3538, %v3547
    %v3552 = vmul.f32 %v3550, 0.5
    %v3553 = vmul.f32 %v3551, 0.5
    %v3554 = vtanh.pop %v3552
    %v3555 = vtanh.pop %v3553
    %v3556 = vmul.f32 %v3554, 0.5
    %v3557 = vmul.f32 %v3555, 0.5
    %v3558 = vadd.f32 %v3556, 0.5
    %v3559 = vadd.f32 %v3557, 0.5
    %v3560 = vpack.c.bf16 %v3558, %v3558
    %v3561 = vpack.c.bf16 %v3559, %v3559
    %v3562 = vld [vmem:[#allocation20] sm:$0xf]
    %v3563 = vld [vmem:[#allocation20 + $0x4] sm:$0xf]
    %v3564 = vld [vmem:[#allocation20 + $0x8] sm:$0xf]
    %v3565 = vld [vmem:[#allocation20 + $0xc] sm:$0xf]
    %v3566 = vld [vmem:[#allocation20 + $0x10] sm:$0xf]
    %v3567 = vld [vmem:[#allocation20 + $0x14] sm:$0xf]
    %v3568 = vld [vmem:[#allocation20 + $0x18] sm:$0xf]
    %v3569 = vld [vmem:[#allocation20 + $0x1c] sm:$0xf]
    %v3570 = vld [vmem:[#allocation20 + $0x20] sm:$0xf]
    %v3571 = vld [vmem:[#allocation20 + $0x24] sm:$0xf]
    %v3572 = vld [vmem:[#allocation20 + $0x28] sm:$0xf]
    %v3573 = vld [vmem:[#allocation20 + $0x2c] sm:$0xf]
    %v3574 = vld [vmem:[#allocation20 + $0x30] sm:$0xf]
    %v3575 = vld [vmem:[#allocation20 + $0x34] sm:$0xf]
    %v3576 = vld [vmem:[#allocation20 + $0x38] sm:$0xf]
    %v3577 = vld [vmem:[#allocation20 + $0x3c] sm:$0xf]
    %v3578 = vld [vmem:[#allocation20 + $0x40] sm:$0xf]
    %v3579 = vld [vmem:[#allocation20 + $0x44] sm:$0xf]
    %v3580 = vld [vmem:[#allocation20 + $0x48] sm:$0xf]
    %v3581 = vld [vmem:[#allocation20 + $0x4c] sm:$0xf]
    %v3582 = vld [vmem:[#allocation20 + $0x50] sm:$0xf]
    %v3583 = vld [vmem:[#allocation20 + $0x54] sm:$0xf]
    %v3584 = vld [vmem:[#allocation20 + $0x58] sm:$0xf]
    %v3585 = vld [vmem:[#allocation20 + $0x5c] sm:$0xf]
    %v3586 = vld [vmem:[#allocation22] sm:$0x1]
    %v3588 = vlaneseq
    %v3589 = vshrl.u32 %v3588, 7
    %v3590 = vsub.s32 0, %v3589
    %v3591 = vrot.slane %v3586, %v3590
    %v3617 = vunpack.c.l.b16 %v3562
    %v3618 = vunpack.c.l.b16 %v3563
    %v3619 = vunpack.c.l.b16 %v3564
    %v3620 = vunpack.c.l.b16 %v3565
    %v3621 = vunpack.c.l.b16 %v3566
    %v3622 = vunpack.c.l.b16 %v3567
    %v3623 = vunpack.c.l.b16 %v3568
    %v3624 = vunpack.c.l.b16 %v3569
    %v3625 = vunpack.c.l.b16 %v3570
    %v3626 = vunpack.c.l.b16 %v3571
    %v3627 = vunpack.c.l.b16 %v3572
    %v3628 = vunpack.c.l.b16 %v3573
    %v3629 = vunpack.c.l.b16 %v3574
    %v3630 = vunpack.c.l.b16 %v3575
    %v3631 = vunpack.c.l.b16 %v3576
    %v3632 = vunpack.c.l.b16 %v3577
    %v3633 = vunpack.c.l.b16 %v3578
    %v3634 = vunpack.c.l.b16 %v3579
    %v3635 = vunpack.c.l.b16 %v3580
    %v3636 = vunpack.c.l.b16 %v3581
    %v3637 = vunpack.c.l.b16 %v3582
    %v3638 = vunpack.c.l.b16 %v3583
    %v3639 = vunpack.c.l.b16 %v3584
    %v3640 = vunpack.c.l.b16 %v3585
    %v3641 = vpack.c.b16 %v3618, %v3617
    %v3642 = vpack.c.b16 %v3620, %v3619
    %v3643 = vpack.c.b16 %v3622, %v3621
    %v3644 = vpack.c.b16 %v3624, %v3623
    %v3645 = vpack.c.b16 %v3626, %v3625
    %v3646 = vpack.c.b16 %v3628, %v3627
    %v3647 = vpack.c.b16 %v3630, %v3629
    %v3648 = vpack.c.b16 %v3632, %v3631
    %v3649 = vpack.c.b16 %v3634, %v3633
    %v3650 = vpack.c.b16 %v3636, %v3635
    %v3651 = vpack.c.b16 %v3638, %v3637
    %v3652 = vpack.c.b16 %v3640, %v3639
    %v3666 = vsel %vm3459, %v3561, 0
    %3668 = vmatprep.subr.bf16.mxu0 0
    %3669 = vmatpush1.bf16.msra.mxu0 %v3648
    %3670 = vmatprep.subr.bf16.mxu0 0
    %3671 = vmatpush1.bf16.msra.mxu0 %v3647
    %3672 = vmatprep.subr.bf16.mxu0 0
    %3673 = vmatpush1.bf16.msra.mxu0 %v3646
    %3674 = vmatprep.subr.bf16.mxu0 0
    %3675 = vmatpush1.bf16.msra.mxu0 %v3645
    %3676 = vmatprep.subr.bf16.mxu0 0
    %3677 = vmatpush1.bf16.msra.mxu0 %v3644
    %3678 = vmatprep.subr.bf16.mxu0 0
    %3679 = vmatpush1.bf16.msra.mxu0 %v3643
    %3680 = vmatprep.subr.bf16.mxu0 0
    %3681 = vmatpush1.bf16.msra.mxu0 %v3642
    %3682 = vmatprep.subr.bf16.mxu0 0
    %3683 = vmatpush1.bf16.msra.mxu0 %v3641
    %3684 = vmatprep.subr.bf16.mxu0 0
    %3685 = vmatpush2.bf16.msra.mxu0 0
    %3686 = vmatprep.subr.bf16.mxu0 0
    %3687 = vmatpush2.bf16.msra.mxu0 0
    %3688 = vmatprep.subr.bf16.mxu0 0
    %3689 = vmatpush2.bf16.msra.mxu0 0
    %3690 = vmatprep.subr.bf16.mxu0 0
    %3691 = vmatpush2.bf16.msra.mxu0 0
    %3692 = vmatprep.subr.bf16.mxu0 0
    %3693 = vmatpush2.bf16.msra.mxu0 %v3652
    %3694 = vmatprep.subr.bf16.mxu0 0
    %3695 = vmatpush2.bf16.msra.mxu0 %v3651
    %3696 = vmatprep.subr.bf16.mxu0 0
    %3697 = vmatpush2.bf16.msra.mxu0 %v3650
    %3698 = vmatprep.subr.bf16.mxu0 0
    %3699 = vmatpush2.bf16.msra.mxu0 %v3649
    %3700 = vmatprep.mubr.bf16.mxu0 %v3666
    %3701 = vmatmul.mubr.bf16.gmra.mxu0 %v3560
    %v3702 = vpop.f32.mrf.mxu0
    %v3703 = vadd.f32 %v3591, %v3702
    %v3704 = vpop.f32.mrf.mxu0
    %v3705 = vpop.f32.mrf.mxu0
    %v3706 = vpop.f32.mrf.mxu0
    %3707 = vdwg.mxu0
    %3708 = vst [vmem:[#allocation23] sm:$0x3] %v3703
    // Predicated region
    $region114: #{lenet_urban_forward.1} parent=1 // pred_check
      _
    $region115: #{lenet_urban_forward.1} parent=1 // pred_check_branch
      %3710 = sbr.rel (0) target = $region117
    $region116: #{lenet_urban_forward.1} parent=1 // pred_region
      %s3712 = ssub.s32 32, 32
      %3713 = vsyncadd [#allocation4], %s3712
      %s3715 = sshll.u32 [#allocation23], 4
      %s3716 = int_to_ptr.vmem [resolvable:$true] %s3715
      %3718 = dma.vmem_to_hbm [thread:$0]  %s3716, 32, %s15, [#allocation4]
    $region117: #{lenet_urban_forward.1} parent=1 // pred_fallthru
      _
    // Predicated region
    $region118: #{lenet_urban_forward.1} parent=1 // pred_check
      _
    $region119: #{lenet_urban_forward.1} parent=1 // pred_check_branch
      %3720 = sbr.rel (0) target = $region121
    $region120: #{lenet_urban_forward.1} parent=1 // pred_region
      %3721 = dma.done [#allocation4], 32
    $region121: #{lenet_urban_forward.1} parent=1 // pred_fallthru
      _
    %3722 = vsyncpa [#allocation3], 1
    %3723 = vsyncpa [#allocation6], 1
    %3724 = vsyncpa [#allocation9], 1
    %3725 = vsyncpa [#allocation12], 1
    %3726 = vsyncpa [#allocation15], 1
    %3727 = vsyncpa [#allocation18], 1
    %3728 = vsyncpa [#allocation21], 1
    %3729 = vsyncpa [#allocation4], 1

</llo_original>
